<compile_context>
chip_gen: v7x
topology: tpu7x:2x2x1
jax: 0.10.0
libtpu: 0.0.40
codegen_flags: <defaults>
</compile_context>

<pallas_src>
import numpy as np
import jax
import jax.numpy as jnp
from jax import lax
from jax.experimental import pallas as pl
from jax.experimental.pallas import tpu as pltpu


# --------------------------- weight banding (host-side) --------------------------- #

def _band_conv3x3(w_eff, W):
    """w_eff: (3, 3, Cin, Cout) f32 (BN scale already folded).
    Returns (3, W*Cin, W*Cout).  For each dy, a block-tridiagonal matrix G with
      G[jin*Cin:(jin+1)*Cin, j*Cout:(j+1)*Cout] = w_eff[dy, jin-j+1]  for |jin-j|<=1,
    so that (lane-dense input row shifted by dy) @ G = dy-term of the conv output row."""
    _, _, cin, cout = w_eff.shape
    G = np.zeros((3, W * cin, W * cout), np.float32)
    for dy in range(3):
        for j in range(W):
            for dx in range(3):
                jin = j + dx - 1
                if 0 <= jin < W:
                    G[dy, jin * cin:(jin + 1) * cin, j * cout:(j + 1) * cout] = w_eff[dy, dx]
    return G


def _band_deconv2x2(w_eff, W):
    """w_eff: (2, 2, Cin, Cout).  Returns (2, W*Cin, 2*W*Cout).  For each dy:
      D[j*Cin:(j+1)*Cin, (2j+dx)*Cout:(2j+dx+1)*Cout] = w_eff[dy, dx],
    so lane-dense input row @ D = lane-dense output row 2i+dy (dx shuffle baked in)."""
    _, _, cin, cout = w_eff.shape
    D = np.zeros((2, W * cin, 2 * W * cout), np.float32)
    for dy in range(2):
        for j in range(W):
            for dx in range(2):
                D[dy, j * cin:(j + 1) * cin,
                  (2 * j + dx) * cout:(2 * j + dx + 1) * cout] = w_eff[dy, dx]
    return D


# ------------------------------- parameter packing -------------------------------- #

def pack_rpng_params(params, in_channels, num_filters, B, hw3, hw4, hw5):
    """Folds BN scale into weights, bands them, and packs everything into ONE bf16
    weight array (rows, NC) and ONE f32 bias array (layers, NC).  Returns the packed
    arrays plus a static `plan` describing layers, weight offsets and scratch pads."""
    C5, C4, C3 = in_channels
    F0, F1 = num_filters
    H3, W3 = hw3
    H4, W4 = hw4
    H5, W5 = hw5
    assert (H4, W4) == (2 * H5, 2 * W5) and (H3, W3) == (2 * H4, 2 * W4)
    n5 = len(params["block_5"])
    n4 = len(params["block_4"])
    n3 = len(params["block_3"])

    pad_shapes = []

    def new_pad(H, W, C):
        pad_shapes.append((B, H + 2, W * C))
        return len(pad_shapes) - 1

    b5_pads = [new_pad(H5, W5, C5) for _ in range(n5)]
    p4_skip = new_pad(H4, W4, C4)
    p4_up = new_pad(H4, W4, C4)
    b4_rest = [new_pad(H4, W4, F0) for _ in range(n4 - 1)]
    p3_skip = new_pad(H3, W3, C3)
    p3_up = new_pad(H3, W3, C3)
    b3_rest = [new_pad(H3, W3, F1) for _ in range(n3 - 1)]

    wblocks, bias_rows, layers = [], [], []
    cursor = [0]

    def emit(mat):
        off = cursor[0]
        wblocks.append(mat)
        pad = (-mat.shape[0]) % 8
        if pad:
            wblocks.append(np.zeros((pad, mat.shape[1]), np.float32))
        cursor[0] += mat.shape[0] + pad
        return off

    def fold(w, scale):
        return np.asarray(w, np.float32) * np.asarray(scale, np.float32)[None, None, None, :]

    def emit_conv(lw, srcs, H, W, Cout, dst_pad, out):
        w, scale, bias = lw
        w_eff = fold(w, scale)
        w_offs, ch = [], 0
        for _, cin in srcs:                       # K-split: one banded block set per source
            G = _band_conv3x3(w_eff[:, :, ch:ch + cin, :], W)
            ch += cin
            for dy in range(3):
                w_offs.append(emit(G[dy]))
        bidx = len(bias_rows)
        bias_rows.append(np.tile(np.asarray(bias, np.float32), W))
        layers.append(dict(kind="conv", H=H, W=W, Cout=Cout, srcs=tuple(srcs),
                           w_offs=tuple(w_offs), ncols=W * Cout, bias=bidx,
                           dst_pad=dst_pad, out=out))

    def emit_deconv(lw, H, W, Cin, Cout, dst_pad):
        w, scale, bias = lw
        w_eff = fold(w, scale)
        D = _band_deconv2x2(w_eff, W)
        o0, o1 = emit(D[0]), emit(D[1])
        bidx = len(bias_rows)
        bias_rows.append(np.tile(np.asarray(bias, np.float32), 2 * W))
        layers.append(dict(kind="deconv", H=H, W=W, Cin=Cin, Cout=Cout,
                           w_offs=(o0, o1), ncols=2 * W * Cout, bias=bidx,
                           dst_pad=dst_pad))

    # execution order == emission order (the kernel walks `layers` in the same order)
    for k in range(n5):
        dst = b5_pads[k + 1] if k < n5 - 1 else None
        emit_conv(params["block_5"][k], [(b5_pads[k], C5)], H5, W5, C5, dst, None)
    emit_deconv(params["top_down_54"], H5, W5, C5, C4, p4_up)
    for k in range(n4):
        srcs = [(p4_skip, C4), (p4_up, C4)] if k == 0 else [(b4_rest[k - 1], F0)]
        dst = b4_rest[k] if k < n4 - 1 else None
        emit_conv(params["block_4"][k], srcs, H4, W4, F0, dst,
                  "out4" if k == n4 - 1 else None)
    emit_deconv(params["top_down_43"], H4, W4, F0, C3, p3_up)
    for k in range(n3):
        srcs = [(p3_skip, C3), (p3_up, C3)] if k == 0 else [(b3_rest[k - 1], F1)]
        dst = b3_rest[k] if k < n3 - 1 else None
        emit_conv(params["block_3"][k], srcs, H3, W3, F1, dst,
                  "out3" if k == n3 - 1 else None)

    NC = max(max(m.shape[1] for m in wblocks), max(r.shape[0] for r in bias_rows))
    NC = ((NC + 127) // 128) * 128
    Wpk = np.zeros((cursor[0], NC), np.float32)
    r = 0
    for m in wblocks:
        Wpk[r:r + m.shape[0], :m.shape[1]] = m
        r += m.shape[0]
    Bpk = np.zeros((len(bias_rows), NC), np.float32)
    for i, br in enumerate(bias_rows):
        Bpk[i, :br.shape[0]] = br

    plan = dict(B=B, H3=H3, W3=W3, H4=H4, W4=W4, H5=H5, W5=W5,
                C3=C3, C4=C4, C5=C5, F0=F0, F1=F1,
                pad_shapes=tuple(pad_shapes),
                copy_ins=(("x5", b5_pads[0], H5),
                          ("x4", p4_skip, H4),
                          ("x3", p3_skip, H3)),
                layers=tuple(layers),
                w_shape=(cursor[0], NC), b_shape=(len(bias_rows), NC))
    return (jnp.asarray(Wpk, dtype=jnp.bfloat16),
            jnp.asarray(Bpk, dtype=jnp.float32),
            plan)


# ---------------------------------- fused kernel ---------------------------------- #

def _build_kernel(plan):
    B = plan["B"]
    layers = plan["layers"]
    copy_ins = plan["copy_ins"]

    def kernel(x3_ref, x4_ref, x5_ref, w_ref, b_ref, out4_ref, out3_ref, *pads):
        xin = {"x3": x3_ref, "x4": x4_ref, "x5": x5_ref}

        # Halo rows (0 and H+1) of every pad buffer must be zero; zero once.
        for p in pads:
            p[...] = jnp.zeros(p.shape, p.dtype)

        # Lane-dense inputs -> pad interiors (rows 1..H).
        for name, pidx, H in copy_ins:
            pads[pidx][:, 1:H + 1, :] = xin[name][...]

        h = None
        for L in layers:
            if L["kind"] == "conv":
                H, W, nc = L["H"], L["W"], L["ncols"]
                acc = None
                offs = iter(L["w_offs"])
                for pidx, cin in L["srcs"]:
                    rows = W * cin
                    for dy in range(3):
                        off = next(offs)
                        a = pads[pidx][:, dy:dy + H, :].reshape(B * H, rows)
                        g = w_ref[off:off + rows, 0:nc]
                        t = jnp.dot(a.astype(jnp.bfloat16), g,
                                    preferred_element_type=jnp.float32)
                        acc = t if acc is None else acc + t
                bias = b_ref[L["bias"]:L["bias"] + 1, 0:nc]
                h = jnp.maximum(acc + bias, 0.0)                   # (B*H, W*Cout) f32
                if L["dst_pad"] is not None:
                    pads[L["dst_pad"]][:, 1:H + 1, :] = h.reshape(B, H, nc)
                if L["out"] == "out4":
                    out4_ref[...] = h.reshape(B, H, nc)            # lane-dense store
                elif L["out"] == "out3":
                    out3_ref[...] = h.reshape(B, H, nc)
            else:  # deconv: consumes previous conv output `h` (B*H, W*Cin) lane-dense
                H, W, Cin, nc = L["H"], L["W"], L["Cin"], L["ncols"]
                rows = W * Cin
                xb = h.astype(jnp.bfloat16)
                o0, o1 = L["w_offs"]
                bias = b_ref[L["bias"]:L["bias"] + 1, 0:nc]
                y_ev = jnp.maximum(
                    jnp.dot(xb, w_ref[o0:o0 + rows, 0:nc],
                            preferred_element_type=jnp.float32) + bias, 0.0)
                y_od = jnp.maximum(
                    jnp.dot(xb, w_ref[o1:o1 + rows, 0:nc],
                            preferred_element_type=jnp.float32) + bias, 0.0)
                # dy row interleave: [even | odd] along lanes, then split rows.
                up = jnp.concatenate([y_ev, y_od], axis=-1).reshape(B, 2 * H, nc)
                pads[L["dst_pad"]][:, 1:2 * H + 1, :] = up
                h = None

    return kernel


def make_rpng_forward(plan):
    B = plan["B"]
    H3, W3, C3 = plan["H3"], plan["W3"], plan["C3"]
    H4, W4, C4 = plan["H4"], plan["W4"], plan["C4"]
    H5, W5, C5 = plan["H5"], plan["W5"], plan["C5"]
    F0, F1 = plan["F0"], plan["F1"]

    call = pl.pallas_call(
        _build_kernel(plan),
        out_shape=(jax.ShapeDtypeStruct((B, H4, W4 * F0), jnp.float32),
                   jax.ShapeDtypeStruct((B, H3, W3 * F1), jnp.float32)),
        grid=(1,),
        in_specs=[
            pl.BlockSpec((B, H3, W3 * C3), lambda i: (0, 0, 0)),
            pl.BlockSpec((B, H4, W4 * C4), lambda i: (0, 0, 0)),
            pl.BlockSpec((B, H5, W5 * C5), lambda i: (0, 0, 0)),
            pl.BlockSpec(plan["w_shape"], lambda i: (0, 0)),
            pl.BlockSpec(plan["b_shape"], lambda i: (0, 0)),
        ],
        out_specs=(pl.BlockSpec((B, H4, W4 * F0), lambda i: (0, 0, 0)),
                   pl.BlockSpec((B, H3, W3 * F1), lambda i: (0, 0, 0))),
        scratch_shapes=[pltpu.VMEM(s, jnp.float32) for s in plan["pad_shapes"]],
        compiler_params=pltpu.CompilerParams(dimension_semantics=("arbitrary",)),
    )

    def forward(x_conv3, x_conv4, x_conv5, Wpk, Bpk):
        # free metadata reshapes: NHWC -> lane-dense (B, H, W*C)
        x3_ld = x_conv3.reshape(B, H3, W3 * C3)
        x4_ld = x_conv4.reshape(B, H4, W4 * C4)
        x5_ld = x_conv5.reshape(B, H5, W5 * C5)
        o4, o3 = call(x3_ld, x4_ld, x5_ld, Wpk, Bpk)
        return o4.reshape(B, H4, W4, F0), o3.reshape(B, H3, W3, F1)

    return forward


# ----------------------------- parameter construction ----------------------------- #

def _bn_fold(cout, eps=1e-3):
    gamma = 1.0 + 0.01 * jnp.arange(cout, dtype=jnp.float32)
    beta = 0.01 * jnp.arange(cout, dtype=jnp.float32)
    mean = 0.005 * jnp.arange(cout, dtype=jnp.float32)
    var = 1.0 + 0.02 * jnp.arange(cout, dtype=jnp.float32)
    scale = gamma / jnp.sqrt(var + eps)
    bias = beta - mean * scale
    return scale, bias


def make_conv_layer(key, cin, cout):
    w = jax.random.normal(key, (3, 3, cin, cout), jnp.float32) * (1.0 / np.sqrt(9 * cin))
    scale, bias = _bn_fold(cout)
    return (w, scale, bias)


def make_deconv_layer(key, cin, cout):
    w = jax.random.normal(key, (2, 2, cin, cout), jnp.float32) * (1.0 / np.sqrt(4 * cin))
    scale, bias = _bn_fold(cout)
    return (w, scale, bias)


def build_block(key, cin, planes, num_blocks):
    keys = jax.random.split(key, num_blocks + 1)
    layers = [make_conv_layer(keys[0], cin, planes)]
    for j in range(num_blocks):
        layers.append(make_conv_layer(keys[j + 1], planes, planes))
    return layers


def init_rpng_params(key, layer_nums, in_channels, num_filters):
    c5, c4, c3 = in_channels
    k = jax.random.split(key, 5)
    return {
        "block_5": build_block(k[0], c5, c5, layer_nums[0]),
        "top_down_54": make_deconv_layer(k[1], c5, c4),
        "block_4": build_block(k[2], c4 * 2, num_filters[0], layer_nums[0]),
        "top_down_43": make_deconv_layer(k[3], num_filters[0], c3),
        "block_3": build_block(k[4], c3 * 2, num_filters[1], layer_nums[1]),
    }


# ------------------------------- pure-JAX reference ------------------------------- #
# Same precision regime as the kernel (BN scale folded into bf16 weights, bf16
# activations into the matmul, f32 accumulation, f32 bias+ReLU), but implemented
# with independent lax.conv / einsum ops -> validates the banded packing & layout.

def _conv_ref(x, w, s, b):
    w_eff = (w * s[None, None, None, :]).astype(jnp.bfloat16)
    y = lax.conv_general_dilated(
        x.astype(jnp.bfloat16), w_eff, (1, 1), "SAME",
        dimension_numbers=("NHWC", "HWIO", "NHWC"),
        preferred_element_type=jnp.float32)
    return jnp.maximum(y + b, 0.0)


def _deconv_ref(x, w, s, b):
    Bz, H, W, _ = x.shape
    cout = w.shape[-1]
    w_eff = (w * s[None, None, None, :]).astype(jnp.bfloat16)
    xb = x.astype(jnp.bfloat16)
    out = jnp.zeros((Bz, 2 * H, 2 * W, cout), jnp.float32)
    for dy in range(2):
        for dx in range(2):
            y = jnp.einsum("bhwc,cd->bhwd", xb, w_eff[dy, dx],
                           preferred_element_type=jnp.float32)
            out = out.at[:, dy::2, dx::2, :].set(y)
    return jnp.maximum(out + b, 0.0)


def rpng_forward_ref(x_conv3, x_conv4, x_conv5, params):
    h5 = x_conv5
    for (w, s, b) in params["block_5"]:
        h5 = _conv_ref(h5, w, s, b)
    up54 = _deconv_ref(h5, *params["top_down_54"])
    h4 = jnp.concatenate([x_conv4, up54], axis=-1)          # torch.cat(dim=1) in NCHW
    for (w, s, b) in params["block_4"]:
        h4 = _conv_ref(h4, w, s, b)
    up43 = _deconv_ref(h4, *params["top_down_43"])
    h3 = jnp.concatenate([x_conv3, up43], axis=-1)
    for (w, s, b) in params["block_3"]:
        h3 = _conv_ref(h3, w, s, b)
    return h4, h3                                            # = (x4, x3)


# ------------------------------------- main ---------------------------------------- #

if __name__ == "__main__":
    layer_nums = [1, 1]
    in_channels = [32, 16, 8]      # channels of (conv5, conv4, conv3)
    num_filters = [16, 8]
    B = 2
    H5 = W5 = 4
    H4 = W4 = 8
    H3 = W3 = 16

    key = jax.random.PRNGKey(0)
    k_in, k_par = jax.random.split(key)
    k3, k4, k5 = jax.random.split(k_in, 3)
    # NHWC inputs (PyTorch reference is NCHW with the same C/H/W sizes)
    x_conv5 = jax.random.normal(k5, (B, H5, W5, in_channels[0]), jnp.float32)
    x_conv4 = jax.random.normal(k4, (B, H4, W4, in_channels[1]), jnp.float32)
    x_conv3 = jax.random.normal(k3, (B, H3, W3, in_channels[2]), jnp.float32)

    params = init_rpng_params(k_par, layer_nums, in_channels, num_filters)

    # one-time host-side packing (banded bf16 weights, lane-dense biases, plan)
    Wpk, Bpk, plan = pack_rpng_params(params, in_channels, num_filters,
                                      B, (H3, W3), (H4, W4), (H5, W5))

    fwd = jax.jit(make_rpng_forward(plan))
    x4, x3 = fwd(x_conv3, x_conv4, x_conv5, Wpk, Bpk)
    jax.block_until_ready((x4, x3))

    r4, r3 = rpng_forward_ref(x_conv3, x_conv4, x_conv5, params)
    np.testing.assert_allclose(np.asarray(x4), np.asarray(r4), rtol=3e-3, atol=3e-3)
    np.testing.assert_allclose(np.asarray(x3), np.asarray(r3), rtol=3e-3, atol=3e-3)
    assert x4.shape == (B, H4, W4, num_filters[0])
    assert x3.shape == (B, H3, W3, num_filters[1])

    print("KERNEL_OK")
</pallas_src>

<mosaic_0001>
module attributes {stable_mosaic.version = 11 : i64} {
  func.func @kernel(%arg0: i32, %arg1: memref<2x16x128xf32, #tpu.memory_space<vmem>>, %arg2: memref<2x8x128xf32, #tpu.memory_space<vmem>>, %arg3: memref<2x4x128xf32, #tpu.memory_space<vmem>>, %arg4: memref<3584x128xbf16, #tpu.memory_space<vmem>>, %arg5: memref<8x128xf32, #tpu.memory_space<vmem>>, %arg6: memref<2x8x128xf32, #tpu.memory_space<vmem>>, %arg7: memref<2x16x128xf32, #tpu.memory_space<vmem>>, %arg8: memref<2x6x128xf32, #tpu.memory_space<vmem>>, %arg9: memref<2x6x128xf32, #tpu.memory_space<vmem>>, %arg10: memref<2x10x128xf32, #tpu.memory_space<vmem>>, %arg11: memref<2x10x128xf32, #tpu.memory_space<vmem>>, %arg12: memref<2x10x128xf32, #tpu.memory_space<vmem>>, %arg13: memref<2x18x128xf32, #tpu.memory_space<vmem>>, %arg14: memref<2x18x128xf32, #tpu.memory_space<vmem>>, %arg15: memref<2x18x128xf32, #tpu.memory_space<vmem>>) attributes {dimension_semantics = [#tpu.dimension_semantics<arbitrary>], iteration_bounds = array<i64: 1>, scalar_prefetch = 0 : i64, scratch_operands = 8 : i64, tpu.core_type = #tpu.core_type<tc>, window_params = [{pipeline_mode = #tpu.pipeline_mode<synchronous>, transform_indices = @transform_0, window_bounds = array<i64: 2, 16, 128>}, {pipeline_mode = #tpu.pipeline_mode<synchronous>, transform_indices = @transform_1, window_bounds = array<i64: 2, 8, 128>}, {pipeline_mode = #tpu.pipeline_mode<synchronous>, transform_indices = @transform_2, window_bounds = array<i64: 2, 4, 128>}, {pipeline_mode = #tpu.pipeline_mode<synchronous>, transform_indices = @transform_3, window_bounds = array<i64: 3584, 128>}, {pipeline_mode = #tpu.pipeline_mode<synchronous>, transform_indices = @transform_4, window_bounds = array<i64: 8, 128>}, {pipeline_mode = #tpu.pipeline_mode<synchronous>, transform_indices = @transform_5, window_bounds = array<i64: 2, 8, 128>}, {pipeline_mode = #tpu.pipeline_mode<synchronous>, transform_indices = @transform_6, window_bounds = array<i64: 2, 16, 128>}]} {
    %cst = arith.constant 0.000000e+00 : f32
    %0 = vector.broadcast %cst : f32 to vector<2x6x128xf32>
    %c0 = arith.constant 0 : index
    %c0_0 = arith.constant 0 : index
    %c0_1 = arith.constant 0 : index
    %1 = vector.load %arg8[%c0, %c0_0, %c0_1] : memref<2x6x128xf32, #tpu.memory_space<vmem>>, vector<2x6x128xf32>
    tpu.vector_store %arg8[%c0, %c0_0, %c0_1], %0 {strides = array<i32>} : memref<2x6x128xf32, #tpu.memory_space<vmem>>, vector<2x6x128xf32>,
    %cst_2 = arith.constant 0.000000e+00 : f32
    %2 = vector.broadcast %cst_2 : f32 to vector<2x6x128xf32>
    %c0_3 = arith.constant 0 : index
    %c0_4 = arith.constant 0 : index
    %c0_5 = arith.constant 0 : index
    %3 = vector.load %arg9[%c0_3, %c0_4, %c0_5] : memref<2x6x128xf32, #tpu.memory_space<vmem>>, vector<2x6x128xf32>
    tpu.vector_store %arg9[%c0_3, %c0_4, %c0_5], %2 {strides = array<i32>} : memref<2x6x128xf32, #tpu.memory_space<vmem>>, vector<2x6x128xf32>,
    %cst_6 = arith.constant 0.000000e+00 : f32
    %4 = vector.broadcast %cst_6 : f32 to vector<2x10x128xf32>
    %c0_7 = arith.constant 0 : index
    %c0_8 = arith.constant 0 : index
    %c0_9 = arith.constant 0 : index
    %5 = vector.load %arg10[%c0_7, %c0_8, %c0_9] : memref<2x10x128xf32, #tpu.memory_space<vmem>>, vector<2x10x128xf32>
    tpu.vector_store %arg10[%c0_7, %c0_8, %c0_9], %4 {strides = array<i32>} : memref<2x10x128xf32, #tpu.memory_space<vmem>>, vector<2x10x128xf32>,
    %cst_10 = arith.constant 0.000000e+00 : f32
    %6 = vector.broadcast %cst_10 : f32 to vector<2x10x128xf32>
    %c0_11 = arith.constant 0 : index
    %c0_12 = arith.constant 0 : index
    %c0_13 = arith.constant 0 : index
    %7 = vector.load %arg11[%c0_11, %c0_12, %c0_13] : memref<2x10x128xf32, #tpu.memory_space<vmem>>, vector<2x10x128xf32>
    tpu.vector_store %arg11[%c0_11, %c0_12, %c0_13], %6 {strides = array<i32>} : memref<2x10x128xf32, #tpu.memory_space<vmem>>, vector<2x10x128xf32>,
    %cst_14 = arith.constant 0.000000e+00 : f32
    %8 = vector.broadcast %cst_14 : f32 to vector<2x10x128xf32>
    %c0_15 = arith.constant 0 : index
    %c0_16 = arith.constant 0 : index
    %c0_17 = arith.constant 0 : index
    %9 = vector.load %arg12[%c0_15, %c0_16, %c0_17] : memref<2x10x128xf32, #tpu.memory_space<vmem>>, vector<2x10x128xf32>
    tpu.vector_store %arg12[%c0_15, %c0_16, %c0_17], %8 {strides = array<i32>} : memref<2x10x128xf32, #tpu.memory_space<vmem>>, vector<2x10x128xf32>,
    %cst_18 = arith.constant 0.000000e+00 : f32
    %10 = vector.broadcast %cst_18 : f32 to vector<2x18x128xf32>
    %c0_19 = arith.constant 0 : index
    %c0_20 = arith.constant 0 : index
    %c0_21 = arith.constant 0 : index
    %11 = vector.load %arg13[%c0_19, %c0_20, %c0_21] : memref<2x18x128xf32, #tpu.memory_space<vmem>>, vector<2x18x128xf32>
    tpu.vector_store %arg13[%c0_19, %c0_20, %c0_21], %10 {strides = array<i32>} : memref<2x18x128xf32, #tpu.memory_space<vmem>>, vector<2x18x128xf32>,
    %cst_22 = arith.constant 0.000000e+00 : f32
    %12 = vector.broadcast %cst_22 : f32 to vector<2x18x128xf32>
    %c0_23 = arith.constant 0 : index
    %c0_24 = arith.constant 0 : index
    %c0_25 = arith.constant 0 : index
    %13 = vector.load %arg14[%c0_23, %c0_24, %c0_25] : memref<2x18x128xf32, #tpu.memory_space<vmem>>, vector<2x18x128xf32>
    tpu.vector_store %arg14[%c0_23, %c0_24, %c0_25], %12 {strides = array<i32>} : memref<2x18x128xf32, #tpu.memory_space<vmem>>, vector<2x18x128xf32>,
    %cst_26 = arith.constant 0.000000e+00 : f32
    %14 = vector.broadcast %cst_26 : f32 to vector<2x18x128xf32>
    %c0_27 = arith.constant 0 : index
    %c0_28 = arith.constant 0 : index
    %c0_29 = arith.constant 0 : index
    %15 = vector.load %arg15[%c0_27, %c0_28, %c0_29] : memref<2x18x128xf32, #tpu.memory_space<vmem>>, vector<2x18x128xf32>
    tpu.vector_store %arg15[%c0_27, %c0_28, %c0_29], %14 {strides = array<i32>} : memref<2x18x128xf32, #tpu.memory_space<vmem>>, vector<2x18x128xf32>,
    %c0_30 = arith.constant 0 : index
    %c0_31 = arith.constant 0 : index
    %c0_32 = arith.constant 0 : index
    %16 = vector.load %arg3[%c0_30, %c0_31, %c0_32] : memref<2x4x128xf32, #tpu.memory_space<vmem>>, vector<2x4x128xf32>
    %c0_33 = arith.constant 0 : index
    %c1 = arith.constant 1 : index
    %c0_34 = arith.constant 0 : index
    %17 = vector.load %arg8[%c0_33, %c1, %c0_34] : memref<2x6x128xf32, #tpu.memory_space<vmem>>, vector<2x4x128xf32>
    tpu.vector_store %arg8[%c0_33, %c1, %c0_34], %16 {strides = array<i32>} : memref<2x6x128xf32, #tpu.memory_space<vmem>>, vector<2x4x128xf32>,
    %c0_35 = arith.constant 0 : index
    %c0_36 = arith.constant 0 : index
    %c0_37 = arith.constant 0 : index
    %18 = vector.load %arg2[%c0_35, %c0_36, %c0_37] : memref<2x8x128xf32, #tpu.memory_space<vmem>>, vector<2x8x128xf32>
    %c0_38 = arith.constant 0 : index
    %c1_39 = arith.constant 1 : index
    %c0_40 = arith.constant 0 : index
    %19 = vector.load %arg10[%c0_38, %c1_39, %c0_40] : memref<2x10x128xf32, #tpu.memory_space<vmem>>, vector<2x8x128xf32>
    tpu.vector_store %arg10[%c0_38, %c1_39, %c0_40], %18 {strides = array<i32>} : memref<2x10x128xf32, #tpu.memory_space<vmem>>, vector<2x8x128xf32>,
    %c0_41 = arith.constant 0 : index
    %c0_42 = arith.constant 0 : index
    %c0_43 = arith.constant 0 : index
    %20 = vector.load %arg1[%c0_41, %c0_42, %c0_43] : memref<2x16x128xf32, #tpu.memory_space<vmem>>, vector<2x16x128xf32>
    %c0_44 = arith.constant 0 : index
    %c1_45 = arith.constant 1 : index
    %c0_46 = arith.constant 0 : index
    %21 = vector.load %arg13[%c0_44, %c1_45, %c0_46] : memref<2x18x128xf32, #tpu.memory_space<vmem>>, vector<2x16x128xf32>
    tpu.vector_store %arg13[%c0_44, %c1_45, %c0_46], %20 {strides = array<i32>} : memref<2x18x128xf32, #tpu.memory_space<vmem>>, vector<2x16x128xf32>,
    %c0_47 = arith.constant 0 : index
    %c0_48 = arith.constant 0 : index
    %c0_49 = arith.constant 0 : index
    %22 = vector.load %arg8[%c0_47, %c0_48, %c0_49] : memref<2x6x128xf32, #tpu.memory_space<vmem>>, vector<2x4x128xf32>
    %23 = vector.shape_cast %22 : vector<2x4x128xf32> to vector<8x128xf32>
    %c0_50 = arith.constant 0 : index
    %c0_51 = arith.constant 0 : index
    %24 = vector.load %arg4[%c0_50, %c0_51] : memref<3584x128xbf16, #tpu.memory_space<vmem>>, vector<128x128xbf16>
    %25 = arith.truncf %23 : vector<8x128xf32> to vector<8x128xbf16>
    %cst_52 = arith.constant dense<0.000000e+00> : vector<8x128xf32>
    %26 = tpu.matmul %25, %24, %cst_52 {dimension_numbers = #tpu.dot_dimension_numbers<[1], [0], [0], [1], [0, 0, 1, 1], [], []>} : vector<8x128xbf16>, vector<128x128xbf16>, vector<8x128xf32> -> vector<8x128xf32>
    %c0_53 = arith.constant 0 : index
    %c1_54 = arith.constant 1 : index
    %c0_55 = arith.constant 0 : index
    %27 = vector.load %arg8[%c0_53, %c1_54, %c0_55] : memref<2x6x128xf32, #tpu.memory_space<vmem>>, vector<2x4x128xf32>
    %28 = vector.shape_cast %27 : vector<2x4x128xf32> to vector<8x128xf32>
    %c128 = arith.constant 128 : index
    %c0_56 = arith.constant 0 : index
    %29 = vector.load %arg4[%c128, %c0_56] : memref<3584x128xbf16, #tpu.memory_space<vmem>>, vector<128x128xbf16>
    %30 = arith.truncf %28 : vector<8x128xf32> to vector<8x128xbf16>
    %cst_57 = arith.constant dense<0.000000e+00> : vector<8x128xf32>
    %31 = tpu.matmul %30, %29, %cst_57 {dimension_numbers = #tpu.dot_dimension_numbers<[1], [0], [0], [1], [0, 0, 1, 1], [], []>} : vector<8x128xbf16>, vector<128x128xbf16>, vector<8x128xf32> -> vector<8x128xf32>
    %32 = arith.addf %26, %31 : vector<8x128xf32>
    %c0_58 = arith.constant 0 : index
    %c2 = arith.constant 2 : index
    %c0_59 = arith.constant 0 : index
    %33 = vector.load %arg8[%c0_58, %c2, %c0_59] : memref<2x6x128xf32, #tpu.memory_space<vmem>>, vector<2x4x128xf32>
    %34 = vector.shape_cast %33 : vector<2x4x128xf32> to vector<8x128xf32>
    %c256 = arith.constant 256 : index
    %c0_60 = arith.constant 0 : index
    %35 = vector.load %arg4[%c256, %c0_60] : memref<3584x128xbf16, #tpu.memory_space<vmem>>, vector<128x128xbf16>
    %36 = arith.truncf %34 : vector<8x128xf32> to vector<8x128xbf16>
    %cst_61 = arith.constant dense<0.000000e+00> : vector<8x128xf32>
    %37 = tpu.matmul %36, %35, %cst_61 {dimension_numbers = #tpu.dot_dimension_numbers<[1], [0], [0], [1], [0, 0, 1, 1], [], []>} : vector<8x128xbf16>, vector<128x128xbf16>, vector<8x128xf32> -> vector<8x128xf32>
    %38 = arith.addf %32, %37 : vector<8x128xf32>
    %c0_62 = arith.constant 0 : index
    %c0_63 = arith.constant 0 : index
    %39 = vector.load %arg5[%c0_62, %c0_63] : memref<8x128xf32, #tpu.memory_space<vmem>>, vector<1x128xf32>
    %40 = vector.broadcast %39 : vector<1x128xf32> to vector<8x128xf32>
    %41 = arith.addf %38, %40 : vector<8x128xf32>
    %cst_64 = arith.constant 0.000000e+00 : f32
    %42 = vector.broadcast %cst_64 : f32 to vector<8x128xf32>
    %43 = arith.maximumf %41, %42 : vector<8x128xf32>
    %44 = vector.shape_cast %43 : vector<8x128xf32> to vector<2x4x128xf32>
    %c0_65 = arith.constant 0 : index
    %c1_66 = arith.constant 1 : index
    %c0_67 = arith.constant 0 : index
    %45 = vector.load %arg9[%c0_65, %c1_66, %c0_67] : memref<2x6x128xf32, #tpu.memory_space<vmem>>, vector<2x4x128xf32>
    tpu.vector_store %arg9[%c0_65, %c1_66, %c0_67], %44 {strides = array<i32>} : memref<2x6x128xf32, #tpu.memory_space<vmem>>, vector<2x4x128xf32>,
    %c0_68 = arith.constant 0 : index
    %c0_69 = arith.constant 0 : index
    %c0_70 = arith.constant 0 : index
    %46 = vector.load %arg9[%c0_68, %c0_69, %c0_70] : memref<2x6x128xf32, #tpu.memory_space<vmem>>, vector<2x4x128xf32>
    %47 = vector.shape_cast %46 : vector<2x4x128xf32> to vector<8x128xf32>
    %c384 = arith.constant 384 : index
    %c0_71 = arith.constant 0 : index
    %48 = vector.load %arg4[%c384, %c0_71] : memref<3584x128xbf16, #tpu.memory_space<vmem>>, vector<128x128xbf16>
    %49 = arith.truncf %47 : vector<8x128xf32> to vector<8x128xbf16>
    %cst_72 = arith.constant dense<0.000000e+00> : vector<8x128xf32>
    %50 = tpu.matmul %49, %48, %cst_72 {dimension_numbers = #tpu.dot_dimension_numbers<[1], [0], [0], [1], [0, 0, 1, 1], [], []>} : vector<8x128xbf16>, vector<128x128xbf16>, vector<8x128xf32> -> vector<8x128xf32>
    %c0_73 = arith.constant 0 : index
    %c1_74 = arith.constant 1 : index
    %c0_75 = arith.constant 0 : index
    %51 = vector.load %arg9[%c0_73, %c1_74, %c0_75] : memref<2x6x128xf32, #tpu.memory_space<vmem>>, vector<2x4x128xf32>
    %52 = vector.shape_cast %51 : vector<2x4x128xf32> to vector<8x128xf32>
    %c512 = arith.constant 512 : index
    %c0_76 = arith.constant 0 : index
    %53 = vector.load %arg4[%c512, %c0_76] : memref<3584x128xbf16, #tpu.memory_space<vmem>>, vector<128x128xbf16>
    %54 = arith.truncf %52 : vector<8x128xf32> to vector<8x128xbf16>
    %cst_77 = arith.constant dense<0.000000e+00> : vector<8x128xf32>
    %55 = tpu.matmul %54, %53, %cst_77 {dimension_numbers = #tpu.dot_dimension_numbers<[1], [0], [0], [1], [0, 0, 1, 1], [], []>} : vector<8x128xbf16>, vector<128x128xbf16>, vector<8x128xf32> -> vector<8x128xf32>
    %56 = arith.addf %50, %55 : vector<8x128xf32>
    %c0_78 = arith.constant 0 : index
    %c2_79 = arith.constant 2 : index
    %c0_80 = arith.constant 0 : index
    %57 = vector.load %arg9[%c0_78, %c2_79, %c0_80] : memref<2x6x128xf32, #tpu.memory_space<vmem>>, vector<2x4x128xf32>
    %58 = vector.shape_cast %57 : vector<2x4x128xf32> to vector<8x128xf32>
    %c640 = arith.constant 640 : index
    %c0_81 = arith.constant 0 : index
    %59 = vector.load %arg4[%c640, %c0_81] : memref<3584x128xbf16, #tpu.memory_space<vmem>>, vector<128x128xbf16>
    %60 = arith.truncf %58 : vector<8x128xf32> to vector<8x128xbf16>
    %cst_82 = arith.constant dense<0.000000e+00> : vector<8x128xf32>
    %61 = tpu.matmul %60, %59, %cst_82 {dimension_numbers = #tpu.dot_dimension_numbers<[1], [0], [0], [1], [0, 0, 1, 1], [], []>} : vector<8x128xbf16>, vector<128x128xbf16>, vector<8x128xf32> -> vector<8x128xf32>
    %62 = arith.addf %56, %61 : vector<8x128xf32>
    %c1_83 = arith.constant 1 : index
    %c0_84 = arith.constant 0 : index
    %63 = vector.load %arg5[%c1_83, %c0_84] : memref<8x128xf32, #tpu.memory_space<vmem>>, vector<1x128xf32>
    %64 = vector.broadcast %63 : vector<1x128xf32> to vector<8x128xf32>
    %65 = arith.addf %62, %64 : vector<8x128xf32>
    %cst_85 = arith.constant 0.000000e+00 : f32
    %66 = vector.broadcast %cst_85 : f32 to vector<8x128xf32>
    %67 = arith.maximumf %65, %66 : vector<8x128xf32>
    %68 = arith.truncf %67 : vector<8x128xf32> to vector<8x128xbf16>
    %c2_86 = arith.constant 2 : index
    %c0_87 = arith.constant 0 : index
    %69 = vector.load %arg5[%c2_86, %c0_87] : memref<8x128xf32, #tpu.memory_space<vmem>>, vector<1x128xf32>
    %c768 = arith.constant 768 : index
    %c0_88 = arith.constant 0 : index
    %70 = vector.load %arg4[%c768, %c0_88] : memref<3584x128xbf16, #tpu.memory_space<vmem>>, vector<128x128xbf16>
    %cst_89 = arith.constant dense<0.000000e+00> : vector<8x128xf32>
    %71 = tpu.matmul %68, %70, %cst_89 {dimension_numbers = #tpu.dot_dimension_numbers<[1], [0], [0], [1], [0, 0, 1, 1], [], []>} : vector<8x128xbf16>, vector<128x128xbf16>, vector<8x128xf32> -> vector<8x128xf32>
    %72 = vector.broadcast %69 : vector<1x128xf32> to vector<8x128xf32>
    %73 = arith.addf %71, %72 : vector<8x128xf32>
    %cst_90 = arith.constant 0.000000e+00 : f32
    %74 = vector.broadcast %cst_90 : f32 to vector<8x128xf32>
    %75 = arith.maximumf %73, %74 : vector<8x128xf32>
    %c896 = arith.constant 896 : index
    %c0_91 = arith.constant 0 : index
    %76 = vector.load %arg4[%c896, %c0_91] : memref<3584x128xbf16, #tpu.memory_space<vmem>>, vector<128x128xbf16>
    %cst_92 = arith.constant dense<0.000000e+00> : vector<8x128xf32>
    %77 = tpu.matmul %68, %76, %cst_92 {dimension_numbers = #tpu.dot_dimension_numbers<[1], [0], [0], [1], [0, 0, 1, 1], [], []>} : vector<8x128xbf16>, vector<128x128xbf16>, vector<8x128xf32> -> vector<8x128xf32>
    %78 = vector.broadcast %69 : vector<1x128xf32> to vector<8x128xf32>
    %79 = arith.addf %77, %78 : vector<8x128xf32>
    %cst_93 = arith.constant 0.000000e+00 : f32
    %80 = vector.broadcast %cst_93 : f32 to vector<8x128xf32>
    %81 = arith.maximumf %79, %80 : vector<8x128xf32>
    %82 = tpu.concatenate %75, %81 in 1 : vector<8x128xf32>, vector<8x128xf32> -> vector<8x256xf32>
    %83 = vector.shape_cast %82 : vector<8x256xf32> to vector<2x8x128xf32>
    %c0_94 = arith.constant 0 : index
    %c1_95 = arith.constant 1 : index
    %c0_96 = arith.constant 0 : index
    %84 = vector.load %arg11[%c0_94, %c1_95, %c0_96] : memref<2x10x128xf32, #tpu.memory_space<vmem>>, vector<2x8x128xf32>
    tpu.vector_store %arg11[%c0_94, %c1_95, %c0_96], %83 {strides = array<i32>} : memref<2x10x128xf32, #tpu.memory_space<vmem>>, vector<2x8x128xf32>,
    %c0_97 = arith.constant 0 : index
    %c0_98 = arith.constant 0 : index
    %c0_99 = arith.constant 0 : index
    %85 = vector.load %arg10[%c0_97, %c0_98, %c0_99] : memref<2x10x128xf32, #tpu.memory_space<vmem>>, vector<2x8x128xf32>
    %86 = vector.shape_cast %85 : vector<2x8x128xf32> to vector<16x128xf32>
    %c1024 = arith.constant 1024 : index
    %c0_100 = arith.constant 0 : index
    %87 = vector.load %arg4[%c1024, %c0_100] : memref<3584x128xbf16, #tpu.memory_space<vmem>>, vector<128x128xbf16>
    %88 = arith.truncf %86 : vector<16x128xf32> to vector<16x128xbf16>
    %cst_101 = arith.constant dense<0.000000e+00> : vector<16x128xf32>
    %89 = tpu.matmul %88, %87, %cst_101 {dimension_numbers = #tpu.dot_dimension_numbers<[1], [0], [0], [1], [0, 0, 1, 1], [], []>} : vector<16x128xbf16>, vector<128x128xbf16>, vector<16x128xf32> -> vector<16x128xf32>
    %c0_102 = arith.constant 0 : index
    %c1_103 = arith.constant 1 : index
    %c0_104 = arith.constant 0 : index
    %90 = vector.load %arg10[%c0_102, %c1_103, %c0_104] : memref<2x10x128xf32, #tpu.memory_space<vmem>>, vector<2x8x128xf32>
    %91 = vector.shape_cast %90 : vector<2x8x128xf32> to vector<16x128xf32>
    %c1152 = arith.constant 1152 : index
    %c0_105 = arith.constant 0 : index
    %92 = vector.load %arg4[%c1152, %c0_105] : memref<3584x128xbf16, #tpu.memory_space<vmem>>, vector<128x128xbf16>
    %93 = arith.truncf %91 : vector<16x128xf32> to vector<16x128xbf16>
    %cst_106 = arith.constant dense<0.000000e+00> : vector<16x128xf32>
    %94 = tpu.matmul %93, %92, %cst_106 {dimension_numbers = #tpu.dot_dimension_numbers<[1], [0], [0], [1], [0, 0, 1, 1], [], []>} : vector<16x128xbf16>, vector<128x128xbf16>, vector<16x128xf32> -> vector<16x128xf32>
    %95 = arith.addf %89, %94 : vector<16x128xf32>
    %c0_107 = arith.constant 0 : index
    %c2_108 = arith.constant 2 : index
    %c0_109 = arith.constant 0 : index
    %96 = vector.load %arg10[%c0_107, %c2_108, %c0_109] : memref<2x10x128xf32, #tpu.memory_space<vmem>>, vector<2x8x128xf32>
    %97 = vector.shape_cast %96 : vector<2x8x128xf32> to vector<16x128xf32>
    %c1280 = arith.constant 1280 : index
    %c0_110 = arith.constant 0 : index
    %98 = vector.load %arg4[%c1280, %c0_110] : memref<3584x128xbf16, #tpu.memory_space<vmem>>, vector<128x128xbf16>
    %99 = arith.truncf %97 : vector<16x128xf32> to vector<16x128xbf16>
    %cst_111 = arith.constant dense<0.000000e+00> : vector<16x128xf32>
    %100 = tpu.matmul %99, %98, %cst_111 {dimension_numbers = #tpu.dot_dimension_numbers<[1], [0], [0], [1], [0, 0, 1, 1], [], []>} : vector<16x128xbf16>, vector<128x128xbf16>, vector<16x128xf32> -> vector<16x128xf32>
    %101 = arith.addf %95, %100 : vector<16x128xf32>
    %c0_112 = arith.constant 0 : index
    %c0_113 = arith.constant 0 : index
    %c0_114 = arith.constant 0 : index
    %102 = vector.load %arg11[%c0_112, %c0_113, %c0_114] : memref<2x10x128xf32, #tpu.memory_space<vmem>>, vector<2x8x128xf32>
    %103 = vector.shape_cast %102 : vector<2x8x128xf32> to vector<16x128xf32>
    %c1408 = arith.constant 1408 : index
    %c0_115 = arith.constant 0 : index
    %104 = vector.load %arg4[%c1408, %c0_115] : memref<3584x128xbf16, #tpu.memory_space<vmem>>, vector<128x128xbf16>
    %105 = arith.truncf %103 : vector<16x128xf32> to vector<16x128xbf16>
    %cst_116 = arith.constant dense<0.000000e+00> : vector<16x128xf32>
    %106 = tpu.matmul %105, %104, %cst_116 {dimension_numbers = #tpu.dot_dimension_numbers<[1], [0], [0], [1], [0, 0, 1, 1], [], []>} : vector<16x128xbf16>, vector<128x128xbf16>, vector<16x128xf32> -> vector<16x128xf32>
    %107 = arith.addf %101, %106 : vector<16x128xf32>
    %c0_117 = arith.constant 0 : index
    %c1_118 = arith.constant 1 : index
    %c0_119 = arith.constant 0 : index
    %108 = vector.load %arg11[%c0_117, %c1_118, %c0_119] : memref<2x10x128xf32, #tpu.memory_space<vmem>>, vector<2x8x128xf32>
    %109 = vector.shape_cast %108 : vector<2x8x128xf32> to vector<16x128xf32>
    %c1536 = arith.constant 1536 : index
    %c0_120 = arith.constant 0 : index
    %110 = vector.load %arg4[%c1536, %c0_120] : memref<3584x128xbf16, #tpu.memory_space<vmem>>, vector<128x128xbf16>
    %111 = arith.truncf %109 : vector<16x128xf32> to vector<16x128xbf16>
    %cst_121 = arith.constant dense<0.000000e+00> : vector<16x128xf32>
    %112 = tpu.matmul %111, %110, %cst_121 {dimension_numbers = #tpu.dot_dimension_numbers<[1], [0], [0], [1], [0, 0, 1, 1], [], []>} : vector<16x128xbf16>, vector<128x128xbf16>, vector<16x128xf32> -> vector<16x128xf32>
    %113 = arith.addf %107, %112 : vector<16x128xf32>
    %c0_122 = arith.constant 0 : index
    %c2_123 = arith.constant 2 : index
    %c0_124 = arith.constant 0 : index
    %114 = vector.load %arg11[%c0_122, %c2_123, %c0_124] : memref<2x10x128xf32, #tpu.memory_space<vmem>>, vector<2x8x128xf32>
    %115 = vector.shape_cast %114 : vector<2x8x128xf32> to vector<16x128xf32>
    %c1664 = arith.constant 1664 : index
    %c0_125 = arith.constant 0 : index
    %116 = vector.load %arg4[%c1664, %c0_125] : memref<3584x128xbf16, #tpu.memory_space<vmem>>, vector<128x128xbf16>
    %117 = arith.truncf %115 : vector<16x128xf32> to vector<16x128xbf16>
    %cst_126 = arith.constant dense<0.000000e+00> : vector<16x128xf32>
    %118 = tpu.matmul %117, %116, %cst_126 {dimension_numbers = #tpu.dot_dimension_numbers<[1], [0], [0], [1], [0, 0, 1, 1], [], []>} : vector<16x128xbf16>, vector<128x128xbf16>, vector<16x128xf32> -> vector<16x128xf32>
    %119 = arith.addf %113, %118 : vector<16x128xf32>
    %c3 = arith.constant 3 : index
    %c0_127 = arith.constant 0 : index
    %120 = vector.load %arg5[%c3, %c0_127] : memref<8x128xf32, #tpu.memory_space<vmem>>, vector<1x128xf32>
    %121 = vector.broadcast %120 : vector<1x128xf32> to vector<16x128xf32>
    %122 = arith.addf %119, %121 : vector<16x128xf32>
    %cst_128 = arith.constant 0.000000e+00 : f32
    %123 = vector.broadcast %cst_128 : f32 to vector<16x128xf32>
    %124 = arith.maximumf %122, %123 : vector<16x128xf32>
    %125 = vector.shape_cast %124 : vector<16x128xf32> to vector<2x8x128xf32>
    %c0_129 = arith.constant 0 : index
    %c1_130 = arith.constant 1 : index
    %c0_131 = arith.constant 0 : index
    %126 = vector.load %arg12[%c0_129, %c1_130, %c0_131] : memref<2x10x128xf32, #tpu.memory_space<vmem>>, vector<2x8x128xf32>
    tpu.vector_store %arg12[%c0_129, %c1_130, %c0_131], %125 {strides = array<i32>} : memref<2x10x128xf32, #tpu.memory_space<vmem>>, vector<2x8x128xf32>,
    %c0_132 = arith.constant 0 : index
    %c0_133 = arith.constant 0 : index
    %c0_134 = arith.constant 0 : index
    %127 = vector.load %arg12[%c0_132, %c0_133, %c0_134] : memref<2x10x128xf32, #tpu.memory_space<vmem>>, vector<2x8x128xf32>
    %128 = vector.shape_cast %127 : vector<2x8x128xf32> to vector<16x128xf32>
    %c1792 = arith.constant 1792 : index
    %c0_135 = arith.constant 0 : index
    %129 = vector.load %arg4[%c1792, %c0_135] : memref<3584x128xbf16, #tpu.memory_space<vmem>>, vector<128x128xbf16>
    %130 = arith.truncf %128 : vector<16x128xf32> to vector<16x128xbf16>
    %cst_136 = arith.constant dense<0.000000e+00> : vector<16x128xf32>
    %131 = tpu.matmul %130, %129, %cst_136 {dimension_numbers = #tpu.dot_dimension_numbers<[1], [0], [0], [1], [0, 0, 1, 1], [], []>} : vector<16x128xbf16>, vector<128x128xbf16>, vector<16x128xf32> -> vector<16x128xf32>
    %c0_137 = arith.constant 0 : index
    %c1_138 = arith.constant 1 : index
    %c0_139 = arith.constant 0 : index
    %132 = vector.load %arg12[%c0_137, %c1_138, %c0_139] : memref<2x10x128xf32, #tpu.memory_space<vmem>>, vector<2x8x128xf32>
    %133 = vector.shape_cast %132 : vector<2x8x128xf32> to vector<16x128xf32>
    %c1920 = arith.constant 1920 : index
    %c0_140 = arith.constant 0 : index
    %134 = vector.load %arg4[%c1920, %c0_140] : memref<3584x128xbf16, #tpu.memory_space<vmem>>, vector<128x128xbf16>
    %135 = arith.truncf %133 : vector<16x128xf32> to vector<16x128xbf16>
    %cst_141 = arith.constant dense<0.000000e+00> : vector<16x128xf32>
    %136 = tpu.matmul %135, %134, %cst_141 {dimension_numbers = #tpu.dot_dimension_numbers<[1], [0], [0], [1], [0, 0, 1, 1], [], []>} : vector<16x128xbf16>, vector<128x128xbf16>, vector<16x128xf32> -> vector<16x128xf32>
    %137 = arith.addf %131, %136 : vector<16x128xf32>
    %c0_142 = arith.constant 0 : index
    %c2_143 = arith.constant 2 : index
    %c0_144 = arith.constant 0 : index
    %138 = vector.load %arg12[%c0_142, %c2_143, %c0_144] : memref<2x10x128xf32, #tpu.memory_space<vmem>>, vector<2x8x128xf32>
    %139 = vector.shape_cast %138 : vector<2x8x128xf32> to vector<16x128xf32>
    %c2048 = arith.constant 2048 : index
    %c0_145 = arith.constant 0 : index
    %140 = vector.load %arg4[%c2048, %c0_145] : memref<3584x128xbf16, #tpu.memory_space<vmem>>, vector<128x128xbf16>
    %141 = arith.truncf %139 : vector<16x128xf32> to vector<16x128xbf16>
    %cst_146 = arith.constant dense<0.000000e+00> : vector<16x128xf32>
    %142 = tpu.matmul %141, %140, %cst_146 {dimension_numbers = #tpu.dot_dimension_numbers<[1], [0], [0], [1], [0, 0, 1, 1], [], []>} : vector<16x128xbf16>, vector<128x128xbf16>, vector<16x128xf32> -> vector<16x128xf32>
    %143 = arith.addf %137, %142 : vector<16x128xf32>
    %c4 = arith.constant 4 : index
    %c0_147 = arith.constant 0 : index
    %144 = vector.load %arg5[%c4, %c0_147] : memref<8x128xf32, #tpu.memory_space<vmem>>, vector<1x128xf32>
    %145 = vector.broadcast %144 : vector<1x128xf32> to vector<16x128xf32>
    %146 = arith.addf %143, %145 : vector<16x128xf32>
    %cst_148 = arith.constant 0.000000e+00 : f32
    %147 = vector.broadcast %cst_148 : f32 to vector<16x128xf32>
    %148 = arith.maximumf %146, %147 : vector<16x128xf32>
    %149 = vector.shape_cast %148 : vector<16x128xf32> to vector<2x8x128xf32>
    %c0_149 = arith.constant 0 : index
    %c0_150 = arith.constant 0 : index
    %c0_151 = arith.constant 0 : index
    %150 = vector.load %arg6[%c0_149, %c0_150, %c0_151] : memref<2x8x128xf32, #tpu.memory_space<vmem>>, vector<2x8x128xf32>
    tpu.vector_store %arg6[%c0_149, %c0_150, %c0_151], %149 {strides = array<i32>} : memref<2x8x128xf32, #tpu.memory_space<vmem>>, vector<2x8x128xf32>,
    %151 = arith.truncf %148 : vector<16x128xf32> to vector<16x128xbf16>
    %c5 = arith.constant 5 : index
    %c0_152 = arith.constant 0 : index
    %152 = vector.load %arg5[%c5, %c0_152] : memref<8x128xf32, #tpu.memory_space<vmem>>, vector<1x128xf32>
    %c2176 = arith.constant 2176 : index
    %c0_153 = arith.constant 0 : index
    %153 = vector.load %arg4[%c2176, %c0_153] : memref<3584x128xbf16, #tpu.memory_space<vmem>>, vector<128x128xbf16>
    %cst_154 = arith.constant dense<0.000000e+00> : vector<16x128xf32>
    %154 = tpu.matmul %151, %153, %cst_154 {dimension_numbers = #tpu.dot_dimension_numbers<[1], [0], [0], [1], [0, 0, 1, 1], [], []>} : vector<16x128xbf16>, vector<128x128xbf16>, vector<16x128xf32> -> vector<16x128xf32>
    %155 = vector.broadcast %152 : vector<1x128xf32> to vector<16x128xf32>
    %156 = arith.addf %154, %155 : vector<16x128xf32>
    %cst_155 = arith.constant 0.000000e+00 : f32
    %157 = vector.broadcast %cst_155 : f32 to vector<16x128xf32>
    %158 = arith.maximumf %156, %157 : vector<16x128xf32>
    %c2304 = arith.constant 2304 : index
    %c0_156 = arith.constant 0 : index
    %159 = vector.load %arg4[%c2304, %c0_156] : memref<3584x128xbf16, #tpu.memory_space<vmem>>, vector<128x128xbf16>
    %cst_157 = arith.constant dense<0.000000e+00> : vector<16x128xf32>
    %160 = tpu.matmul %151, %159, %cst_157 {dimension_numbers = #tpu.dot_dimension_numbers<[1], [0], [0], [1], [0, 0, 1, 1], [], []>} : vector<16x128xbf16>, vector<128x128xbf16>, vector<16x128xf32> -> vector<16x128xf32>
    %161 = vector.broadcast %152 : vector<1x128xf32> to vector<16x128xf32>
    %162 = arith.addf %160, %161 : vector<16x128xf32>
    %cst_158 = arith.constant 0.000000e+00 : f32
    %163 = vector.broadcast %cst_158 : f32 to vector<16x128xf32>
    %164 = arith.maximumf %162, %163 : vector<16x128xf32>
    %165 = tpu.concatenate %158, %164 in 1 : vector<16x128xf32>, vector<16x128xf32> -> vector<16x256xf32>
    %166 = vector.shape_cast %165 : vector<16x256xf32> to vector<2x16x128xf32>
    %c0_159 = arith.constant 0 : index
    %c1_160 = arith.constant 1 : index
    %c0_161 = arith.constant 0 : index
    %167 = vector.load %arg14[%c0_159, %c1_160, %c0_161] : memref<2x18x128xf32, #tpu.memory_space<vmem>>, vector<2x16x128xf32>
    tpu.vector_store %arg14[%c0_159, %c1_160, %c0_161], %166 {strides = array<i32>} : memref<2x18x128xf32, #tpu.memory_space<vmem>>, vector<2x16x128xf32>,
    %c0_162 = arith.constant 0 : index
    %c0_163 = arith.constant 0 : index
    %c0_164 = arith.constant 0 : index
    %168 = vector.load %arg13[%c0_162, %c0_163, %c0_164] : memref<2x18x128xf32, #tpu.memory_space<vmem>>, vector<2x16x128xf32>
    %169 = vector.shape_cast %168 : vector<2x16x128xf32> to vector<32x128xf32>
    %c2432 = arith.constant 2432 : index
    %c0_165 = arith.constant 0 : index
    %170 = vector.load %arg4[%c2432, %c0_165] : memref<3584x128xbf16, #tpu.memory_space<vmem>>, vector<128x128xbf16>
    %171 = arith.truncf %169 : vector<32x128xf32> to vector<32x128xbf16>
    %cst_166 = arith.constant dense<0.000000e+00> : vector<32x128xf32>
    %172 = tpu.matmul %171, %170, %cst_166 {dimension_numbers = #tpu.dot_dimension_numbers<[1], [0], [0], [1], [0, 0, 1, 1], [], []>} : vector<32x128xbf16>, vector<128x128xbf16>, vector<32x128xf32> -> vector<32x128xf32>
    %c0_167 = arith.constant 0 : index
    %c1_168 = arith.constant 1 : index
    %c0_169 = arith.constant 0 : index
    %173 = vector.load %arg13[%c0_167, %c1_168, %c0_169] : memref<2x18x128xf32, #tpu.memory_space<vmem>>, vector<2x16x128xf32>
    %174 = vector.shape_cast %173 : vector<2x16x128xf32> to vector<32x128xf32>
    %c2560 = arith.constant 2560 : index
    %c0_170 = arith.constant 0 : index
    %175 = vector.load %arg4[%c2560, %c0_170] : memref<3584x128xbf16, #tpu.memory_space<vmem>>, vector<128x128xbf16>
    %176 = arith.truncf %174 : vector<32x128xf32> to vector<32x128xbf16>
    %cst_171 = arith.constant dense<0.000000e+00> : vector<32x128xf32>
    %177 = tpu.matmul %176, %175, %cst_171 {dimension_numbers = #tpu.dot_dimension_numbers<[1], [0], [0], [1], [0, 0, 1, 1], [], []>} : vector<32x128xbf16>, vector<128x128xbf16>, vector<32x128xf32> -> vector<32x128xf32>
    %178 = arith.addf %172, %177 : vector<32x128xf32>
    %c0_172 = arith.constant 0 : index
    %c2_173 = arith.constant 2 : index
    %c0_174 = arith.constant 0 : index
    %179 = vector.load %arg13[%c0_172, %c2_173, %c0_174] : memref<2x18x128xf32, #tpu.memory_space<vmem>>, vector<2x16x128xf32>
    %180 = vector.shape_cast %179 : vector<2x16x128xf32> to vector<32x128xf32>
    %c2688 = arith.constant 2688 : index
    %c0_175 = arith.constant 0 : index
    %181 = vector.load %arg4[%c2688, %c0_175] : memref<3584x128xbf16, #tpu.memory_space<vmem>>, vector<128x128xbf16>
    %182 = arith.truncf %180 : vector<32x128xf32> to vector<32x128xbf16>
    %cst_176 = arith.constant dense<0.000000e+00> : vector<32x128xf32>
    %183 = tpu.matmul %182, %181, %cst_176 {dimension_numbers = #tpu.dot_dimension_numbers<[1], [0], [0], [1], [0, 0, 1, 1], [], []>} : vector<32x128xbf16>, vector<128x128xbf16>, vector<32x128xf32> -> vector<32x128xf32>
    %184 = arith.addf %178, %183 : vector<32x128xf32>
    %c0_177 = arith.constant 0 : index
    %c0_178 = arith.constant 0 : index
    %c0_179 = arith.constant 0 : index
    %185 = vector.load %arg14[%c0_177, %c0_178, %c0_179] : memref<2x18x128xf32, #tpu.memory_space<vmem>>, vector<2x16x128xf32>
    %186 = vector.shape_cast %185 : vector<2x16x128xf32> to vector<32x128xf32>
    %c2816 = arith.constant 2816 : index
    %c0_180 = arith.constant 0 : index
    %187 = vector.load %arg4[%c2816, %c0_180] : memref<3584x128xbf16, #tpu.memory_space<vmem>>, vector<128x128xbf16>
    %188 = arith.truncf %186 : vector<32x128xf32> to vector<32x128xbf16>
    %cst_181 = arith.constant dense<0.000000e+00> : vector<32x128xf32>
    %189 = tpu.matmul %188, %187, %cst_181 {dimension_numbers = #tpu.dot_dimension_numbers<[1], [0], [0], [1], [0, 0, 1, 1], [], []>} : vector<32x128xbf16>, vector<128x128xbf16>, vector<32x128xf32> -> vector<32x128xf32>
    %190 = arith.addf %184, %189 : vector<32x128xf32>
    %c0_182 = arith.constant 0 : index
    %c1_183 = arith.constant 1 : index
    %c0_184 = arith.constant 0 : index
    %191 = vector.load %arg14[%c0_182, %c1_183, %c0_184] : memref<2x18x128xf32, #tpu.memory_space<vmem>>, vector<2x16x128xf32>
    %192 = vector.shape_cast %191 : vector<2x16x128xf32> to vector<32x128xf32>
    %c2944 = arith.constant 2944 : index
    %c0_185 = arith.constant 0 : index
    %193 = vector.load %arg4[%c2944, %c0_185] : memref<3584x128xbf16, #tpu.memory_space<vmem>>, vector<128x128xbf16>
    %194 = arith.truncf %192 : vector<32x128xf32> to vector<32x128xbf16>
    %cst_186 = arith.constant dense<0.000000e+00> : vector<32x128xf32>
    %195 = tpu.matmul %194, %193, %cst_186 {dimension_numbers = #tpu.dot_dimension_numbers<[1], [0], [0], [1], [0, 0, 1, 1], [], []>} : vector<32x128xbf16>, vector<128x128xbf16>, vector<32x128xf32> -> vector<32x128xf32>
    %196 = arith.addf %190, %195 : vector<32x128xf32>
    %c0_187 = arith.constant 0 : index
    %c2_188 = arith.constant 2 : index
    %c0_189 = arith.constant 0 : index
    %197 = vector.load %arg14[%c0_187, %c2_188, %c0_189] : memref<2x18x128xf32, #tpu.memory_space<vmem>>, vector<2x16x128xf32>
    %198 = vector.shape_cast %197 : vector<2x16x128xf32> to vector<32x128xf32>
    %c3072 = arith.constant 3072 : index
    %c0_190 = arith.constant 0 : index
    %199 = vector.load %arg4[%c3072, %c0_190] : memref<3584x128xbf16, #tpu.memory_space<vmem>>, vector<128x128xbf16>
    %200 = arith.truncf %198 : vector<32x128xf32> to vector<32x128xbf16>
    %cst_191 = arith.constant dense<0.000000e+00> : vector<32x128xf32>
    %201 = tpu.matmul %200, %199, %cst_191 {dimension_numbers = #tpu.dot_dimension_numbers<[1], [0], [0], [1], [0, 0, 1, 1], [], []>} : vector<32x128xbf16>, vector<128x128xbf16>, vector<32x128xf32> -> vector<32x128xf32>
    %202 = arith.addf %196, %201 : vector<32x128xf32>
    %c6 = arith.constant 6 : index
    %c0_192 = arith.constant 0 : index
    %203 = vector.load %arg5[%c6, %c0_192] : memref<8x128xf32, #tpu.memory_space<vmem>>, vector<1x128xf32>
    %204 = vector.broadcast %203 : vector<1x128xf32> to vector<32x128xf32>
    %205 = arith.addf %202, %204 : vector<32x128xf32>
    %cst_193 = arith.constant 0.000000e+00 : f32
    %206 = vector.broadcast %cst_193 : f32 to vector<32x128xf32>
    %207 = arith.maximumf %205, %206 : vector<32x128xf32>
    %208 = vector.shape_cast %207 : vector<32x128xf32> to vector<2x16x128xf32>
    %c0_194 = arith.constant 0 : index
    %c1_195 = arith.constant 1 : index
    %c0_196 = arith.constant 0 : index
    %209 = vector.load %arg15[%c0_194, %c1_195, %c0_196] : memref<2x18x128xf32, #tpu.memory_space<vmem>>, vector<2x16x128xf32>
    tpu.vector_store %arg15[%c0_194, %c1_195, %c0_196], %208 {strides = array<i32>} : memref<2x18x128xf32, #tpu.memory_space<vmem>>, vector<2x16x128xf32>,
    %c0_197 = arith.constant 0 : index
    %c0_198 = arith.constant 0 : index
    %c0_199 = arith.constant 0 : index
    %210 = vector.load %arg15[%c0_197, %c0_198, %c0_199] : memref<2x18x128xf32, #tpu.memory_space<vmem>>, vector<2x16x128xf32>
    %211 = vector.shape_cast %210 : vector<2x16x128xf32> to vector<32x128xf32>
    %c3200 = arith.constant 3200 : index
    %c0_200 = arith.constant 0 : index
    %212 = vector.load %arg4[%c3200, %c0_200] : memref<3584x128xbf16, #tpu.memory_space<vmem>>, vector<128x128xbf16>
    %213 = arith.truncf %211 : vector<32x128xf32> to vector<32x128xbf16>
    %cst_201 = arith.constant dense<0.000000e+00> : vector<32x128xf32>
    %214 = tpu.matmul %213, %212, %cst_201 {dimension_numbers = #tpu.dot_dimension_numbers<[1], [0], [0], [1], [0, 0, 1, 1], [], []>} : vector<32x128xbf16>, vector<128x128xbf16>, vector<32x128xf32> -> vector<32x128xf32>
    %c0_202 = arith.constant 0 : index
    %c1_203 = arith.constant 1 : index
    %c0_204 = arith.constant 0 : index
    %215 = vector.load %arg15[%c0_202, %c1_203, %c0_204] : memref<2x18x128xf32, #tpu.memory_space<vmem>>, vector<2x16x128xf32>
    %216 = vector.shape_cast %215 : vector<2x16x128xf32> to vector<32x128xf32>
    %c3328 = arith.constant 3328 : index
    %c0_205 = arith.constant 0 : index
    %217 = vector.load %arg4[%c3328, %c0_205] : memref<3584x128xbf16, #tpu.memory_space<vmem>>, vector<128x128xbf16>
    %218 = arith.truncf %216 : vector<32x128xf32> to vector<32x128xbf16>
    %cst_206 = arith.constant dense<0.000000e+00> : vector<32x128xf32>
    %219 = tpu.matmul %218, %217, %cst_206 {dimension_numbers = #tpu.dot_dimension_numbers<[1], [0], [0], [1], [0, 0, 1, 1], [], []>} : vector<32x128xbf16>, vector<128x128xbf16>, vector<32x128xf32> -> vector<32x128xf32>
    %220 = arith.addf %214, %219 : vector<32x128xf32>
    %c0_207 = arith.constant 0 : index
    %c2_208 = arith.constant 2 : index
    %c0_209 = arith.constant 0 : index
    %221 = vector.load %arg15[%c0_207, %c2_208, %c0_209] : memref<2x18x128xf32, #tpu.memory_space<vmem>>, vector<2x16x128xf32>
    %222 = vector.shape_cast %221 : vector<2x16x128xf32> to vector<32x128xf32>
    %c3456 = arith.constant 3456 : index
    %c0_210 = arith.constant 0 : index
    %223 = vector.load %arg4[%c3456, %c0_210] : memref<3584x128xbf16, #tpu.memory_space<vmem>>, vector<128x128xbf16>
    %224 = arith.truncf %222 : vector<32x128xf32> to vector<32x128xbf16>
    %cst_211 = arith.constant dense<0.000000e+00> : vector<32x128xf32>
    %225 = tpu.matmul %224, %223, %cst_211 {dimension_numbers = #tpu.dot_dimension_numbers<[1], [0], [0], [1], [0, 0, 1, 1], [], []>} : vector<32x128xbf16>, vector<128x128xbf16>, vector<32x128xf32> -> vector<32x128xf32>
    %226 = arith.addf %220, %225 : vector<32x128xf32>
    %c7 = arith.constant 7 : index
    %c0_212 = arith.constant 0 : index
    %227 = vector.load %arg5[%c7, %c0_212] : memref<8x128xf32, #tpu.memory_space<vmem>>, vector<1x128xf32>
    %228 = vector.broadcast %227 : vector<1x128xf32> to vector<32x128xf32>
    %229 = arith.addf %226, %228 : vector<32x128xf32>
    %cst_213 = arith.constant 0.000000e+00 : f32
    %230 = vector.broadcast %cst_213 : f32 to vector<32x128xf32>
    %231 = arith.maximumf %229, %230 : vector<32x128xf32>
    %232 = vector.shape_cast %231 : vector<32x128xf32> to vector<2x16x128xf32>
    %c0_214 = arith.constant 0 : index
    %c0_215 = arith.constant 0 : index
    %c0_216 = arith.constant 0 : index
    %233 = vector.load %arg7[%c0_214, %c0_215, %c0_216] : memref<2x16x128xf32, #tpu.memory_space<vmem>>, vector<2x16x128xf32>
    tpu.vector_store %arg7[%c0_214, %c0_215, %c0_216], %232 {strides = array<i32>} : memref<2x16x128xf32, #tpu.memory_space<vmem>>, vector<2x16x128xf32>,
    return
  }
  func.func @transform_0(%arg0: i32) -> (i32, i32, i32) {
    %c0_i32 = arith.constant 0 : i32
    %c0_i32_0 = arith.constant 0 : i32
    %c0_i32_1 = arith.constant 0 : i32
    %c0_i32_2 = arith.constant 0 : i32
    return %c0_i32, %c0_i32_0, %c0_i32_1 : i32, i32, i32
  }
  func.func @transform_1(%arg0: i32) -> (i32, i32, i32) {
    %c0_i32 = arith.constant 0 : i32
    %c0_i32_0 = arith.constant 0 : i32
    %c0_i32_1 = arith.constant 0 : i32
    %c0_i32_2 = arith.constant 0 : i32
    return %c0_i32, %c0_i32_0, %c0_i32_1 : i32, i32, i32
  }
  func.func @transform_2(%arg0: i32) -> (i32, i32, i32) {
    %c0_i32 = arith.constant 0 : i32
    %c0_i32_0 = arith.constant 0 : i32
    %c0_i32_1 = arith.constant 0 : i32
    %c0_i32_2 = arith.constant 0 : i32
    return %c0_i32, %c0_i32_0, %c0_i32_1 : i32, i32, i32
  }
  func.func @transform_3(%arg0: i32) -> (i32, i32) {
    %c0_i32 = arith.constant 0 : i32
    %c0_i32_0 = arith.constant 0 : i32
    %c0_i32_1 = arith.constant 0 : i32
    return %c0_i32, %c0_i32_0 : i32, i32
  }
  func.func @transform_4(%arg0: i32) -> (i32, i32) {
    %c0_i32 = arith.constant 0 : i32
    %c0_i32_0 = arith.constant 0 : i32
    %c0_i32_1 = arith.constant 0 : i32
    return %c0_i32, %c0_i32_0 : i32, i32
  }
  func.func @transform_5(%arg0: i32) -> (i32, i32, i32) {
    %c0_i32 = arith.constant 0 : i32
    %c0_i32_0 = arith.constant 0 : i32
    %c0_i32_1 = arith.constant 0 : i32
    %c0_i32_2 = arith.constant 0 : i32
    return %c0_i32, %c0_i32_0, %c0_i32_1 : i32, i32, i32
  }
  func.func @transform_6(%arg0: i32) -> (i32, i32, i32) {
    %c0_i32 = arith.constant 0 : i32
    %c0_i32_0 = arith.constant 0 : i32
    %c0_i32_1 = arith.constant 0 : i32
    %c0_i32_2 = arith.constant 0 : i32
    return %c0_i32, %c0_i32_0, %c0_i32_1 : i32, i32, i32
  }
}

</mosaic_0001>

<llo_original>
// kernel: forward.1
$region0: #{forward.1}
  #allocation0 [shape = 'u32[]', space=smem, size = 0x4, offset = 0x4, fixed_abs, tag = 'smem constant byte address 0x4 - core index']
  #allocation1 [shape = 'u32[144,128]{1,0:T(1,128)}', space=vmem, size = 0x12000, scoped, tag = 'internal scratch']
  #allocation2 [shape = 'f32[2,6,128]{2,1,0:T(8,128)}', space=vmem, size = 0x2000, scoped, tag = 'scratch operand']
  #allocation3 [shape = 'f32[2,6,128]{2,1,0:T(8,128)}', space=vmem, size = 0x2000, scoped, tag = 'scratch operand']
  #allocation4 [shape = 'f32[2,10,128]{2,1,0:T(8,128)}', space=vmem, size = 0x4000, scoped, tag = 'scratch operand']
  #allocation5 [shape = 'f32[2,10,128]{2,1,0:T(8,128)}', space=vmem, size = 0x4000, scoped, tag = 'scratch operand']
  #allocation6 [shape = 'f32[2,10,128]{2,1,0:T(8,128)}', space=vmem, size = 0x4000, scoped, tag = 'scratch operand']
  #allocation7 [shape = 'f32[2,18,128]{2,1,0:T(8,128)}', space=vmem, size = 0x6000, scoped, tag = 'scratch operand']
  #allocation8 [shape = 'f32[2,18,128]{2,1,0:T(8,128)}', space=vmem, size = 0x6000, scoped, tag = 'scratch operand']
  #allocation9 [shape = 'f32[2,18,128]{2,1,0:T(8,128)}', space=vmem, size = 0x6000, scoped, tag = 'scratch operand']
  %s0 = inlined_call_operand.vmem [shape: f32[2,16,128], index: 0, kind: input, shape index: {}]
  %s1 = inlined_call_operand.vmem [shape: f32[2,8,128], index: 1, kind: input, shape index: {}]
  %s2 = inlined_call_operand.vmem [shape: f32[2,4,128], index: 2, kind: input, shape index: {}]
  %s3 = inlined_call_operand.hbm [shape: bf16[3584,128], index: 3, kind: input, shape index: {}]
  %s4 = inlined_call_operand.vmem [shape: f32[8,128], index: 4, kind: input, shape index: {}]
  %s5 = inlined_call_operand.vmem [shape: f32[2,8,128], index: 5, kind: output, shape index: {0}]
  %s6 = inlined_call_operand.vmem [shape: f32[2,16,128], index: 6, kind: output, shape index: {1}]
  %7 = xla_tuple %s5, %s6
  %s8 = sld [smem:[#allocation0]]
  $region42: #{forward.1} parent=0
    _
  %s10 = ssub.s32 1, %s8
  %s11 = scalar_select 0, %s10, %s8
  $region1: #{forward.1} parent=0
    #allocation10 [shape = 'u8[917504]{0}', space=vmem, size = 0xe0000, scoped, tag = 'input window, operand 3, single buffered']
    #allocation11 [shape = 's32[1]{0}', space=sflag, size = 0x4, scoped, tag = 'scoped memory for forward.1']
    %12 = vsyncpa [#allocation11], 0
    // Predicated region
    $region2: #{forward.1} parent=1 // pred_check
      _
    $region3: #{forward.1} parent=1 // pred_check_branch
      %14 = sbr.rel (0) target = $region5
    $region4: #{forward.1} parent=1 // pred_region
      _
    $region5: #{forward.1} parent=1 // pred_fallthru
      _
    // Predicated region
    $region6: #{forward.1} parent=1 // pred_check
      _
    $region7: #{forward.1} parent=1 // pred_check_branch
      %16 = sbr.rel (0) target = $region9
    $region8: #{forward.1} parent=1 // pred_region
      _
    $region9: #{forward.1} parent=1 // pred_fallthru
      _
    // Predicated region
    $region10: #{forward.1} parent=1 // pred_check
      _
    $region11: #{forward.1} parent=1 // pred_check_branch
      %18 = sbr.rel (0) target = $region13
    $region12: #{forward.1} parent=1 // pred_region
      _
    $region13: #{forward.1} parent=1 // pred_fallthru
      _
    // Predicated region
    $region14: #{forward.1} parent=1 // pred_check
      _
    $region15: #{forward.1} parent=1 // pred_check_branch
      %20 = sbr.rel (0) target = $region17
    $region16: #{forward.1} parent=1 // pred_region
      %s22 = ssub.s32 28672, 28672
      %23 = vsyncadd [#allocation11], %s22
      %s24 = sshll.u32 [#allocation10], 4
      %s25 = int_to_ptr.vmem [resolvable:$true] %s24
      %30 = dma.hbm_to_vmem [thread:$0]  %s3, 28672, %s25, [#allocation11], 64, 64, 4
    $region17: #{forward.1} parent=1 // pred_fallthru
      _
    // Predicated region
    $region18: #{forward.1} parent=1 // pred_check
      _
    $region19: #{forward.1} parent=1 // pred_check_branch
      %32 = sbr.rel (0) target = $region21
    $region20: #{forward.1} parent=1 // pred_region
      _
    $region21: #{forward.1} parent=1 // pred_fallthru
      _
    // Predicated region
    $region22: #{forward.1} parent=1 // pred_check
      _
    $region23: #{forward.1} parent=1 // pred_check_branch
      %34 = sbr.rel (0) target = $region25
    $region24: #{forward.1} parent=1 // pred_region
      %35 = dma.done [#allocation11], 28672
    $region25: #{forward.1} parent=1 // pred_fallthru
      _
    %37 = vst [vmem:[#allocation2] sm:$0x3f] 0.0
    %38 = vst [vmem:[#allocation2 + $0x8] sm:$0x3f] 0.0
    %39 = vst [vmem:[#allocation3] sm:$0x3f] 0.0
    %40 = vst [vmem:[#allocation3 + $0x8] sm:$0x3f] 0.0
    %41 = vst [vmem:[#allocation4] sm:$0xff] 0.0
    %42 = vst [vmem:[#allocation4 + $0x8] sm:$0x3] 0.0
    %43 = vst [vmem:[#allocation4 + $0x10] sm:$0xff] 0.0
    %44 = vst [vmem:[#allocation4 + $0x18] sm:$0x3] 0.0
    %45 = vst [vmem:[#allocation5] sm:$0xff] 0.0
    %46 = vst [vmem:[#allocation5 + $0x8] sm:$0x3] 0.0
    %47 = vst [vmem:[#allocation5 + $0x10] sm:$0xff] 0.0
    %48 = vst [vmem:[#allocation5 + $0x18] sm:$0x3] 0.0
    %49 = vst [vmem:[#allocation6] sm:$0xff] 0.0
    %50 = vst [vmem:[#allocation6 + $0x8] sm:$0x3] 0.0
    %51 = vst [vmem:[#allocation6 + $0x10] sm:$0xff] 0.0
    %52 = vst [vmem:[#allocation6 + $0x18] sm:$0x3] 0.0
    %53 = vst [vmem:[#allocation7] sm:$0xff] 0.0
    %54 = vst [vmem:[#allocation7 + $0x8] sm:$0xff] 0.0
    %55 = vst [vmem:[#allocation7 + $0x10] sm:$0x3] 0.0
    %56 = vst [vmem:[#allocation7 + $0x18] sm:$0xff] 0.0
    %57 = vst [vmem:[#allocation7 + $0x20] sm:$0xff] 0.0
    %58 = vst [vmem:[#allocation7 + $0x28] sm:$0x3] 0.0
    %59 = vst [vmem:[#allocation8] sm:$0xff] 0.0
    %60 = vst [vmem:[#allocation8 + $0x8] sm:$0xff] 0.0
    %61 = vst [vmem:[#allocation8 + $0x10] sm:$0x3] 0.0
    %62 = vst [vmem:[#allocation8 + $0x18] sm:$0xff] 0.0
    %63 = vst [vmem:[#allocation8 + $0x20] sm:$0xff] 0.0
    %64 = vst [vmem:[#allocation8 + $0x28] sm:$0x3] 0.0
    %65 = vst [vmem:[#allocation9] sm:$0xff] 0.0
    %66 = vst [vmem:[#allocation9 + $0x8] sm:$0xff] 0.0
    %67 = vst [vmem:[#allocation9 + $0x10] sm:$0x3] 0.0
    %68 = vst [vmem:[#allocation9 + $0x18] sm:$0xff] 0.0
    %69 = vst [vmem:[#allocation9 + $0x20] sm:$0xff] 0.0
    %70 = vst [vmem:[#allocation9 + $0x28] sm:$0x3] 0.0
    %v71 = vld [vmem:[%s2] sm:$0xf]
    %v72 = vld [vmem:[%s2 + $0x4] sm:$0xf]
    %73 = vst [vmem:[#allocation2 + $0x1] sm:$0xf] %v71
    %74 = vst [vmem:[#allocation2 + $0x9] sm:$0xf] %v72
    %v75 = vld [vmem:[%s1] sm:$0xff]
    %v76 = vld [vmem:[%s1 + $0x8] sm:$0xff]
    %77 = vst [vmem:[#allocation4 + $0x1] sm:$0xff] %v75
    %78 = vst [vmem:[#allocation4 + $0x11] sm:$0xff] %v76
    %v79 = vld [vmem:[%s0] sm:$0xff]
    %v80 = vld [vmem:[%s0 + $0x8] sm:$0xff]
    %v81 = vld [vmem:[%s0 + $0x10] sm:$0xff]
    %v82 = vld [vmem:[%s0 + $0x18] sm:$0xff]
    %83 = vst [vmem:[#allocation7 + $0x1] sm:$0xff] %v79
    %84 = vst [vmem:[#allocation7 + $0x9] sm:$0xff] %v80
    %85 = vst [vmem:[#allocation7 + $0x19] sm:$0xff] %v81
    %86 = vst [vmem:[#allocation7 + $0x21] sm:$0xff] %v82
    %v87 = vld [vmem:[#allocation2] sm:$0xf]
    %v88 = vld [vmem:[#allocation2 + $0x8] sm:$0xf]
    %v89 = vld [vmem:[#allocation10] sm:$0xf]
    %v90 = vld [vmem:[#allocation10 + $0x4] sm:$0xf]
    %v91 = vld [vmem:[#allocation10 + $0x8] sm:$0xf]
    %v92 = vld [vmem:[#allocation10 + $0xc] sm:$0xf]
    %v93 = vld [vmem:[#allocation10 + $0x10] sm:$0xf]
    %v94 = vld [vmem:[#allocation10 + $0x14] sm:$0xf]
    %v95 = vld [vmem:[#allocation10 + $0x18] sm:$0xf]
    %v96 = vld [vmem:[#allocation10 + $0x1c] sm:$0xf]
    %v97 = vld [vmem:[#allocation10 + $0x20] sm:$0xf]
    %v98 = vld [vmem:[#allocation10 + $0x24] sm:$0xf]
    %v99 = vld [vmem:[#allocation10 + $0x28] sm:$0xf]
    %v100 = vld [vmem:[#allocation10 + $0x2c] sm:$0xf]
    %v101 = vld [vmem:[#allocation10 + $0x30] sm:$0xf]
    %v102 = vld [vmem:[#allocation10 + $0x34] sm:$0xf]
    %v103 = vld [vmem:[#allocation10 + $0x38] sm:$0xf]
    %v104 = vld [vmem:[#allocation10 + $0x3c] sm:$0xf]
    %v107 = vcombine.low %v87, %v88
    %v109 = vpack.c.bf16 %v107, %v107
    %v110 = vld [vmem:[#allocation2 + $0x1] sm:$0xf]
    %v111 = vld [vmem:[#allocation2 + $0x9] sm:$0xf]
    %v112 = vld [vmem:[#allocation10 + $0x40] sm:$0xf]
    %v113 = vld [vmem:[#allocation10 + $0x44] sm:$0xf]
    %v114 = vld [vmem:[#allocation10 + $0x48] sm:$0xf]
    %v115 = vld [vmem:[#allocation10 + $0x4c] sm:$0xf]
    %v116 = vld [vmem:[#allocation10 + $0x50] sm:$0xf]
    %v117 = vld [vmem:[#allocation10 + $0x54] sm:$0xf]
    %v118 = vld [vmem:[#allocation10 + $0x58] sm:$0xf]
    %v119 = vld [vmem:[#allocation10 + $0x5c] sm:$0xf]
    %v120 = vld [vmem:[#allocation10 + $0x60] sm:$0xf]
    %v121 = vld [vmem:[#allocation10 + $0x64] sm:$0xf]
    %v122 = vld [vmem:[#allocation10 + $0x68] sm:$0xf]
    %v123 = vld [vmem:[#allocation10 + $0x6c] sm:$0xf]
    %v124 = vld [vmem:[#allocation10 + $0x70] sm:$0xf]
    %v125 = vld [vmem:[#allocation10 + $0x74] sm:$0xf]
    %v126 = vld [vmem:[#allocation10 + $0x78] sm:$0xf]
    %v127 = vld [vmem:[#allocation10 + $0x7c] sm:$0xf]
    %v130 = vcombine.low %v110, %v111
    %v132 = vpack.c.bf16 %v130, %v130
    %v149 = vunpack.c.l.b16 %v112
    %v150 = vunpack.c.l.b16 %v113
    %v151 = vunpack.c.l.b16 %v114
    %v152 = vunpack.c.l.b16 %v115
    %v153 = vunpack.c.l.b16 %v116
    %v154 = vunpack.c.l.b16 %v117
    %v155 = vunpack.c.l.b16 %v118
    %v156 = vunpack.c.l.b16 %v119
    %v157 = vunpack.c.l.b16 %v120
    %v158 = vunpack.c.l.b16 %v121
    %v159 = vunpack.c.l.b16 %v122
    %v160 = vunpack.c.l.b16 %v123
    %v161 = vunpack.c.l.b16 %v124
    %v162 = vunpack.c.l.b16 %v125
    %v163 = vunpack.c.l.b16 %v126
    %v164 = vunpack.c.l.b16 %v127
    %v165 = vpack.c.b16 %v150, %v149
    %v166 = vpack.c.b16 %v152, %v151
    %v167 = vpack.c.b16 %v154, %v153
    %v168 = vpack.c.b16 %v156, %v155
    %v169 = vpack.c.b16 %v158, %v157
    %v170 = vpack.c.b16 %v160, %v159
    %v171 = vpack.c.b16 %v162, %v161
    %v172 = vpack.c.b16 %v164, %v163
    %181 = vmatprep.subr.bf16.mxu0 0
    %182 = vmatpush1.bf16.msra.mxu0 %v165
    %183 = vmatprep.subr.bf16.mxu0 0
    %184 = vmatpush1.bf16.msra.mxu0 %v166
    %185 = vmatprep.subr.bf16.mxu0 0
    %186 = vmatpush1.bf16.msra.mxu0 %v167
    %187 = vmatprep.subr.bf16.mxu0 0
    %188 = vmatpush1.bf16.msra.mxu0 %v168
    %189 = vmatprep.subr.bf16.mxu0 0
    %190 = vmatpush1.bf16.msra.mxu0 %v169
    %191 = vmatprep.subr.bf16.mxu0 0
    %192 = vmatpush1.bf16.msra.mxu0 %v170
    %193 = vmatprep.subr.bf16.mxu0 0
    %194 = vmatpush1.bf16.msra.mxu0 %v171
    %195 = vmatprep.subr.bf16.mxu0 0
    %196 = vmatpush1.bf16.msra.mxu0 %v172
    %197 = vmatprep.subr.bf16.mxu0 0
    %198 = vmatpush1.bf16.msra.mxu0 0
    %199 = vmatprep.subr.bf16.mxu0 0
    %200 = vmatpush1.bf16.msra.mxu0 0
    %201 = vmatprep.subr.bf16.mxu0 0
    %202 = vmatpush1.bf16.msra.mxu0 0
    %203 = vmatprep.subr.bf16.mxu0 0
    %204 = vmatpush1.bf16.msra.mxu0 0
    %205 = vmatprep.subr.bf16.mxu0 0
    %206 = vmatpush1.bf16.msra.mxu0 0
    %207 = vmatprep.subr.bf16.mxu0 0
    %208 = vmatpush1.bf16.msra.mxu0 0
    %209 = vmatprep.subr.bf16.mxu0 0
    %210 = vmatpush1.bf16.msra.mxu0 0
    %211 = vmatprep.subr.bf16.mxu0 0
    %212 = vmatpush1.bf16.msra.mxu0 0
    %213 = vmatprep.mubr.bf16.mxu0 0
    %214 = vmatmul.mubr.bf16.gmra.mrb[0].mxu0 %v132
    %v215 = vpop.f32.mrb[0].mxu0
    %v216 = vadd.f32 0.0, %v215
    %v217 = vpop.f32.mrb[0].mxu0
    %v218 = vpop.f32.mrb[0].mxu0
    %v219 = vpop.f32.mrb[0].mxu0
    %220 = vdwg.mxu0
    %v237 = vunpack.c.l.b16 %v89
    %v238 = vunpack.c.l.b16 %v90
    %v239 = vunpack.c.l.b16 %v91
    %v240 = vunpack.c.l.b16 %v92
    %v241 = vunpack.c.l.b16 %v93
    %v242 = vunpack.c.l.b16 %v94
    %v243 = vunpack.c.l.b16 %v95
    %v244 = vunpack.c.l.b16 %v96
    %v245 = vunpack.c.l.b16 %v97
    %v246 = vunpack.c.l.b16 %v98
    %v247 = vunpack.c.l.b16 %v99
    %v248 = vunpack.c.l.b16 %v100
    %v249 = vunpack.c.l.b16 %v101
    %v250 = vunpack.c.l.b16 %v102
    %v251 = vunpack.c.l.b16 %v103
    %v252 = vunpack.c.l.b16 %v104
    %v253 = vpack.c.b16 %v238, %v237
    %v254 = vpack.c.b16 %v240, %v239
    %v255 = vpack.c.b16 %v242, %v241
    %v256 = vpack.c.b16 %v244, %v243
    %v257 = vpack.c.b16 %v246, %v245
    %v258 = vpack.c.b16 %v248, %v247
    %v259 = vpack.c.b16 %v250, %v249
    %v260 = vpack.c.b16 %v252, %v251
    %269 = vmatprep.subr.bf16.mxu0 0
    %270 = vmatpush1.bf16.msra.mxu0 %v253
    %271 = vmatprep.subr.bf16.mxu0 0
    %272 = vmatpush1.bf16.msra.mxu0 %v254
    %273 = vmatprep.subr.bf16.mxu0 0
    %274 = vmatpush1.bf16.msra.mxu0 %v255
    %275 = vmatprep.subr.bf16.mxu0 0
    %276 = vmatpush1.bf16.msra.mxu0 %v256
    %277 = vmatprep.subr.bf16.mxu0 0
    %278 = vmatpush1.bf16.msra.mxu0 %v257
    %279 = vmatprep.subr.bf16.mxu0 0
    %280 = vmatpush1.bf16.msra.mxu0 %v258
    %281 = vmatprep.subr.bf16.mxu0 0
    %282 = vmatpush1.bf16.msra.mxu0 %v259
    %283 = vmatprep.subr.bf16.mxu0 0
    %284 = vmatpush1.bf16.msra.mxu0 %v260
    %285 = vmatprep.subr.bf16.mxu0 0
    %286 = vmatpush1.bf16.msra.mxu0 0
    %287 = vmatprep.subr.bf16.mxu0 0
    %288 = vmatpush1.bf16.msra.mxu0 0
    %289 = vmatprep.subr.bf16.mxu0 0
    %290 = vmatpush1.bf16.msra.mxu0 0
    %291 = vmatprep.subr.bf16.mxu0 0
    %292 = vmatpush1.bf16.msra.mxu0 0
    %293 = vmatprep.subr.bf16.mxu0 0
    %294 = vmatpush1.bf16.msra.mxu0 0
    %295 = vmatprep.subr.bf16.mxu0 0
    %296 = vmatpush1.bf16.msra.mxu0 0
    %297 = vmatprep.subr.bf16.mxu0 0
    %298 = vmatpush1.bf16.msra.mxu0 0
    %299 = vmatprep.subr.bf16.mxu0 0
    %300 = vmatpush1.bf16.msra.mxu0 0
    %301 = vmatprep.mubr.bf16.mxu0 0
    %302 = vmatmul.mubr.bf16.gmra.mrb[0].mxu0 %v109
    %v303 = vpop.f32.mrb[0].mxu0
    %v304 = vadd.f32 %v216, %v303
    %v305 = vpop.f32.mrb[0].mxu0
    %v306 = vpop.f32.mrb[0].mxu0
    %v307 = vpop.f32.mrb[0].mxu0
    %308 = vdwg.mxu0
    %v309 = vld [vmem:[#allocation2 + $0x2] sm:$0xf]
    %v310 = vld [vmem:[#allocation2 + $0xa] sm:$0xf]
    %v311 = vld [vmem:[#allocation10 + $0x80] sm:$0xf]
    %v312 = vld [vmem:[#allocation10 + $0x84] sm:$0xf]
    %v313 = vld [vmem:[#allocation10 + $0x88] sm:$0xf]
    %v314 = vld [vmem:[#allocation10 + $0x8c] sm:$0xf]
    %v315 = vld [vmem:[#allocation10 + $0x90] sm:$0xf]
    %v316 = vld [vmem:[#allocation10 + $0x94] sm:$0xf]
    %v317 = vld [vmem:[#allocation10 + $0x98] sm:$0xf]
    %v318 = vld [vmem:[#allocation10 + $0x9c] sm:$0xf]
    %v319 = vld [vmem:[#allocation10 + $0xa0] sm:$0xf]
    %v320 = vld [vmem:[#allocation10 + $0xa4] sm:$0xf]
    %v321 = vld [vmem:[#allocation10 + $0xa8] sm:$0xf]
    %v322 = vld [vmem:[#allocation10 + $0xac] sm:$0xf]
    %v323 = vld [vmem:[#allocation10 + $0xb0] sm:$0xf]
    %v324 = vld [vmem:[#allocation10 + $0xb4] sm:$0xf]
    %v325 = vld [vmem:[#allocation10 + $0xb8] sm:$0xf]
    %v326 = vld [vmem:[#allocation10 + $0xbc] sm:$0xf]
    %v329 = vcombine.low %v309, %v310
    %v331 = vpack.c.bf16 %v329, %v329
    %v348 = vunpack.c.l.b16 %v311
    %v349 = vunpack.c.l.b16 %v312
    %v350 = vunpack.c.l.b16 %v313
    %v351 = vunpack.c.l.b16 %v314
    %v352 = vunpack.c.l.b16 %v315
    %v353 = vunpack.c.l.b16 %v316
    %v354 = vunpack.c.l.b16 %v317
    %v355 = vunpack.c.l.b16 %v318
    %v356 = vunpack.c.l.b16 %v319
    %v357 = vunpack.c.l.b16 %v320
    %v358 = vunpack.c.l.b16 %v321
    %v359 = vunpack.c.l.b16 %v322
    %v360 = vunpack.c.l.b16 %v323
    %v361 = vunpack.c.l.b16 %v324
    %v362 = vunpack.c.l.b16 %v325
    %v363 = vunpack.c.l.b16 %v326
    %v364 = vpack.c.b16 %v349, %v348
    %v365 = vpack.c.b16 %v351, %v350
    %v366 = vpack.c.b16 %v353, %v352
    %v367 = vpack.c.b16 %v355, %v354
    %v368 = vpack.c.b16 %v357, %v356
    %v369 = vpack.c.b16 %v359, %v358
    %v370 = vpack.c.b16 %v361, %v360
    %v371 = vpack.c.b16 %v363, %v362
    %380 = vmatprep.subr.bf16.mxu0 0
    %381 = vmatpush1.bf16.msra.mxu0 %v364
    %382 = vmatprep.subr.bf16.mxu0 0
    %383 = vmatpush1.bf16.msra.mxu0 %v365
    %384 = vmatprep.subr.bf16.mxu0 0
    %385 = vmatpush1.bf16.msra.mxu0 %v366
    %386 = vmatprep.subr.bf16.mxu0 0
    %387 = vmatpush1.bf16.msra.mxu0 %v367
    %388 = vmatprep.subr.bf16.mxu0 0
    %389 = vmatpush1.bf16.msra.mxu0 %v368
    %390 = vmatprep.subr.bf16.mxu0 0
    %391 = vmatpush1.bf16.msra.mxu0 %v369
    %392 = vmatprep.subr.bf16.mxu0 0
    %393 = vmatpush1.bf16.msra.mxu0 %v370
    %394 = vmatprep.subr.bf16.mxu0 0
    %395 = vmatpush1.bf16.msra.mxu0 %v371
    %396 = vmatprep.subr.bf16.mxu0 0
    %397 = vmatpush1.bf16.msra.mxu0 0
    %398 = vmatprep.subr.bf16.mxu0 0
    %399 = vmatpush1.bf16.msra.mxu0 0
    %400 = vmatprep.subr.bf16.mxu0 0
    %401 = vmatpush1.bf16.msra.mxu0 0
    %402 = vmatprep.subr.bf16.mxu0 0
    %403 = vmatpush1.bf16.msra.mxu0 0
    %404 = vmatprep.subr.bf16.mxu0 0
    %405 = vmatpush1.bf16.msra.mxu0 0
    %406 = vmatprep.subr.bf16.mxu0 0
    %407 = vmatpush1.bf16.msra.mxu0 0
    %408 = vmatprep.subr.bf16.mxu0 0
    %409 = vmatpush1.bf16.msra.mxu0 0
    %410 = vmatprep.subr.bf16.mxu0 0
    %411 = vmatpush1.bf16.msra.mxu0 0
    %412 = vmatprep.mubr.bf16.mxu0 0
    %413 = vmatmul.mubr.bf16.gmra.mrb[0].mxu0 %v331
    %v414 = vpop.f32.mrb[0].mxu0
    %v415 = vadd.f32 0.0, %v414
    %v416 = vpop.f32.mrb[0].mxu0
    %v417 = vpop.f32.mrb[0].mxu0
    %v418 = vpop.f32.mrb[0].mxu0
    %419 = vdwg.mxu0
    %v420 = vadd.f32 %v304, %v415
    %v421 = vld [vmem:[%s4] sm:$0x1]
    %v422 = vlaneseq
    %v423 = vshrl.u32 %v422, 7
    %v424 = vsub.s32 0, %v423
    %v425 = vrot.slane %v421, %v424
    %v426 = vadd.f32 %v420, %v425
    %v427 = vmax.f32 %v426, 0.0
    %v429 = vcombine.high %v427, %v427
    %431 = vst [vmem:[#allocation3 + $0x1] sm:$0xf] %v427
    %432 = vst [vmem:[#allocation3 + $0x9] sm:$0xf] %v429
    %v433 = vld [vmem:[#allocation3] sm:$0xf]
    %v434 = vld [vmem:[#allocation3 + $0x8] sm:$0xf]
    %v435 = vld [vmem:[#allocation10 + $0xc0] sm:$0xf]
    %v436 = vld [vmem:[#allocation10 + $0xc4] sm:$0xf]
    %v437 = vld [vmem:[#allocation10 + $0xc8] sm:$0xf]
    %v438 = vld [vmem:[#allocation10 + $0xcc] sm:$0xf]
    %v439 = vld [vmem:[#allocation10 + $0xd0] sm:$0xf]
    %v440 = vld [vmem:[#allocation10 + $0xd4] sm:$0xf]
    %v441 = vld [vmem:[#allocation10 + $0xd8] sm:$0xf]
    %v442 = vld [vmem:[#allocation10 + $0xdc] sm:$0xf]
    %v443 = vld [vmem:[#allocation10 + $0xe0] sm:$0xf]
    %v444 = vld [vmem:[#allocation10 + $0xe4] sm:$0xf]
    %v445 = vld [vmem:[#allocation10 + $0xe8] sm:$0xf]
    %v446 = vld [vmem:[#allocation10 + $0xec] sm:$0xf]
    %v447 = vld [vmem:[#allocation10 + $0xf0] sm:$0xf]
    %v448 = vld [vmem:[#allocation10 + $0xf4] sm:$0xf]
    %v449 = vld [vmem:[#allocation10 + $0xf8] sm:$0xf]
    %v450 = vld [vmem:[#allocation10 + $0xfc] sm:$0xf]
    %v453 = vcombine.low %v433, %v434
    %v455 = vpack.c.bf16 %v453, %v453
    %v456 = vld [vmem:[#allocation3 + $0x1] sm:$0xf]
    %v457 = vld [vmem:[#allocation3 + $0x9] sm:$0xf]
    %v458 = vld [vmem:[#allocation10 + $0x100] sm:$0xf]
    %v459 = vld [vmem:[#allocation10 + $0x104] sm:$0xf]
    %v460 = vld [vmem:[#allocation10 + $0x108] sm:$0xf]
    %v461 = vld [vmem:[#allocation10 + $0x10c] sm:$0xf]
    %v462 = vld [vmem:[#allocation10 + $0x110] sm:$0xf]
    %v463 = vld [vmem:[#allocation10 + $0x114] sm:$0xf]
    %v464 = vld [vmem:[#allocation10 + $0x118] sm:$0xf]
    %v465 = vld [vmem:[#allocation10 + $0x11c] sm:$0xf]
    %v466 = vld [vmem:[#allocation10 + $0x120] sm:$0xf]
    %v467 = vld [vmem:[#allocation10 + $0x124] sm:$0xf]
    %v468 = vld [vmem:[#allocation10 + $0x128] sm:$0xf]
    %v469 = vld [vmem:[#allocation10 + $0x12c] sm:$0xf]
    %v470 = vld [vmem:[#allocation10 + $0x130] sm:$0xf]
    %v471 = vld [vmem:[#allocation10 + $0x134] sm:$0xf]
    %v472 = vld [vmem:[#allocation10 + $0x138] sm:$0xf]
    %v473 = vld [vmem:[#allocation10 + $0x13c] sm:$0xf]
    %v476 = vcombine.low %v456, %v457
    %v478 = vpack.c.bf16 %v476, %v476
    %v495 = vunpack.c.l.b16 %v458
    %v496 = vunpack.c.l.b16 %v459
    %v497 = vunpack.c.l.b16 %v460
    %v498 = vunpack.c.l.b16 %v461
    %v499 = vunpack.c.l.b16 %v462
    %v500 = vunpack.c.l.b16 %v463
    %v501 = vunpack.c.l.b16 %v464
    %v502 = vunpack.c.l.b16 %v465
    %v503 = vunpack.c.l.b16 %v466
    %v504 = vunpack.c.l.b16 %v467
    %v505 = vunpack.c.l.b16 %v468
    %v506 = vunpack.c.l.b16 %v469
    %v507 = vunpack.c.l.b16 %v470
    %v508 = vunpack.c.l.b16 %v471
    %v509 = vunpack.c.l.b16 %v472
    %v510 = vunpack.c.l.b16 %v473
    %v511 = vpack.c.b16 %v496, %v495
    %v512 = vpack.c.b16 %v498, %v497
    %v513 = vpack.c.b16 %v500, %v499
    %v514 = vpack.c.b16 %v502, %v501
    %v515 = vpack.c.b16 %v504, %v503
    %v516 = vpack.c.b16 %v506, %v505
    %v517 = vpack.c.b16 %v508, %v507
    %v518 = vpack.c.b16 %v510, %v509
    %527 = vmatprep.subr.bf16.mxu0 0
    %528 = vmatpush1.bf16.msra.mxu0 %v511
    %529 = vmatprep.subr.bf16.mxu0 0
    %530 = vmatpush1.bf16.msra.mxu0 %v512
    %531 = vmatprep.subr.bf16.mxu0 0
    %532 = vmatpush1.bf16.msra.mxu0 %v513
    %533 = vmatprep.subr.bf16.mxu0 0
    %534 = vmatpush1.bf16.msra.mxu0 %v514
    %535 = vmatprep.subr.bf16.mxu0 0
    %536 = vmatpush1.bf16.msra.mxu0 %v515
    %537 = vmatprep.subr.bf16.mxu0 0
    %538 = vmatpush1.bf16.msra.mxu0 %v516
    %539 = vmatprep.subr.bf16.mxu0 0
    %540 = vmatpush1.bf16.msra.mxu0 %v517
    %541 = vmatprep.subr.bf16.mxu0 0
    %542 = vmatpush1.bf16.msra.mxu0 %v518
    %543 = vmatprep.subr.bf16.mxu0 0
    %544 = vmatpush1.bf16.msra.mxu0 0
    %545 = vmatprep.subr.bf16.mxu0 0
    %546 = vmatpush1.bf16.msra.mxu0 0
    %547 = vmatprep.subr.bf16.mxu0 0
    %548 = vmatpush1.bf16.msra.mxu0 0
    %549 = vmatprep.subr.bf16.mxu0 0
    %550 = vmatpush1.bf16.msra.mxu0 0
    %551 = vmatprep.subr.bf16.mxu0 0
    %552 = vmatpush1.bf16.msra.mxu0 0
    %553 = vmatprep.subr.bf16.mxu0 0
    %554 = vmatpush1.bf16.msra.mxu0 0
    %555 = vmatprep.subr.bf16.mxu0 0
    %556 = vmatpush1.bf16.msra.mxu0 0
    %557 = vmatprep.subr.bf16.mxu0 0
    %558 = vmatpush1.bf16.msra.mxu0 0
    %559 = vmatprep.mubr.bf16.mxu0 0
    %560 = vmatmul.mubr.bf16.gmra.mrb[0].mxu0 %v478
    %v561 = vpop.f32.mrb[0].mxu0
    %v562 = vadd.f32 0.0, %v561
    %v563 = vpop.f32.mrb[0].mxu0
    %v564 = vpop.f32.mrb[0].mxu0
    %v565 = vpop.f32.mrb[0].mxu0
    %566 = vdwg.mxu0
    %v583 = vunpack.c.l.b16 %v435
    %v584 = vunpack.c.l.b16 %v436
    %v585 = vunpack.c.l.b16 %v437
    %v586 = vunpack.c.l.b16 %v438
    %v587 = vunpack.c.l.b16 %v439
    %v588 = vunpack.c.l.b16 %v440
    %v589 = vunpack.c.l.b16 %v441
    %v590 = vunpack.c.l.b16 %v442
    %v591 = vunpack.c.l.b16 %v443
    %v592 = vunpack.c.l.b16 %v444
    %v593 = vunpack.c.l.b16 %v445
    %v594 = vunpack.c.l.b16 %v446
    %v595 = vunpack.c.l.b16 %v447
    %v596 = vunpack.c.l.b16 %v448
    %v597 = vunpack.c.l.b16 %v449
    %v598 = vunpack.c.l.b16 %v450
    %v599 = vpack.c.b16 %v584, %v583
    %v600 = vpack.c.b16 %v586, %v585
    %v601 = vpack.c.b16 %v588, %v587
    %v602 = vpack.c.b16 %v590, %v589
    %v603 = vpack.c.b16 %v592, %v591
    %v604 = vpack.c.b16 %v594, %v593
    %v605 = vpack.c.b16 %v596, %v595
    %v606 = vpack.c.b16 %v598, %v597
    %615 = vmatprep.subr.bf16.mxu0 0
    %616 = vmatpush1.bf16.msra.mxu0 %v599
    %617 = vmatprep.subr.bf16.mxu0 0
    %618 = vmatpush1.bf16.msra.mxu0 %v600
    %619 = vmatprep.subr.bf16.mxu0 0
    %620 = vmatpush1.bf16.msra.mxu0 %v601
    %621 = vmatprep.subr.bf16.mxu0 0
    %622 = vmatpush1.bf16.msra.mxu0 %v602
    %623 = vmatprep.subr.bf16.mxu0 0
    %624 = vmatpush1.bf16.msra.mxu0 %v603
    %625 = vmatprep.subr.bf16.mxu0 0
    %626 = vmatpush1.bf16.msra.mxu0 %v604
    %627 = vmatprep.subr.bf16.mxu0 0
    %628 = vmatpush1.bf16.msra.mxu0 %v605
    %629 = vmatprep.subr.bf16.mxu0 0
    %630 = vmatpush1.bf16.msra.mxu0 %v606
    %631 = vmatprep.subr.bf16.mxu0 0
    %632 = vmatpush1.bf16.msra.mxu0 0
    %633 = vmatprep.subr.bf16.mxu0 0
    %634 = vmatpush1.bf16.msra.mxu0 0
    %635 = vmatprep.subr.bf16.mxu0 0
    %636 = vmatpush1.bf16.msra.mxu0 0
    %637 = vmatprep.subr.bf16.mxu0 0
    %638 = vmatpush1.bf16.msra.mxu0 0
    %639 = vmatprep.subr.bf16.mxu0 0
    %640 = vmatpush1.bf16.msra.mxu0 0
    %641 = vmatprep.subr.bf16.mxu0 0
    %642 = vmatpush1.bf16.msra.mxu0 0
    %643 = vmatprep.subr.bf16.mxu0 0
    %644 = vmatpush1.bf16.msra.mxu0 0
    %645 = vmatprep.subr.bf16.mxu0 0
    %646 = vmatpush1.bf16.msra.mxu0 0
    %647 = vmatprep.mubr.bf16.mxu0 0
    %648 = vmatmul.mubr.bf16.gmra.mrb[0].mxu0 %v455
    %v649 = vpop.f32.mrb[0].mxu0
    %v650 = vadd.f32 %v562, %v649
    %v651 = vpop.f32.mrb[0].mxu0
    %v652 = vpop.f32.mrb[0].mxu0
    %v653 = vpop.f32.mrb[0].mxu0
    %654 = vdwg.mxu0
    %v655 = vld [vmem:[#allocation3 + $0x2] sm:$0xf]
    %v656 = vld [vmem:[#allocation3 + $0xa] sm:$0xf]
    %v657 = vld [vmem:[#allocation10 + $0x140] sm:$0xf]
    %v658 = vld [vmem:[#allocation10 + $0x144] sm:$0xf]
    %v659 = vld [vmem:[#allocation10 + $0x148] sm:$0xf]
    %v660 = vld [vmem:[#allocation10 + $0x14c] sm:$0xf]
    %v661 = vld [vmem:[#allocation10 + $0x150] sm:$0xf]
    %v662 = vld [vmem:[#allocation10 + $0x154] sm:$0xf]
    %v663 = vld [vmem:[#allocation10 + $0x158] sm:$0xf]
    %v664 = vld [vmem:[#allocation10 + $0x15c] sm:$0xf]
    %v665 = vld [vmem:[#allocation10 + $0x160] sm:$0xf]
    %v666 = vld [vmem:[#allocation10 + $0x164] sm:$0xf]
    %v667 = vld [vmem:[#allocation10 + $0x168] sm:$0xf]
    %v668 = vld [vmem:[#allocation10 + $0x16c] sm:$0xf]
    %v669 = vld [vmem:[#allocation10 + $0x170] sm:$0xf]
    %v670 = vld [vmem:[#allocation10 + $0x174] sm:$0xf]
    %v671 = vld [vmem:[#allocation10 + $0x178] sm:$0xf]
    %v672 = vld [vmem:[#allocation10 + $0x17c] sm:$0xf]
    %v675 = vcombine.low %v655, %v656
    %v677 = vpack.c.bf16 %v675, %v675
    %v694 = vunpack.c.l.b16 %v657
    %v695 = vunpack.c.l.b16 %v658
    %v696 = vunpack.c.l.b16 %v659
    %v697 = vunpack.c.l.b16 %v660
    %v698 = vunpack.c.l.b16 %v661
    %v699 = vunpack.c.l.b16 %v662
    %v700 = vunpack.c.l.b16 %v663
    %v701 = vunpack.c.l.b16 %v664
    %v702 = vunpack.c.l.b16 %v665
    %v703 = vunpack.c.l.b16 %v666
    %v704 = vunpack.c.l.b16 %v667
    %v705 = vunpack.c.l.b16 %v668
    %v706 = vunpack.c.l.b16 %v669
    %v707 = vunpack.c.l.b16 %v670
    %v708 = vunpack.c.l.b16 %v671
    %v709 = vunpack.c.l.b16 %v672
    %v710 = vpack.c.b16 %v695, %v694
    %v711 = vpack.c.b16 %v697, %v696
    %v712 = vpack.c.b16 %v699, %v698
    %v713 = vpack.c.b16 %v701, %v700
    %v714 = vpack.c.b16 %v703, %v702
    %v715 = vpack.c.b16 %v705, %v704
    %v716 = vpack.c.b16 %v707, %v706
    %v717 = vpack.c.b16 %v709, %v708
    %726 = vmatprep.subr.bf16.mxu0 0
    %727 = vmatpush1.bf16.msra.mxu0 %v710
    %728 = vmatprep.subr.bf16.mxu0 0
    %729 = vmatpush1.bf16.msra.mxu0 %v711
    %730 = vmatprep.subr.bf16.mxu0 0
    %731 = vmatpush1.bf16.msra.mxu0 %v712
    %732 = vmatprep.subr.bf16.mxu0 0
    %733 = vmatpush1.bf16.msra.mxu0 %v713
    %734 = vmatprep.subr.bf16.mxu0 0
    %735 = vmatpush1.bf16.msra.mxu0 %v714
    %736 = vmatprep.subr.bf16.mxu0 0
    %737 = vmatpush1.bf16.msra.mxu0 %v715
    %738 = vmatprep.subr.bf16.mxu0 0
    %739 = vmatpush1.bf16.msra.mxu0 %v716
    %740 = vmatprep.subr.bf16.mxu0 0
    %741 = vmatpush1.bf16.msra.mxu0 %v717
    %742 = vmatprep.subr.bf16.mxu0 0
    %743 = vmatpush1.bf16.msra.mxu0 0
    %744 = vmatprep.subr.bf16.mxu0 0
    %745 = vmatpush1.bf16.msra.mxu0 0
    %746 = vmatprep.subr.bf16.mxu0 0
    %747 = vmatpush1.bf16.msra.mxu0 0
    %748 = vmatprep.subr.bf16.mxu0 0
    %749 = vmatpush1.bf16.msra.mxu0 0
    %750 = vmatprep.subr.bf16.mxu0 0
    %751 = vmatpush1.bf16.msra.mxu0 0
    %752 = vmatprep.subr.bf16.mxu0 0
    %753 = vmatpush1.bf16.msra.mxu0 0
    %754 = vmatprep.subr.bf16.mxu0 0
    %755 = vmatpush1.bf16.msra.mxu0 0
    %756 = vmatprep.subr.bf16.mxu0 0
    %757 = vmatpush1.bf16.msra.mxu0 0
    %758 = vmatprep.mubr.bf16.mxu0 0
    %759 = vmatmul.mubr.bf16.gmra.mrb[0].mxu0 %v677
    %v760 = vpop.f32.mrb[0].mxu0
    %v761 = vadd.f32 0.0, %v760
    %v762 = vpop.f32.mrb[0].mxu0
    %v763 = vpop.f32.mrb[0].mxu0
    %v764 = vpop.f32.mrb[0].mxu0
    %765 = vdwg.mxu0
    %v766 = vadd.f32 %v650, %v761
    %v767 = vld [vmem:[%s4 + $0x1] sm:$0x1]
    %v768 = vlaneseq
    %v769 = vshrl.u32 %v768, 7
    %v770 = vsub.s32 0, %v769
    %v771 = vrot.slane %v767, %v770
    %v772 = vadd.f32 %v766, %v771
    %v773 = vmax.f32 %v772, 0.0
    %v774 = vpack.c.bf16 %v773, %v773
    %v775 = vld [vmem:[%s4 + $0x2] sm:$0x1]
    %v776 = vld [vmem:[#allocation10 + $0x180] sm:$0xf]
    %v777 = vld [vmem:[#allocation10 + $0x184] sm:$0xf]
    %v778 = vld [vmem:[#allocation10 + $0x188] sm:$0xf]
    %v779 = vld [vmem:[#allocation10 + $0x18c] sm:$0xf]
    %v780 = vld [vmem:[#allocation10 + $0x190] sm:$0xf]
    %v781 = vld [vmem:[#allocation10 + $0x194] sm:$0xf]
    %v782 = vld [vmem:[#allocation10 + $0x198] sm:$0xf]
    %v783 = vld [vmem:[#allocation10 + $0x19c] sm:$0xf]
    %v784 = vld [vmem:[#allocation10 + $0x1a0] sm:$0xf]
    %v785 = vld [vmem:[#allocation10 + $0x1a4] sm:$0xf]
    %v786 = vld [vmem:[#allocation10 + $0x1a8] sm:$0xf]
    %v787 = vld [vmem:[#allocation10 + $0x1ac] sm:$0xf]
    %v788 = vld [vmem:[#allocation10 + $0x1b0] sm:$0xf]
    %v789 = vld [vmem:[#allocation10 + $0x1b4] sm:$0xf]
    %v790 = vld [vmem:[#allocation10 + $0x1b8] sm:$0xf]
    %v791 = vld [vmem:[#allocation10 + $0x1bc] sm:$0xf]
    %v792 = vlaneseq
    %v793 = vshrl.u32 %v792, 7
    %v794 = vsub.s32 0, %v793
    %v795 = vrot.slane %v775, %v794
    %v812 = vunpack.c.l.b16 %v776
    %v813 = vunpack.c.l.b16 %v777
    %v814 = vunpack.c.l.b16 %v778
    %v815 = vunpack.c.l.b16 %v779
    %v816 = vunpack.c.l.b16 %v780
    %v817 = vunpack.c.l.b16 %v781
    %v818 = vunpack.c.l.b16 %v782
    %v819 = vunpack.c.l.b16 %v783
    %v820 = vunpack.c.l.b16 %v784
    %v821 = vunpack.c.l.b16 %v785
    %v822 = vunpack.c.l.b16 %v786
    %v823 = vunpack.c.l.b16 %v787
    %v824 = vunpack.c.l.b16 %v788
    %v825 = vunpack.c.l.b16 %v789
    %v826 = vunpack.c.l.b16 %v790
    %v827 = vunpack.c.l.b16 %v791
    %v828 = vpack.c.b16 %v813, %v812
    %v829 = vpack.c.b16 %v815, %v814
    %v830 = vpack.c.b16 %v817, %v816
    %v831 = vpack.c.b16 %v819, %v818
    %v832 = vpack.c.b16 %v821, %v820
    %v833 = vpack.c.b16 %v823, %v822
    %v834 = vpack.c.b16 %v825, %v824
    %v835 = vpack.c.b16 %v827, %v826
    %844 = vmatprep.subr.bf16.mxu0 0
    %845 = vmatpush1.bf16.msra.mxu0 %v828
    %846 = vmatprep.subr.bf16.mxu0 0
    %847 = vmatpush1.bf16.msra.mxu0 %v829
    %848 = vmatprep.subr.bf16.mxu0 0
    %849 = vmatpush1.bf16.msra.mxu0 %v830
    %850 = vmatprep.subr.bf16.mxu0 0
    %851 = vmatpush1.bf16.msra.mxu0 %v831
    %852 = vmatprep.subr.bf16.mxu0 0
    %853 = vmatpush1.bf16.msra.mxu0 %v832
    %854 = vmatprep.subr.bf16.mxu0 0
    %855 = vmatpush1.bf16.msra.mxu0 %v833
    %856 = vmatprep.subr.bf16.mxu0 0
    %857 = vmatpush1.bf16.msra.mxu0 %v834
    %858 = vmatprep.subr.bf16.mxu0 0
    %859 = vmatpush1.bf16.msra.mxu0 %v835
    %860 = vmatprep.subr.bf16.mxu0 0
    %861 = vmatpush1.bf16.msra.mxu0 0
    %862 = vmatprep.subr.bf16.mxu0 0
    %863 = vmatpush1.bf16.msra.mxu0 0
    %864 = vmatprep.subr.bf16.mxu0 0
    %865 = vmatpush1.bf16.msra.mxu0 0
    %866 = vmatprep.subr.bf16.mxu0 0
    %867 = vmatpush1.bf16.msra.mxu0 0
    %868 = vmatprep.subr.bf16.mxu0 0
    %869 = vmatpush1.bf16.msra.mxu0 0
    %870 = vmatprep.subr.bf16.mxu0 0
    %871 = vmatpush1.bf16.msra.mxu0 0
    %872 = vmatprep.subr.bf16.mxu0 0
    %873 = vmatpush1.bf16.msra.mxu0 0
    %874 = vmatprep.subr.bf16.mxu0 0
    %875 = vmatpush1.bf16.msra.mxu0 0
    %876 = vmatprep.mubr.bf16.mxu0 0
    %877 = vmatmul.mubr.bf16.gmra.mrb[0].mxu0 %v774
    %v878 = vpop.f32.mrb[0].mxu0
    %v879 = vadd.f32 %v795, %v878
    %v880 = vpop.f32.mrb[0].mxu0
    %v881 = vpop.f32.mrb[0].mxu0
    %v882 = vpop.f32.mrb[0].mxu0
    %883 = vdwg.mxu0
    %v884 = vmax.f32 %v879, 0.0
    %v885 = vld [vmem:[#allocation10 + $0x1c0] sm:$0xf]
    %v886 = vld [vmem:[#allocation10 + $0x1c4] sm:$0xf]
    %v887 = vld [vmem:[#allocation10 + $0x1c8] sm:$0xf]
    %v888 = vld [vmem:[#allocation10 + $0x1cc] sm:$0xf]
    %v889 = vld [vmem:[#allocation10 + $0x1d0] sm:$0xf]
    %v890 = vld [vmem:[#allocation10 + $0x1d4] sm:$0xf]
    %v891 = vld [vmem:[#allocation10 + $0x1d8] sm:$0xf]
    %v892 = vld [vmem:[#allocation10 + $0x1dc] sm:$0xf]
    %v893 = vld [vmem:[#allocation10 + $0x1e0] sm:$0xf]
    %v894 = vld [vmem:[#allocation10 + $0x1e4] sm:$0xf]
    %v895 = vld [vmem:[#allocation10 + $0x1e8] sm:$0xf]
    %v896 = vld [vmem:[#allocation10 + $0x1ec] sm:$0xf]
    %v897 = vld [vmem:[#allocation10 + $0x1f0] sm:$0xf]
    %v898 = vld [vmem:[#allocation10 + $0x1f4] sm:$0xf]
    %v899 = vld [vmem:[#allocation10 + $0x1f8] sm:$0xf]
    %v900 = vld [vmem:[#allocation10 + $0x1fc] sm:$0xf]
    %v917 = vunpack.c.l.b16 %v885
    %v918 = vunpack.c.l.b16 %v886
    %v919 = vunpack.c.l.b16 %v887
    %v920 = vunpack.c.l.b16 %v888
    %v921 = vunpack.c.l.b16 %v889
    %v922 = vunpack.c.l.b16 %v890
    %v923 = vunpack.c.l.b16 %v891
    %v924 = vunpack.c.l.b16 %v892
    %v925 = vunpack.c.l.b16 %v893
    %v926 = vunpack.c.l.b16 %v894
    %v927 = vunpack.c.l.b16 %v895
    %v928 = vunpack.c.l.b16 %v896
    %v929 = vunpack.c.l.b16 %v897
    %v930 = vunpack.c.l.b16 %v898
    %v931 = vunpack.c.l.b16 %v899
    %v932 = vunpack.c.l.b16 %v900
    %v933 = vpack.c.b16 %v918, %v917
    %v934 = vpack.c.b16 %v920, %v919
    %v935 = vpack.c.b16 %v922, %v921
    %v936 = vpack.c.b16 %v924, %v923
    %v937 = vpack.c.b16 %v926, %v925
    %v938 = vpack.c.b16 %v928, %v927
    %v939 = vpack.c.b16 %v930, %v929
    %v940 = vpack.c.b16 %v932, %v931
    %949 = vmatprep.subr.bf16.mxu0 0
    %950 = vmatpush1.bf16.msra.mxu0 %v933
    %951 = vmatprep.subr.bf16.mxu0 0
    %952 = vmatpush1.bf16.msra.mxu0 %v934
    %953 = vmatprep.subr.bf16.mxu0 0
    %954 = vmatpush1.bf16.msra.mxu0 %v935
    %955 = vmatprep.subr.bf16.mxu0 0
    %956 = vmatpush1.bf16.msra.mxu0 %v936
    %957 = vmatprep.subr.bf16.mxu0 0
    %958 = vmatpush1.bf16.msra.mxu0 %v937
    %959 = vmatprep.subr.bf16.mxu0 0
    %960 = vmatpush1.bf16.msra.mxu0 %v938
    %961 = vmatprep.subr.bf16.mxu0 0
    %962 = vmatpush1.bf16.msra.mxu0 %v939
    %963 = vmatprep.subr.bf16.mxu0 0
    %964 = vmatpush1.bf16.msra.mxu0 %v940
    %965 = vmatprep.subr.bf16.mxu0 0
    %966 = vmatpush1.bf16.msra.mxu0 0
    %967 = vmatprep.subr.bf16.mxu0 0
    %968 = vmatpush1.bf16.msra.mxu0 0
    %969 = vmatprep.subr.bf16.mxu0 0
    %970 = vmatpush1.bf16.msra.mxu0 0
    %971 = vmatprep.subr.bf16.mxu0 0
    %972 = vmatpush1.bf16.msra.mxu0 0
    %973 = vmatprep.subr.bf16.mxu0 0
    %974 = vmatpush1.bf16.msra.mxu0 0
    %975 = vmatprep.subr.bf16.mxu0 0
    %976 = vmatpush1.bf16.msra.mxu0 0
    %977 = vmatprep.subr.bf16.mxu0 0
    %978 = vmatpush1.bf16.msra.mxu0 0
    %979 = vmatprep.subr.bf16.mxu0 0
    %980 = vmatpush1.bf16.msra.mxu0 0
    %981 = vmatprep.mubr.bf16.mxu0 0
    %982 = vmatmul.mubr.bf16.gmra.mrb[0].mxu0 %v774
    %v983 = vpop.f32.mrb[0].mxu0
    %v984 = vadd.f32 %v795, %v983
    %v985 = vpop.f32.mrb[0].mxu0
    %v986 = vpop.f32.mrb[0].mxu0
    %v987 = vpop.f32.mrb[0].mxu0
    %988 = vdwg.mxu0
    %v989 = vmax.f32 %v984, 0.0
    %v992 = vcombine.low %v884, %v989
    %v993 = vcombine.high %v884, %v989
    %v997 = vunpack.c.l.s4 1935823168
    %v998 = vunpack.c.0.s8 %v997
    %v999 = vlaneseq
    %v1000 = vshrl.u32 %v999, 7
    %v1001 = vsub.s32 %v998, %v1000
    %v1002 = vrot.slane %v992, %v1001
    %v1004 = vunpack.c.l.s4 1935823168
    %v1005 = vunpack.c.0.s8 %v1004
    %v1006 = vlaneseq
    %v1007 = vshrl.u32 %v1006, 7
    %v1008 = vsub.s32 %v1005, %v1007
    %v1009 = vrot.slane %v993, %v1008
    %1010 = vst [vmem:[#allocation5 + $0x1] sm:$0xff] %v1002
    %1011 = vst [vmem:[#allocation5 + $0x11] sm:$0xff] %v1009
    %v1012 = vld [vmem:[#allocation4] sm:$0xff]
    %v1013 = vld [vmem:[#allocation4 + $0x10] sm:$0xff]
    %v1014 = vld [vmem:[#allocation10 + $0x200] sm:$0xf]
    %v1015 = vld [vmem:[#allocation10 + $0x204] sm:$0xf]
    %v1016 = vld [vmem:[#allocation10 + $0x208] sm:$0xf]
    %v1017 = vld [vmem:[#allocation10 + $0x20c] sm:$0xf]
    %v1018 = vld [vmem:[#allocation10 + $0x210] sm:$0xf]
    %v1019 = vld [vmem:[#allocation10 + $0x214] sm:$0xf]
    %v1020 = vld [vmem:[#allocation10 + $0x218] sm:$0xf]
    %v1021 = vld [vmem:[#allocation10 + $0x21c] sm:$0xf]
    %v1022 = vld [vmem:[#allocation10 + $0x220] sm:$0xf]
    %v1023 = vld [vmem:[#allocation10 + $0x224] sm:$0xf]
    %v1024 = vld [vmem:[#allocation10 + $0x228] sm:$0xf]
    %v1025 = vld [vmem:[#allocation10 + $0x22c] sm:$0xf]
    %v1026 = vld [vmem:[#allocation10 + $0x230] sm:$0xf]
    %v1027 = vld [vmem:[#allocation10 + $0x234] sm:$0xf]
    %v1028 = vld [vmem:[#allocation10 + $0x238] sm:$0xf]
    %v1029 = vld [vmem:[#allocation10 + $0x23c] sm:$0xf]
    %v1030 = vpack.c.bf16 %v1013, %v1012
    %v1031 = vld [vmem:[#allocation4 + $0x1] sm:$0xff]
    %v1032 = vld [vmem:[#allocation4 + $0x11] sm:$0xff]
    %v1033 = vld [vmem:[#allocation10 + $0x240] sm:$0xf]
    %v1034 = vld [vmem:[#allocation10 + $0x244] sm:$0xf]
    %v1035 = vld [vmem:[#allocation10 + $0x248] sm:$0xf]
    %v1036 = vld [vmem:[#allocation10 + $0x24c] sm:$0xf]
    %v1037 = vld [vmem:[#allocation10 + $0x250] sm:$0xf]
    %v1038 = vld [vmem:[#allocation10 + $0x254] sm:$0xf]
    %v1039 = vld [vmem:[#allocation10 + $0x258] sm:$0xf]
    %v1040 = vld [vmem:[#allocation10 + $0x25c] sm:$0xf]
    %v1041 = vld [vmem:[#allocation10 + $0x260] sm:$0xf]
    %v1042 = vld [vmem:[#allocation10 + $0x264] sm:$0xf]
    %v1043 = vld [vmem:[#allocation10 + $0x268] sm:$0xf]
    %v1044 = vld [vmem:[#allocation10 + $0x26c] sm:$0xf]
    %v1045 = vld [vmem:[#allocation10 + $0x270] sm:$0xf]
    %v1046 = vld [vmem:[#allocation10 + $0x274] sm:$0xf]
    %v1047 = vld [vmem:[#allocation10 + $0x278] sm:$0xf]
    %v1048 = vld [vmem:[#allocation10 + $0x27c] sm:$0xf]
    %v1049 = vpack.c.bf16 %v1032, %v1031
    %v1066 = vunpack.c.l.b16 %v1033
    %v1067 = vunpack.c.l.b16 %v1034
    %v1068 = vunpack.c.l.b16 %v1035
    %v1069 = vunpack.c.l.b16 %v1036
    %v1070 = vunpack.c.l.b16 %v1037
    %v1071 = vunpack.c.l.b16 %v1038
    %v1072 = vunpack.c.l.b16 %v1039
    %v1073 = vunpack.c.l.b16 %v1040
    %v1074 = vunpack.c.l.b16 %v1041
    %v1075 = vunpack.c.l.b16 %v1042
    %v1076 = vunpack.c.l.b16 %v1043
    %v1077 = vunpack.c.l.b16 %v1044
    %v1078 = vunpack.c.l.b16 %v1045
    %v1079 = vunpack.c.l.b16 %v1046
    %v1080 = vunpack.c.l.b16 %v1047
    %v1081 = vunpack.c.l.b16 %v1048
    %v1082 = vpack.c.b16 %v1067, %v1066
    %v1083 = vpack.c.b16 %v1069, %v1068
    %v1084 = vpack.c.b16 %v1071, %v1070
    %v1085 = vpack.c.b16 %v1073, %v1072
    %v1086 = vpack.c.b16 %v1075, %v1074
    %v1087 = vpack.c.b16 %v1077, %v1076
    %v1088 = vpack.c.b16 %v1079, %v1078
    %v1089 = vpack.c.b16 %v1081, %v1080
    %1098 = vmatprep.subr.bf16.mxu0 0
    %1099 = vmatpush1.bf16.msra.mxu0 %v1082
    %1100 = vmatprep.subr.bf16.mxu0 0
    %1101 = vmatpush1.bf16.msra.mxu0 %v1083
    %1102 = vmatprep.subr.bf16.mxu0 0
    %1103 = vmatpush1.bf16.msra.mxu0 %v1084
    %1104 = vmatprep.subr.bf16.mxu0 0
    %1105 = vmatpush1.bf16.msra.mxu0 %v1085
    %1106 = vmatprep.subr.bf16.mxu0 0
    %1107 = vmatpush1.bf16.msra.mxu0 %v1086
    %1108 = vmatprep.subr.bf16.mxu0 0
    %1109 = vmatpush1.bf16.msra.mxu0 %v1087
    %1110 = vmatprep.subr.bf16.mxu0 0
    %1111 = vmatpush1.bf16.msra.mxu0 %v1088
    %1112 = vmatprep.subr.bf16.mxu0 0
    %1113 = vmatpush1.bf16.msra.mxu0 %v1089
    %1114 = vmatprep.subr.bf16.mxu0 0
    %1115 = vmatpush1.bf16.msra.mxu0 0
    %1116 = vmatprep.subr.bf16.mxu0 0
    %1117 = vmatpush1.bf16.msra.mxu0 0
    %1118 = vmatprep.subr.bf16.mxu0 0
    %1119 = vmatpush1.bf16.msra.mxu0 0
    %1120 = vmatprep.subr.bf16.mxu0 0
    %1121 = vmatpush1.bf16.msra.mxu0 0
    %1122 = vmatprep.subr.bf16.mxu0 0
    %1123 = vmatpush1.bf16.msra.mxu0 0
    %1124 = vmatprep.subr.bf16.mxu0 0
    %1125 = vmatpush1.bf16.msra.mxu0 0
    %1126 = vmatprep.subr.bf16.mxu0 0
    %1127 = vmatpush1.bf16.msra.mxu0 0
    %1128 = vmatprep.subr.bf16.mxu0 0
    %1129 = vmatpush1.bf16.msra.mxu0 0
    %1130 = vmatprep.mubr.bf16.mxu0 0
    %1131 = vmatmul.mubr.bf16.gmra.mrb[0].mxu0 %v1049
    %v1132 = vpop.f32.mrb[0].mxu0
    %v1133 = vadd.f32 0.0, %v1132
    %v1134 = vpop.f32.mrb[0].mxu0
    %v1135 = vpop.f32.mrb[0].mxu0
    %v1136 = vadd.f32 0.0, %v1135
    %v1137 = vpop.f32.mrb[0].mxu0
    %1138 = vdwg.mxu0
    %v1155 = vunpack.c.l.b16 %v1014
    %v1156 = vunpack.c.l.b16 %v1015
    %v1157 = vunpack.c.l.b16 %v1016
    %v1158 = vunpack.c.l.b16 %v1017
    %v1159 = vunpack.c.l.b16 %v1018
    %v1160 = vunpack.c.l.b16 %v1019
    %v1161 = vunpack.c.l.b16 %v1020
    %v1162 = vunpack.c.l.b16 %v1021
    %v1163 = vunpack.c.l.b16 %v1022
    %v1164 = vunpack.c.l.b16 %v1023
    %v1165 = vunpack.c.l.b16 %v1024
    %v1166 = vunpack.c.l.b16 %v1025
    %v1167 = vunpack.c.l.b16 %v1026
    %v1168 = vunpack.c.l.b16 %v1027
    %v1169 = vunpack.c.l.b16 %v1028
    %v1170 = vunpack.c.l.b16 %v1029
    %v1171 = vpack.c.b16 %v1156, %v1155
    %v1172 = vpack.c.b16 %v1158, %v1157
    %v1173 = vpack.c.b16 %v1160, %v1159
    %v1174 = vpack.c.b16 %v1162, %v1161
    %v1175 = vpack.c.b16 %v1164, %v1163
    %v1176 = vpack.c.b16 %v1166, %v1165
    %v1177 = vpack.c.b16 %v1168, %v1167
    %v1178 = vpack.c.b16 %v1170, %v1169
    %1187 = vmatprep.subr.bf16.mxu0 0
    %1188 = vmatpush1.bf16.msra.mxu0 %v1171
    %1189 = vmatprep.subr.bf16.mxu0 0
    %1190 = vmatpush1.bf16.msra.mxu0 %v1172
    %1191 = vmatprep.subr.bf16.mxu0 0
    %1192 = vmatpush1.bf16.msra.mxu0 %v1173
    %1193 = vmatprep.subr.bf16.mxu0 0
    %1194 = vmatpush1.bf16.msra.mxu0 %v1174
    %1195 = vmatprep.subr.bf16.mxu0 0
    %1196 = vmatpush1.bf16.msra.mxu0 %v1175
    %1197 = vmatprep.subr.bf16.mxu0 0
    %1198 = vmatpush1.bf16.msra.mxu0 %v1176
    %1199 = vmatprep.subr.bf16.mxu0 0
    %1200 = vmatpush1.bf16.msra.mxu0 %v1177
    %1201 = vmatprep.subr.bf16.mxu0 0
    %1202 = vmatpush1.bf16.msra.mxu0 %v1178
    %1203 = vmatprep.subr.bf16.mxu0 0
    %1204 = vmatpush1.bf16.msra.mxu0 0
    %1205 = vmatprep.subr.bf16.mxu0 0
    %1206 = vmatpush1.bf16.msra.mxu0 0
    %1207 = vmatprep.subr.bf16.mxu0 0
    %1208 = vmatpush1.bf16.msra.mxu0 0
    %1209 = vmatprep.subr.bf16.mxu0 0
    %1210 = vmatpush1.bf16.msra.mxu0 0
    %1211 = vmatprep.subr.bf16.mxu0 0
    %1212 = vmatpush1.bf16.msra.mxu0 0
    %1213 = vmatprep.subr.bf16.mxu0 0
    %1214 = vmatpush1.bf16.msra.mxu0 0
    %1215 = vmatprep.subr.bf16.mxu0 0
    %1216 = vmatpush1.bf16.msra.mxu0 0
    %1217 = vmatprep.subr.bf16.mxu0 0
    %1218 = vmatpush1.bf16.msra.mxu0 0
    %1219 = vmatprep.mubr.bf16.mxu0 0
    %1220 = vmatmul.mubr.bf16.gmra.mrb[0].mxu0 %v1030
    %v1221 = vpop.f32.mrb[0].mxu0
    %v1222 = vadd.f32 %v1133, %v1221
    %v1223 = vpop.f32.mrb[0].mxu0
    %v1224 = vpop.f32.mrb[0].mxu0
    %v1225 = vadd.f32 %v1136, %v1224
    %v1226 = vpop.f32.mrb[0].mxu0
    %1227 = vdwg.mxu0
    %v1228 = vld [vmem:[#allocation4 + $0x2] sm:$0xff]
    %v1229 = vld [vmem:[#allocation4 + $0x12] sm:$0xff]
    %v1230 = vld [vmem:[#allocation10 + $0x280] sm:$0xf]
    %v1231 = vld [vmem:[#allocation10 + $0x284] sm:$0xf]
    %v1232 = vld [vmem:[#allocation10 + $0x288] sm:$0xf]
    %v1233 = vld [vmem:[#allocation10 + $0x28c] sm:$0xf]
    %v1234 = vld [vmem:[#allocation10 + $0x290] sm:$0xf]
    %v1235 = vld [vmem:[#allocation10 + $0x294] sm:$0xf]
    %v1236 = vld [vmem:[#allocation10 + $0x298] sm:$0xf]
    %v1237 = vld [vmem:[#allocation10 + $0x29c] sm:$0xf]
    %v1238 = vld [vmem:[#allocation10 + $0x2a0] sm:$0xf]
    %v1239 = vld [vmem:[#allocation10 + $0x2a4] sm:$0xf]
    %v1240 = vld [vmem:[#allocation10 + $0x2a8] sm:$0xf]
    %v1241 = vld [vmem:[#allocation10 + $0x2ac] sm:$0xf]
    %v1242 = vld [vmem:[#allocation10 + $0x2b0] sm:$0xf]
    %v1243 = vld [vmem:[#allocation10 + $0x2b4] sm:$0xf]
    %v1244 = vld [vmem:[#allocation10 + $0x2b8] sm:$0xf]
    %v1245 = vld [vmem:[#allocation10 + $0x2bc] sm:$0xf]
    %v1246 = vpack.c.bf16 %v1229, %v1228
    %v1263 = vunpack.c.l.b16 %v1230
    %v1264 = vunpack.c.l.b16 %v1231
    %v1265 = vunpack.c.l.b16 %v1232
    %v1266 = vunpack.c.l.b16 %v1233
    %v1267 = vunpack.c.l.b16 %v1234
    %v1268 = vunpack.c.l.b16 %v1235
    %v1269 = vunpack.c.l.b16 %v1236
    %v1270 = vunpack.c.l.b16 %v1237
    %v1271 = vunpack.c.l.b16 %v1238
    %v1272 = vunpack.c.l.b16 %v1239
    %v1273 = vunpack.c.l.b16 %v1240
    %v1274 = vunpack.c.l.b16 %v1241
    %v1275 = vunpack.c.l.b16 %v1242
    %v1276 = vunpack.c.l.b16 %v1243
    %v1277 = vunpack.c.l.b16 %v1244
    %v1278 = vunpack.c.l.b16 %v1245
    %v1279 = vpack.c.b16 %v1264, %v1263
    %v1280 = vpack.c.b16 %v1266, %v1265
    %v1281 = vpack.c.b16 %v1268, %v1267
    %v1282 = vpack.c.b16 %v1270, %v1269
    %v1283 = vpack.c.b16 %v1272, %v1271
    %v1284 = vpack.c.b16 %v1274, %v1273
    %v1285 = vpack.c.b16 %v1276, %v1275
    %v1286 = vpack.c.b16 %v1278, %v1277
    %1295 = vmatprep.subr.bf16.mxu0 0
    %1296 = vmatpush1.bf16.msra.mxu0 %v1279
    %1297 = vmatprep.subr.bf16.mxu0 0
    %1298 = vmatpush1.bf16.msra.mxu0 %v1280
    %1299 = vmatprep.subr.bf16.mxu0 0
    %1300 = vmatpush1.bf16.msra.mxu0 %v1281
    %1301 = vmatprep.subr.bf16.mxu0 0
    %1302 = vmatpush1.bf16.msra.mxu0 %v1282
    %1303 = vmatprep.subr.bf16.mxu0 0
    %1304 = vmatpush1.bf16.msra.mxu0 %v1283
    %1305 = vmatprep.subr.bf16.mxu0 0
    %1306 = vmatpush1.bf16.msra.mxu0 %v1284
    %1307 = vmatprep.subr.bf16.mxu0 0
    %1308 = vmatpush1.bf16.msra.mxu0 %v1285
    %1309 = vmatprep.subr.bf16.mxu0 0
    %1310 = vmatpush1.bf16.msra.mxu0 %v1286
    %1311 = vmatprep.subr.bf16.mxu0 0
    %1312 = vmatpush1.bf16.msra.mxu0 0
    %1313 = vmatprep.subr.bf16.mxu0 0
    %1314 = vmatpush1.bf16.msra.mxu0 0
    %1315 = vmatprep.subr.bf16.mxu0 0
    %1316 = vmatpush1.bf16.msra.mxu0 0
    %1317 = vmatprep.subr.bf16.mxu0 0
    %1318 = vmatpush1.bf16.msra.mxu0 0
    %1319 = vmatprep.subr.bf16.mxu0 0
    %1320 = vmatpush1.bf16.msra.mxu0 0
    %1321 = vmatprep.subr.bf16.mxu0 0
    %1322 = vmatpush1.bf16.msra.mxu0 0
    %1323 = vmatprep.subr.bf16.mxu0 0
    %1324 = vmatpush1.bf16.msra.mxu0 0
    %1325 = vmatprep.subr.bf16.mxu0 0
    %1326 = vmatpush1.bf16.msra.mxu0 0
    %1327 = vmatprep.mubr.bf16.mxu0 0
    %1328 = vmatmul.mubr.bf16.gmra.mrb[0].mxu0 %v1246
    %v1329 = vpop.f32.mrb[0].mxu0
    %v1330 = vadd.f32 0.0, %v1329
    %v1331 = vpop.f32.mrb[0].mxu0
    %v1332 = vpop.f32.mrb[0].mxu0
    %v1333 = vadd.f32 0.0, %v1332
    %v1334 = vpop.f32.mrb[0].mxu0
    %1335 = vdwg.mxu0
    %v1336 = vadd.f32 %v1222, %v1330
    %v1337 = vadd.f32 %v1225, %v1333
    %v1338 = vld [vmem:[#allocation5] sm:$0xff]
    %v1339 = vld [vmem:[#allocation5 + $0x10] sm:$0xff]
    %v1340 = vld [vmem:[#allocation10 + $0x2c0] sm:$0xf]
    %v1341 = vld [vmem:[#allocation10 + $0x2c4] sm:$0xf]
    %v1342 = vld [vmem:[#allocation10 + $0x2c8] sm:$0xf]
    %v1343 = vld [vmem:[#allocation10 + $0x2cc] sm:$0xf]
    %v1344 = vld [vmem:[#allocation10 + $0x2d0] sm:$0xf]
    %v1345 = vld [vmem:[#allocation10 + $0x2d4] sm:$0xf]
    %v1346 = vld [vmem:[#allocation10 + $0x2d8] sm:$0xf]
    %v1347 = vld [vmem:[#allocation10 + $0x2dc] sm:$0xf]
    %v1348 = vld [vmem:[#allocation10 + $0x2e0] sm:$0xf]
    %v1349 = vld [vmem:[#allocation10 + $0x2e4] sm:$0xf]
    %v1350 = vld [vmem:[#allocation10 + $0x2e8] sm:$0xf]
    %v1351 = vld [vmem:[#allocation10 + $0x2ec] sm:$0xf]
    %v1352 = vld [vmem:[#allocation10 + $0x2f0] sm:$0xf]
    %v1353 = vld [vmem:[#allocation10 + $0x2f4] sm:$0xf]
    %v1354 = vld [vmem:[#allocation10 + $0x2f8] sm:$0xf]
    %v1355 = vld [vmem:[#allocation10 + $0x2fc] sm:$0xf]
    %v1356 = vpack.c.bf16 %v1339, %v1338
    %v1373 = vunpack.c.l.b16 %v1340
    %v1374 = vunpack.c.l.b16 %v1341
    %v1375 = vunpack.c.l.b16 %v1342
    %v1376 = vunpack.c.l.b16 %v1343
    %v1377 = vunpack.c.l.b16 %v1344
    %v1378 = vunpack.c.l.b16 %v1345
    %v1379 = vunpack.c.l.b16 %v1346
    %v1380 = vunpack.c.l.b16 %v1347
    %v1381 = vunpack.c.l.b16 %v1348
    %v1382 = vunpack.c.l.b16 %v1349
    %v1383 = vunpack.c.l.b16 %v1350
    %v1384 = vunpack.c.l.b16 %v1351
    %v1385 = vunpack.c.l.b16 %v1352
    %v1386 = vunpack.c.l.b16 %v1353
    %v1387 = vunpack.c.l.b16 %v1354
    %v1388 = vunpack.c.l.b16 %v1355
    %v1389 = vpack.c.b16 %v1374, %v1373
    %v1390 = vpack.c.b16 %v1376, %v1375
    %v1391 = vpack.c.b16 %v1378, %v1377
    %v1392 = vpack.c.b16 %v1380, %v1379
    %v1393 = vpack.c.b16 %v1382, %v1381
    %v1394 = vpack.c.b16 %v1384, %v1383
    %v1395 = vpack.c.b16 %v1386, %v1385
    %v1396 = vpack.c.b16 %v1388, %v1387
    %1405 = vmatprep.subr.bf16.mxu0 0
    %1406 = vmatpush1.bf16.msra.mxu0 %v1389
    %1407 = vmatprep.subr.bf16.mxu0 0
    %1408 = vmatpush1.bf16.msra.mxu0 %v1390
    %1409 = vmatprep.subr.bf16.mxu0 0
    %1410 = vmatpush1.bf16.msra.mxu0 %v1391
    %1411 = vmatprep.subr.bf16.mxu0 0
    %1412 = vmatpush1.bf16.msra.mxu0 %v1392
    %1413 = vmatprep.subr.bf16.mxu0 0
    %1414 = vmatpush1.bf16.msra.mxu0 %v1393
    %1415 = vmatprep.subr.bf16.mxu0 0
    %1416 = vmatpush1.bf16.msra.mxu0 %v1394
    %1417 = vmatprep.subr.bf16.mxu0 0
    %1418 = vmatpush1.bf16.msra.mxu0 %v1395
    %1419 = vmatprep.subr.bf16.mxu0 0
    %1420 = vmatpush1.bf16.msra.mxu0 %v1396
    %1421 = vmatprep.subr.bf16.mxu0 0
    %1422 = vmatpush1.bf16.msra.mxu0 0
    %1423 = vmatprep.subr.bf16.mxu0 0
    %1424 = vmatpush1.bf16.msra.mxu0 0
    %1425 = vmatprep.subr.bf16.mxu0 0
    %1426 = vmatpush1.bf16.msra.mxu0 0
    %1427 = vmatprep.subr.bf16.mxu0 0
    %1428 = vmatpush1.bf16.msra.mxu0 0
    %1429 = vmatprep.subr.bf16.mxu0 0
    %1430 = vmatpush1.bf16.msra.mxu0 0
    %1431 = vmatprep.subr.bf16.mxu0 0
    %1432 = vmatpush1.bf16.msra.mxu0 0
    %1433 = vmatprep.subr.bf16.mxu0 0
    %1434 = vmatpush1.bf16.msra.mxu0 0
    %1435 = vmatprep.subr.bf16.mxu0 0
    %1436 = vmatpush1.bf16.msra.mxu0 0
    %1437 = vmatprep.mubr.bf16.mxu0 0
    %1438 = vmatmul.mubr.bf16.gmra.mrb[0].mxu0 %v1356
    %v1439 = vpop.f32.mrb[0].mxu0
    %v1440 = vadd.f32 0.0, %v1439
    %v1441 = vpop.f32.mrb[0].mxu0
    %v1442 = vpop.f32.mrb[0].mxu0
    %v1443 = vadd.f32 0.0, %v1442
    %v1444 = vpop.f32.mrb[0].mxu0
    %1445 = vdwg.mxu0
    %v1446 = vadd.f32 %v1336, %v1440
    %v1447 = vadd.f32 %v1337, %v1443
    %v1448 = vld [vmem:[#allocation5 + $0x1] sm:$0xff]
    %v1449 = vld [vmem:[#allocation5 + $0x11] sm:$0xff]
    %v1450 = vld [vmem:[#allocation10 + $0x300] sm:$0xf]
    %v1451 = vld [vmem:[#allocation10 + $0x304] sm:$0xf]
    %v1452 = vld [vmem:[#allocation10 + $0x308] sm:$0xf]
    %v1453 = vld [vmem:[#allocation10 + $0x30c] sm:$0xf]
    %v1454 = vld [vmem:[#allocation10 + $0x310] sm:$0xf]
    %v1455 = vld [vmem:[#allocation10 + $0x314] sm:$0xf]
    %v1456 = vld [vmem:[#allocation10 + $0x318] sm:$0xf]
    %v1457 = vld [vmem:[#allocation10 + $0x31c] sm:$0xf]
    %v1458 = vld [vmem:[#allocation10 + $0x320] sm:$0xf]
    %v1459 = vld [vmem:[#allocation10 + $0x324] sm:$0xf]
    %v1460 = vld [vmem:[#allocation10 + $0x328] sm:$0xf]
    %v1461 = vld [vmem:[#allocation10 + $0x32c] sm:$0xf]
    %v1462 = vld [vmem:[#allocation10 + $0x330] sm:$0xf]
    %v1463 = vld [vmem:[#allocation10 + $0x334] sm:$0xf]
    %v1464 = vld [vmem:[#allocation10 + $0x338] sm:$0xf]
    %v1465 = vld [vmem:[#allocation10 + $0x33c] sm:$0xf]
    %v1466 = vpack.c.bf16 %v1449, %v1448
    %v1483 = vunpack.c.l.b16 %v1450
    %v1484 = vunpack.c.l.b16 %v1451
    %v1485 = vunpack.c.l.b16 %v1452
    %v1486 = vunpack.c.l.b16 %v1453
    %v1487 = vunpack.c.l.b16 %v1454
    %v1488 = vunpack.c.l.b16 %v1455
    %v1489 = vunpack.c.l.b16 %v1456
    %v1490 = vunpack.c.l.b16 %v1457
    %v1491 = vunpack.c.l.b16 %v1458
    %v1492 = vunpack.c.l.b16 %v1459
    %v1493 = vunpack.c.l.b16 %v1460
    %v1494 = vunpack.c.l.b16 %v1461
    %v1495 = vunpack.c.l.b16 %v1462
    %v1496 = vunpack.c.l.b16 %v1463
    %v1497 = vunpack.c.l.b16 %v1464
    %v1498 = vunpack.c.l.b16 %v1465
    %v1499 = vpack.c.b16 %v1484, %v1483
    %v1500 = vpack.c.b16 %v1486, %v1485
    %v1501 = vpack.c.b16 %v1488, %v1487
    %v1502 = vpack.c.b16 %v1490, %v1489
    %v1503 = vpack.c.b16 %v1492, %v1491
    %v1504 = vpack.c.b16 %v1494, %v1493
    %v1505 = vpack.c.b16 %v1496, %v1495
    %v1506 = vpack.c.b16 %v1498, %v1497
    %1515 = vmatprep.subr.bf16.mxu0 0
    %1516 = vmatpush1.bf16.msra.mxu0 %v1499
    %1517 = vmatprep.subr.bf16.mxu0 0
    %1518 = vmatpush1.bf16.msra.mxu0 %v1500
    %1519 = vmatprep.subr.bf16.mxu0 0
    %1520 = vmatpush1.bf16.msra.mxu0 %v1501
    %1521 = vmatprep.subr.bf16.mxu0 0
    %1522 = vmatpush1.bf16.msra.mxu0 %v1502
    %1523 = vmatprep.subr.bf16.mxu0 0
    %1524 = vmatpush1.bf16.msra.mxu0 %v1503
    %1525 = vmatprep.subr.bf16.mxu0 0
    %1526 = vmatpush1.bf16.msra.mxu0 %v1504
    %1527 = vmatprep.subr.bf16.mxu0 0
    %1528 = vmatpush1.bf16.msra.mxu0 %v1505
    %1529 = vmatprep.subr.bf16.mxu0 0
    %1530 = vmatpush1.bf16.msra.mxu0 %v1506
    %1531 = vmatprep.subr.bf16.mxu0 0
    %1532 = vmatpush1.bf16.msra.mxu0 0
    %1533 = vmatprep.subr.bf16.mxu0 0
    %1534 = vmatpush1.bf16.msra.mxu0 0
    %1535 = vmatprep.subr.bf16.mxu0 0
    %1536 = vmatpush1.bf16.msra.mxu0 0
    %1537 = vmatprep.subr.bf16.mxu0 0
    %1538 = vmatpush1.bf16.msra.mxu0 0
    %1539 = vmatprep.subr.bf16.mxu0 0
    %1540 = vmatpush1.bf16.msra.mxu0 0
    %1541 = vmatprep.subr.bf16.mxu0 0
    %1542 = vmatpush1.bf16.msra.mxu0 0
    %1543 = vmatprep.subr.bf16.mxu0 0
    %1544 = vmatpush1.bf16.msra.mxu0 0
    %1545 = vmatprep.subr.bf16.mxu0 0
    %1546 = vmatpush1.bf16.msra.mxu0 0
    %1547 = vmatprep.mubr.bf16.mxu0 0
    %1548 = vmatmul.mubr.bf16.gmra.mrb[0].mxu0 %v1466
    %v1549 = vpop.f32.mrb[0].mxu0
    %v1550 = vadd.f32 0.0, %v1549
    %v1551 = vpop.f32.mrb[0].mxu0
    %v1552 = vpop.f32.mrb[0].mxu0
    %v1553 = vadd.f32 0.0, %v1552
    %v1554 = vpop.f32.mrb[0].mxu0
    %1555 = vdwg.mxu0
    %v1556 = vadd.f32 %v1446, %v1550
    %v1557 = vadd.f32 %v1447, %v1553
    %v1558 = vld [vmem:[#allocation5 + $0x2] sm:$0xff]
    %v1559 = vld [vmem:[#allocation5 + $0x12] sm:$0xff]
    %v1560 = vld [vmem:[#allocation10 + $0x340] sm:$0xf]
    %v1561 = vld [vmem:[#allocation10 + $0x344] sm:$0xf]
    %v1562 = vld [vmem:[#allocation10 + $0x348] sm:$0xf]
    %v1563 = vld [vmem:[#allocation10 + $0x34c] sm:$0xf]
    %v1564 = vld [vmem:[#allocation10 + $0x350] sm:$0xf]
    %v1565 = vld [vmem:[#allocation10 + $0x354] sm:$0xf]
    %v1566 = vld [vmem:[#allocation10 + $0x358] sm:$0xf]
    %v1567 = vld [vmem:[#allocation10 + $0x35c] sm:$0xf]
    %v1568 = vld [vmem:[#allocation10 + $0x360] sm:$0xf]
    %v1569 = vld [vmem:[#allocation10 + $0x364] sm:$0xf]
    %v1570 = vld [vmem:[#allocation10 + $0x368] sm:$0xf]
    %v1571 = vld [vmem:[#allocation10 + $0x36c] sm:$0xf]
    %v1572 = vld [vmem:[#allocation10 + $0x370] sm:$0xf]
    %v1573 = vld [vmem:[#allocation10 + $0x374] sm:$0xf]
    %v1574 = vld [vmem:[#allocation10 + $0x378] sm:$0xf]
    %v1575 = vld [vmem:[#allocation10 + $0x37c] sm:$0xf]
    %v1576 = vpack.c.bf16 %v1559, %v1558
    %v1593 = vunpack.c.l.b16 %v1560
    %v1594 = vunpack.c.l.b16 %v1561
    %v1595 = vunpack.c.l.b16 %v1562
    %v1596 = vunpack.c.l.b16 %v1563
    %v1597 = vunpack.c.l.b16 %v1564
    %v1598 = vunpack.c.l.b16 %v1565
    %v1599 = vunpack.c.l.b16 %v1566
    %v1600 = vunpack.c.l.b16 %v1567
    %v1601 = vunpack.c.l.b16 %v1568
    %v1602 = vunpack.c.l.b16 %v1569
    %v1603 = vunpack.c.l.b16 %v1570
    %v1604 = vunpack.c.l.b16 %v1571
    %v1605 = vunpack.c.l.b16 %v1572
    %v1606 = vunpack.c.l.b16 %v1573
    %v1607 = vunpack.c.l.b16 %v1574
    %v1608 = vunpack.c.l.b16 %v1575
    %v1609 = vpack.c.b16 %v1594, %v1593
    %v1610 = vpack.c.b16 %v1596, %v1595
    %v1611 = vpack.c.b16 %v1598, %v1597
    %v1612 = vpack.c.b16 %v1600, %v1599
    %v1613 = vpack.c.b16 %v1602, %v1601
    %v1614 = vpack.c.b16 %v1604, %v1603
    %v1615 = vpack.c.b16 %v1606, %v1605
    %v1616 = vpack.c.b16 %v1608, %v1607
    %1625 = vmatprep.subr.bf16.mxu0 0
    %1626 = vmatpush1.bf16.msra.mxu0 %v1609
    %1627 = vmatprep.subr.bf16.mxu0 0
    %1628 = vmatpush1.bf16.msra.mxu0 %v1610
    %1629 = vmatprep.subr.bf16.mxu0 0
    %1630 = vmatpush1.bf16.msra.mxu0 %v1611
    %1631 = vmatprep.subr.bf16.mxu0 0
    %1632 = vmatpush1.bf16.msra.mxu0 %v1612
    %1633 = vmatprep.subr.bf16.mxu0 0
    %1634 = vmatpush1.bf16.msra.mxu0 %v1613
    %1635 = vmatprep.subr.bf16.mxu0 0
    %1636 = vmatpush1.bf16.msra.mxu0 %v1614
    %1637 = vmatprep.subr.bf16.mxu0 0
    %1638 = vmatpush1.bf16.msra.mxu0 %v1615
    %1639 = vmatprep.subr.bf16.mxu0 0
    %1640 = vmatpush1.bf16.msra.mxu0 %v1616
    %1641 = vmatprep.subr.bf16.mxu0 0
    %1642 = vmatpush1.bf16.msra.mxu0 0
    %1643 = vmatprep.subr.bf16.mxu0 0
    %1644 = vmatpush1.bf16.msra.mxu0 0
    %1645 = vmatprep.subr.bf16.mxu0 0
    %1646 = vmatpush1.bf16.msra.mxu0 0
    %1647 = vmatprep.subr.bf16.mxu0 0
    %1648 = vmatpush1.bf16.msra.mxu0 0
    %1649 = vmatprep.subr.bf16.mxu0 0
    %1650 = vmatpush1.bf16.msra.mxu0 0
    %1651 = vmatprep.subr.bf16.mxu0 0
    %1652 = vmatpush1.bf16.msra.mxu0 0
    %1653 = vmatprep.subr.bf16.mxu0 0
    %1654 = vmatpush1.bf16.msra.mxu0 0
    %1655 = vmatprep.subr.bf16.mxu0 0
    %1656 = vmatpush1.bf16.msra.mxu0 0
    %1657 = vmatprep.mubr.bf16.mxu0 0
    %1658 = vmatmul.mubr.bf16.gmra.mrb[0].mxu0 %v1576
    %v1659 = vpop.f32.mrb[0].mxu0
    %v1660 = vadd.f32 0.0, %v1659
    %v1661 = vpop.f32.mrb[0].mxu0
    %v1662 = vpop.f32.mrb[0].mxu0
    %v1663 = vadd.f32 0.0, %v1662
    %v1664 = vpop.f32.mrb[0].mxu0
    %1665 = vdwg.mxu0
    %v1666 = vadd.f32 %v1556, %v1660
    %v1667 = vadd.f32 %v1557, %v1663
    %v1668 = vld [vmem:[%s4 + $0x3] sm:$0x1]
    %v1669 = vlaneseq
    %v1670 = vshrl.u32 %v1669, 7
    %v1671 = vsub.s32 0, %v1670
    %v1672 = vrot.slane %v1668, %v1671
    %v1673 = vadd.f32 %v1666, %v1672
    %v1674 = vadd.f32 %v1667, %v1672
    %v1675 = vmax.f32 %v1673, 0.0
    %v1676 = vmax.f32 %v1674, 0.0
    %1677 = vst [vmem:[#allocation6 + $0x1] sm:$0xff] %v1675
    %1678 = vst [vmem:[#allocation6 + $0x11] sm:$0xff] %v1676
    %v1679 = vld [vmem:[#allocation6] sm:$0xff]
    %v1680 = vld [vmem:[#allocation6 + $0x10] sm:$0xff]
    %v1681 = vld [vmem:[#allocation10 + $0x380] sm:$0xf]
    %v1682 = vld [vmem:[#allocation10 + $0x384] sm:$0xf]
    %v1683 = vld [vmem:[#allocation10 + $0x388] sm:$0xf]
    %v1684 = vld [vmem:[#allocation10 + $0x38c] sm:$0xf]
    %v1685 = vld [vmem:[#allocation10 + $0x390] sm:$0xf]
    %v1686 = vld [vmem:[#allocation10 + $0x394] sm:$0xf]
    %v1687 = vld [vmem:[#allocation10 + $0x398] sm:$0xf]
    %v1688 = vld [vmem:[#allocation10 + $0x39c] sm:$0xf]
    %v1689 = vld [vmem:[#allocation10 + $0x3a0] sm:$0xf]
    %v1690 = vld [vmem:[#allocation10 + $0x3a4] sm:$0xf]
    %v1691 = vld [vmem:[#allocation10 + $0x3a8] sm:$0xf]
    %v1692 = vld [vmem:[#allocation10 + $0x3ac] sm:$0xf]
    %v1693 = vld [vmem:[#allocation10 + $0x3b0] sm:$0xf]
    %v1694 = vld [vmem:[#allocation10 + $0x3b4] sm:$0xf]
    %v1695 = vld [vmem:[#allocation10 + $0x3b8] sm:$0xf]
    %v1696 = vld [vmem:[#allocation10 + $0x3bc] sm:$0xf]
    %v1697 = vpack.c.bf16 %v1680, %v1679
    %v1698 = vld [vmem:[#allocation6 + $0x1] sm:$0xff]
    %v1699 = vld [vmem:[#allocation6 + $0x11] sm:$0xff]
    %v1700 = vld [vmem:[#allocation10 + $0x3c0] sm:$0xf]
    %v1701 = vld [vmem:[#allocation10 + $0x3c4] sm:$0xf]
    %v1702 = vld [vmem:[#allocation10 + $0x3c8] sm:$0xf]
    %v1703 = vld [vmem:[#allocation10 + $0x3cc] sm:$0xf]
    %v1704 = vld [vmem:[#allocation10 + $0x3d0] sm:$0xf]
    %v1705 = vld [vmem:[#allocation10 + $0x3d4] sm:$0xf]
    %v1706 = vld [vmem:[#allocation10 + $0x3d8] sm:$0xf]
    %v1707 = vld [vmem:[#allocation10 + $0x3dc] sm:$0xf]
    %v1708 = vld [vmem:[#allocation10 + $0x3e0] sm:$0xf]
    %v1709 = vld [vmem:[#allocation10 + $0x3e4] sm:$0xf]
    %v1710 = vld [vmem:[#allocation10 + $0x3e8] sm:$0xf]
    %v1711 = vld [vmem:[#allocation10 + $0x3ec] sm:$0xf]
    %v1712 = vld [vmem:[#allocation10 + $0x3f0] sm:$0xf]
    %v1713 = vld [vmem:[#allocation10 + $0x3f4] sm:$0xf]
    %v1714 = vld [vmem:[#allocation10 + $0x3f8] sm:$0xf]
    %v1715 = vld [vmem:[#allocation10 + $0x3fc] sm:$0xf]
    %v1716 = vpack.c.bf16 %v1699, %v1698
    %v1733 = vunpack.c.l.b16 %v1700
    %v1734 = vunpack.c.l.b16 %v1701
    %v1735 = vunpack.c.l.b16 %v1702
    %v1736 = vunpack.c.l.b16 %v1703
    %v1737 = vunpack.c.l.b16 %v1704
    %v1738 = vunpack.c.l.b16 %v1705
    %v1739 = vunpack.c.l.b16 %v1706
    %v1740 = vunpack.c.l.b16 %v1707
    %v1741 = vunpack.c.l.b16 %v1708
    %v1742 = vunpack.c.l.b16 %v1709
    %v1743 = vunpack.c.l.b16 %v1710
    %v1744 = vunpack.c.l.b16 %v1711
    %v1745 = vunpack.c.l.b16 %v1712
    %v1746 = vunpack.c.l.b16 %v1713
    %v1747 = vunpack.c.l.b16 %v1714
    %v1748 = vunpack.c.l.b16 %v1715
    %v1749 = vpack.c.b16 %v1734, %v1733
    %v1750 = vpack.c.b16 %v1736, %v1735
    %v1751 = vpack.c.b16 %v1738, %v1737
    %v1752 = vpack.c.b16 %v1740, %v1739
    %v1753 = vpack.c.b16 %v1742, %v1741
    %v1754 = vpack.c.b16 %v1744, %v1743
    %v1755 = vpack.c.b16 %v1746, %v1745
    %v1756 = vpack.c.b16 %v1748, %v1747
    %1765 = vmatprep.subr.bf16.mxu0 0
    %1766 = vmatpush1.bf16.msra.mxu0 %v1749
    %1767 = vmatprep.subr.bf16.mxu0 0
    %1768 = vmatpush1.bf16.msra.mxu0 %v1750
    %1769 = vmatprep.subr.bf16.mxu0 0
    %1770 = vmatpush1.bf16.msra.mxu0 %v1751
    %1771 = vmatprep.subr.bf16.mxu0 0
    %1772 = vmatpush1.bf16.msra.mxu0 %v1752
    %1773 = vmatprep.subr.bf16.mxu0 0
    %1774 = vmatpush1.bf16.msra.mxu0 %v1753
    %1775 = vmatprep.subr.bf16.mxu0 0
    %1776 = vmatpush1.bf16.msra.mxu0 %v1754
    %1777 = vmatprep.subr.bf16.mxu0 0
    %1778 = vmatpush1.bf16.msra.mxu0 %v1755
    %1779 = vmatprep.subr.bf16.mxu0 0
    %1780 = vmatpush1.bf16.msra.mxu0 %v1756
    %1781 = vmatprep.subr.bf16.mxu0 0
    %1782 = vmatpush1.bf16.msra.mxu0 0
    %1783 = vmatprep.subr.bf16.mxu0 0
    %1784 = vmatpush1.bf16.msra.mxu0 0
    %1785 = vmatprep.subr.bf16.mxu0 0
    %1786 = vmatpush1.bf16.msra.mxu0 0
    %1787 = vmatprep.subr.bf16.mxu0 0
    %1788 = vmatpush1.bf16.msra.mxu0 0
    %1789 = vmatprep.subr.bf16.mxu0 0
    %1790 = vmatpush1.bf16.msra.mxu0 0
    %1791 = vmatprep.subr.bf16.mxu0 0
    %1792 = vmatpush1.bf16.msra.mxu0 0
    %1793 = vmatprep.subr.bf16.mxu0 0
    %1794 = vmatpush1.bf16.msra.mxu0 0
    %1795 = vmatprep.subr.bf16.mxu0 0
    %1796 = vmatpush1.bf16.msra.mxu0 0
    %1797 = vmatprep.mubr.bf16.mxu0 0
    %1798 = vmatmul.mubr.bf16.gmra.mrb[0].mxu0 %v1716
    %v1799 = vpop.f32.mrb[0].mxu0
    %v1800 = vadd.f32 0.0, %v1799
    %v1801 = vpop.f32.mrb[0].mxu0
    %v1802 = vpop.f32.mrb[0].mxu0
    %v1803 = vadd.f32 0.0, %v1802
    %v1804 = vpop.f32.mrb[0].mxu0
    %1805 = vdwg.mxu0
    %v1822 = vunpack.c.l.b16 %v1681
    %v1823 = vunpack.c.l.b16 %v1682
    %v1824 = vunpack.c.l.b16 %v1683
    %v1825 = vunpack.c.l.b16 %v1684
    %v1826 = vunpack.c.l.b16 %v1685
    %v1827 = vunpack.c.l.b16 %v1686
    %v1828 = vunpack.c.l.b16 %v1687
    %v1829 = vunpack.c.l.b16 %v1688
    %v1830 = vunpack.c.l.b16 %v1689
    %v1831 = vunpack.c.l.b16 %v1690
    %v1832 = vunpack.c.l.b16 %v1691
    %v1833 = vunpack.c.l.b16 %v1692
    %v1834 = vunpack.c.l.b16 %v1693
    %v1835 = vunpack.c.l.b16 %v1694
    %v1836 = vunpack.c.l.b16 %v1695
    %v1837 = vunpack.c.l.b16 %v1696
    %v1838 = vpack.c.b16 %v1823, %v1822
    %v1839 = vpack.c.b16 %v1825, %v1824
    %v1840 = vpack.c.b16 %v1827, %v1826
    %v1841 = vpack.c.b16 %v1829, %v1828
    %v1842 = vpack.c.b16 %v1831, %v1830
    %v1843 = vpack.c.b16 %v1833, %v1832
    %v1844 = vpack.c.b16 %v1835, %v1834
    %v1845 = vpack.c.b16 %v1837, %v1836
    %1854 = vmatprep.subr.bf16.mxu0 0
    %1855 = vmatpush1.bf16.msra.mxu0 %v1838
    %1856 = vmatprep.subr.bf16.mxu0 0
    %1857 = vmatpush1.bf16.msra.mxu0 %v1839
    %1858 = vmatprep.subr.bf16.mxu0 0
    %1859 = vmatpush1.bf16.msra.mxu0 %v1840
    %1860 = vmatprep.subr.bf16.mxu0 0
    %1861 = vmatpush1.bf16.msra.mxu0 %v1841
    %1862 = vmatprep.subr.bf16.mxu0 0
    %1863 = vmatpush1.bf16.msra.mxu0 %v1842
    %1864 = vmatprep.subr.bf16.mxu0 0
    %1865 = vmatpush1.bf16.msra.mxu0 %v1843
    %1866 = vmatprep.subr.bf16.mxu0 0
    %1867 = vmatpush1.bf16.msra.mxu0 %v1844
    %1868 = vmatprep.subr.bf16.mxu0 0
    %1869 = vmatpush1.bf16.msra.mxu0 %v1845
    %1870 = vmatprep.subr.bf16.mxu0 0
    %1871 = vmatpush1.bf16.msra.mxu0 0
    %1872 = vmatprep.subr.bf16.mxu0 0
    %1873 = vmatpush1.bf16.msra.mxu0 0
    %1874 = vmatprep.subr.bf16.mxu0 0
    %1875 = vmatpush1.bf16.msra.mxu0 0
    %1876 = vmatprep.subr.bf16.mxu0 0
    %1877 = vmatpush1.bf16.msra.mxu0 0
    %1878 = vmatprep.subr.bf16.mxu0 0
    %1879 = vmatpush1.bf16.msra.mxu0 0
    %1880 = vmatprep.subr.bf16.mxu0 0
    %1881 = vmatpush1.bf16.msra.mxu0 0
    %1882 = vmatprep.subr.bf16.mxu0 0
    %1883 = vmatpush1.bf16.msra.mxu0 0
    %1884 = vmatprep.subr.bf16.mxu0 0
    %1885 = vmatpush1.bf16.msra.mxu0 0
    %1886 = vmatprep.mubr.bf16.mxu0 0
    %1887 = vmatmul.mubr.bf16.gmra.mrb[0].mxu0 %v1697
    %v1888 = vpop.f32.mrb[0].mxu0
    %v1889 = vadd.f32 %v1800, %v1888
    %v1890 = vpop.f32.mrb[0].mxu0
    %v1891 = vpop.f32.mrb[0].mxu0
    %v1892 = vadd.f32 %v1803, %v1891
    %v1893 = vpop.f32.mrb[0].mxu0
    %1894 = vdwg.mxu0
    %v1895 = vld [vmem:[#allocation6 + $0x2] sm:$0xff]
    %v1896 = vld [vmem:[#allocation6 + $0x12] sm:$0xff]
    %v1897 = vld [vmem:[#allocation10 + $0x400] sm:$0xf]
    %v1898 = vld [vmem:[#allocation10 + $0x404] sm:$0xf]
    %v1899 = vld [vmem:[#allocation10 + $0x408] sm:$0xf]
    %v1900 = vld [vmem:[#allocation10 + $0x40c] sm:$0xf]
    %v1901 = vld [vmem:[#allocation10 + $0x410] sm:$0xf]
    %v1902 = vld [vmem:[#allocation10 + $0x414] sm:$0xf]
    %v1903 = vld [vmem:[#allocation10 + $0x418] sm:$0xf]
    %v1904 = vld [vmem:[#allocation10 + $0x41c] sm:$0xf]
    %v1905 = vld [vmem:[#allocation10 + $0x420] sm:$0xf]
    %v1906 = vld [vmem:[#allocation10 + $0x424] sm:$0xf]
    %v1907 = vld [vmem:[#allocation10 + $0x428] sm:$0xf]
    %v1908 = vld [vmem:[#allocation10 + $0x42c] sm:$0xf]
    %v1909 = vld [vmem:[#allocation10 + $0x430] sm:$0xf]
    %v1910 = vld [vmem:[#allocation10 + $0x434] sm:$0xf]
    %v1911 = vld [vmem:[#allocation10 + $0x438] sm:$0xf]
    %v1912 = vld [vmem:[#allocation10 + $0x43c] sm:$0xf]
    %v1913 = vpack.c.bf16 %v1896, %v1895
    %v1930 = vunpack.c.l.b16 %v1897
    %v1931 = vunpack.c.l.b16 %v1898
    %v1932 = vunpack.c.l.b16 %v1899
    %v1933 = vunpack.c.l.b16 %v1900
    %v1934 = vunpack.c.l.b16 %v1901
    %v1935 = vunpack.c.l.b16 %v1902
    %v1936 = vunpack.c.l.b16 %v1903
    %v1937 = vunpack.c.l.b16 %v1904
    %v1938 = vunpack.c.l.b16 %v1905
    %v1939 = vunpack.c.l.b16 %v1906
    %v1940 = vunpack.c.l.b16 %v1907
    %v1941 = vunpack.c.l.b16 %v1908
    %v1942 = vunpack.c.l.b16 %v1909
    %v1943 = vunpack.c.l.b16 %v1910
    %v1944 = vunpack.c.l.b16 %v1911
    %v1945 = vunpack.c.l.b16 %v1912
    %v1946 = vpack.c.b16 %v1931, %v1930
    %v1947 = vpack.c.b16 %v1933, %v1932
    %v1948 = vpack.c.b16 %v1935, %v1934
    %v1949 = vpack.c.b16 %v1937, %v1936
    %v1950 = vpack.c.b16 %v1939, %v1938
    %v1951 = vpack.c.b16 %v1941, %v1940
    %v1952 = vpack.c.b16 %v1943, %v1942
    %v1953 = vpack.c.b16 %v1945, %v1944
    %1962 = vmatprep.subr.bf16.mxu0 0
    %1963 = vmatpush1.bf16.msra.mxu0 %v1946
    %1964 = vmatprep.subr.bf16.mxu0 0
    %1965 = vmatpush1.bf16.msra.mxu0 %v1947
    %1966 = vmatprep.subr.bf16.mxu0 0
    %1967 = vmatpush1.bf16.msra.mxu0 %v1948
    %1968 = vmatprep.subr.bf16.mxu0 0
    %1969 = vmatpush1.bf16.msra.mxu0 %v1949
    %1970 = vmatprep.subr.bf16.mxu0 0
    %1971 = vmatpush1.bf16.msra.mxu0 %v1950
    %1972 = vmatprep.subr.bf16.mxu0 0
    %1973 = vmatpush1.bf16.msra.mxu0 %v1951
    %1974 = vmatprep.subr.bf16.mxu0 0
    %1975 = vmatpush1.bf16.msra.mxu0 %v1952
    %1976 = vmatprep.subr.bf16.mxu0 0
    %1977 = vmatpush1.bf16.msra.mxu0 %v1953
    %1978 = vmatprep.subr.bf16.mxu0 0
    %1979 = vmatpush1.bf16.msra.mxu0 0
    %1980 = vmatprep.subr.bf16.mxu0 0
    %1981 = vmatpush1.bf16.msra.mxu0 0
    %1982 = vmatprep.subr.bf16.mxu0 0
    %1983 = vmatpush1.bf16.msra.mxu0 0
    %1984 = vmatprep.subr.bf16.mxu0 0
    %1985 = vmatpush1.bf16.msra.mxu0 0
    %1986 = vmatprep.subr.bf16.mxu0 0
    %1987 = vmatpush1.bf16.msra.mxu0 0
    %1988 = vmatprep.subr.bf16.mxu0 0
    %1989 = vmatpush1.bf16.msra.mxu0 0
    %1990 = vmatprep.subr.bf16.mxu0 0
    %1991 = vmatpush1.bf16.msra.mxu0 0
    %1992 = vmatprep.subr.bf16.mxu0 0
    %1993 = vmatpush1.bf16.msra.mxu0 0
    %1994 = vmatprep.mubr.bf16.mxu0 0
    %1995 = vmatmul.mubr.bf16.gmra.mrb[0].mxu0 %v1913
    %v1996 = vpop.f32.mrb[0].mxu0
    %v1997 = vadd.f32 0.0, %v1996
    %v1998 = vpop.f32.mrb[0].mxu0
    %v1999 = vpop.f32.mrb[0].mxu0
    %v2000 = vadd.f32 0.0, %v1999
    %v2001 = vpop.f32.mrb[0].mxu0
    %2002 = vdwg.mxu0
    %v2003 = vadd.f32 %v1889, %v1997
    %v2004 = vadd.f32 %v1892, %v2000
    %v2005 = vld [vmem:[%s4 + $0x4] sm:$0x1]
    %v2006 = vlaneseq
    %v2007 = vshrl.u32 %v2006, 7
    %v2008 = vsub.s32 0, %v2007
    %v2009 = vrot.slane %v2005, %v2008
    %v2010 = vadd.f32 %v2003, %v2009
    %v2011 = vadd.f32 %v2004, %v2009
    %v2012 = vmax.f32 %v2010, 0.0
    %v2013 = vmax.f32 %v2011, 0.0
    %2014 = vst [vmem:[%s5] sm:$0xff] %v2012
    %2015 = vst [vmem:[%s5 + $0x8] sm:$0xff] %v2013
    %v2016 = vpack.c.bf16 %v2013, %v2012
    %v2017 = vld [vmem:[%s4 + $0x5] sm:$0x1]
    %v2018 = vld [vmem:[#allocation10 + $0x440] sm:$0xf]
    %v2019 = vld [vmem:[#allocation10 + $0x444] sm:$0xf]
    %v2020 = vld [vmem:[#allocation10 + $0x448] sm:$0xf]
    %v2021 = vld [vmem:[#allocation10 + $0x44c] sm:$0xf]
    %v2022 = vld [vmem:[#allocation10 + $0x450] sm:$0xf]
    %v2023 = vld [vmem:[#allocation10 + $0x454] sm:$0xf]
    %v2024 = vld [vmem:[#allocation10 + $0x458] sm:$0xf]
    %v2025 = vld [vmem:[#allocation10 + $0x45c] sm:$0xf]
    %v2026 = vld [vmem:[#allocation10 + $0x460] sm:$0xf]
    %v2027 = vld [vmem:[#allocation10 + $0x464] sm:$0xf]
    %v2028 = vld [vmem:[#allocation10 + $0x468] sm:$0xf]
    %v2029 = vld [vmem:[#allocation10 + $0x46c] sm:$0xf]
    %v2030 = vld [vmem:[#allocation10 + $0x470] sm:$0xf]
    %v2031 = vld [vmem:[#allocation10 + $0x474] sm:$0xf]
    %v2032 = vld [vmem:[#allocation10 + $0x478] sm:$0xf]
    %v2033 = vld [vmem:[#allocation10 + $0x47c] sm:$0xf]
    %v2034 = vlaneseq
    %v2035 = vshrl.u32 %v2034, 7
    %v2036 = vsub.s32 0, %v2035
    %v2037 = vrot.slane %v2017, %v2036
    %v2054 = vunpack.c.l.b16 %v2018
    %v2055 = vunpack.c.l.b16 %v2019
    %v2056 = vunpack.c.l.b16 %v2020
    %v2057 = vunpack.c.l.b16 %v2021
    %v2058 = vunpack.c.l.b16 %v2022
    %v2059 = vunpack.c.l.b16 %v2023
    %v2060 = vunpack.c.l.b16 %v2024
    %v2061 = vunpack.c.l.b16 %v2025
    %v2062 = vunpack.c.l.b16 %v2026
    %v2063 = vunpack.c.l.b16 %v2027
    %v2064 = vunpack.c.l.b16 %v2028
    %v2065 = vunpack.c.l.b16 %v2029
    %v2066 = vunpack.c.l.b16 %v2030
    %v2067 = vunpack.c.l.b16 %v2031
    %v2068 = vunpack.c.l.b16 %v2032
    %v2069 = vunpack.c.l.b16 %v2033
    %v2070 = vpack.c.b16 %v2055, %v2054
    %v2071 = vpack.c.b16 %v2057, %v2056
    %v2072 = vpack.c.b16 %v2059, %v2058
    %v2073 = vpack.c.b16 %v2061, %v2060
    %v2074 = vpack.c.b16 %v2063, %v2062
    %v2075 = vpack.c.b16 %v2065, %v2064
    %v2076 = vpack.c.b16 %v2067, %v2066
    %v2077 = vpack.c.b16 %v2069, %v2068
    %2086 = vmatprep.subr.bf16.mxu0 0
    %2087 = vmatpush1.bf16.msra.mxu0 %v2070
    %2088 = vmatprep.subr.bf16.mxu0 0
    %2089 = vmatpush1.bf16.msra.mxu0 %v2071
    %2090 = vmatprep.subr.bf16.mxu0 0
    %2091 = vmatpush1.bf16.msra.mxu0 %v2072
    %2092 = vmatprep.subr.bf16.mxu0 0
    %2093 = vmatpush1.bf16.msra.mxu0 %v2073
    %2094 = vmatprep.subr.bf16.mxu0 0
    %2095 = vmatpush1.bf16.msra.mxu0 %v2074
    %2096 = vmatprep.subr.bf16.mxu0 0
    %2097 = vmatpush1.bf16.msra.mxu0 %v2075
    %2098 = vmatprep.subr.bf16.mxu0 0
    %2099 = vmatpush1.bf16.msra.mxu0 %v2076
    %2100 = vmatprep.subr.bf16.mxu0 0
    %2101 = vmatpush1.bf16.msra.mxu0 %v2077
    %2102 = vmatprep.subr.bf16.mxu0 0
    %2103 = vmatpush1.bf16.msra.mxu0 0
    %2104 = vmatprep.subr.bf16.mxu0 0
    %2105 = vmatpush1.bf16.msra.mxu0 0
    %2106 = vmatprep.subr.bf16.mxu0 0
    %2107 = vmatpush1.bf16.msra.mxu0 0
    %2108 = vmatprep.subr.bf16.mxu0 0
    %2109 = vmatpush1.bf16.msra.mxu0 0
    %2110 = vmatprep.subr.bf16.mxu0 0
    %2111 = vmatpush1.bf16.msra.mxu0 0
    %2112 = vmatprep.subr.bf16.mxu0 0
    %2113 = vmatpush1.bf16.msra.mxu0 0
    %2114 = vmatprep.subr.bf16.mxu0 0
    %2115 = vmatpush1.bf16.msra.mxu0 0
    %2116 = vmatprep.subr.bf16.mxu0 0
    %2117 = vmatpush1.bf16.msra.mxu0 0
    %2118 = vmatprep.mubr.bf16.mxu0 0
    %2119 = vmatmul.mubr.bf16.gmra.mrb[0].mxu0 %v2016
    %v2120 = vpop.f32.mrb[0].mxu0
    %v2121 = vadd.f32 %v2037, %v2120
    %v2122 = vpop.f32.mrb[0].mxu0
    %v2123 = vpop.f32.mrb[0].mxu0
    %v2124 = vadd.f32 %v2037, %v2123
    %v2125 = vpop.f32.mrb[0].mxu0
    %2126 = vdwg.mxu0
    %v2127 = vmax.f32 %v2121, 0.0
    %v2128 = vmax.f32 %v2124, 0.0
    %v2129 = vld [vmem:[#allocation10 + $0x480] sm:$0xf]
    %v2130 = vld [vmem:[#allocation10 + $0x484] sm:$0xf]
    %v2131 = vld [vmem:[#allocation10 + $0x488] sm:$0xf]
    %v2132 = vld [vmem:[#allocation10 + $0x48c] sm:$0xf]
    %v2133 = vld [vmem:[#allocation10 + $0x490] sm:$0xf]
    %v2134 = vld [vmem:[#allocation10 + $0x494] sm:$0xf]
    %v2135 = vld [vmem:[#allocation10 + $0x498] sm:$0xf]
    %v2136 = vld [vmem:[#allocation10 + $0x49c] sm:$0xf]
    %v2137 = vld [vmem:[#allocation10 + $0x4a0] sm:$0xf]
    %v2138 = vld [vmem:[#allocation10 + $0x4a4] sm:$0xf]
    %v2139 = vld [vmem:[#allocation10 + $0x4a8] sm:$0xf]
    %v2140 = vld [vmem:[#allocation10 + $0x4ac] sm:$0xf]
    %v2141 = vld [vmem:[#allocation10 + $0x4b0] sm:$0xf]
    %v2142 = vld [vmem:[#allocation10 + $0x4b4] sm:$0xf]
    %v2143 = vld [vmem:[#allocation10 + $0x4b8] sm:$0xf]
    %v2144 = vld [vmem:[#allocation10 + $0x4bc] sm:$0xf]
    %v2161 = vunpack.c.l.b16 %v2129
    %v2162 = vunpack.c.l.b16 %v2130
    %v2163 = vunpack.c.l.b16 %v2131
    %v2164 = vunpack.c.l.b16 %v2132
    %v2165 = vunpack.c.l.b16 %v2133
    %v2166 = vunpack.c.l.b16 %v2134
    %v2167 = vunpack.c.l.b16 %v2135
    %v2168 = vunpack.c.l.b16 %v2136
    %v2169 = vunpack.c.l.b16 %v2137
    %v2170 = vunpack.c.l.b16 %v2138
    %v2171 = vunpack.c.l.b16 %v2139
    %v2172 = vunpack.c.l.b16 %v2140
    %v2173 = vunpack.c.l.b16 %v2141
    %v2174 = vunpack.c.l.b16 %v2142
    %v2175 = vunpack.c.l.b16 %v2143
    %v2176 = vunpack.c.l.b16 %v2144
    %v2177 = vpack.c.b16 %v2162, %v2161
    %v2178 = vpack.c.b16 %v2164, %v2163
    %v2179 = vpack.c.b16 %v2166, %v2165
    %v2180 = vpack.c.b16 %v2168, %v2167
    %v2181 = vpack.c.b16 %v2170, %v2169
    %v2182 = vpack.c.b16 %v2172, %v2171
    %v2183 = vpack.c.b16 %v2174, %v2173
    %v2184 = vpack.c.b16 %v2176, %v2175
    %2193 = vmatprep.subr.bf16.mxu0 0
    %2194 = vmatpush1.bf16.msra.mxu0 %v2177
    %2195 = vmatprep.subr.bf16.mxu0 0
    %2196 = vmatpush1.bf16.msra.mxu0 %v2178
    %2197 = vmatprep.subr.bf16.mxu0 0
    %2198 = vmatpush1.bf16.msra.mxu0 %v2179
    %2199 = vmatprep.subr.bf16.mxu0 0
    %2200 = vmatpush1.bf16.msra.mxu0 %v2180
    %2201 = vmatprep.subr.bf16.mxu0 0
    %2202 = vmatpush1.bf16.msra.mxu0 %v2181
    %2203 = vmatprep.subr.bf16.mxu0 0
    %2204 = vmatpush1.bf16.msra.mxu0 %v2182
    %2205 = vmatprep.subr.bf16.mxu0 0
    %2206 = vmatpush1.bf16.msra.mxu0 %v2183
    %2207 = vmatprep.subr.bf16.mxu0 0
    %2208 = vmatpush1.bf16.msra.mxu0 %v2184
    %2209 = vmatprep.subr.bf16.mxu0 0
    %2210 = vmatpush1.bf16.msra.mxu0 0
    %2211 = vmatprep.subr.bf16.mxu0 0
    %2212 = vmatpush1.bf16.msra.mxu0 0
    %2213 = vmatprep.subr.bf16.mxu0 0
    %2214 = vmatpush1.bf16.msra.mxu0 0
    %2215 = vmatprep.subr.bf16.mxu0 0
    %2216 = vmatpush1.bf16.msra.mxu0 0
    %2217 = vmatprep.subr.bf16.mxu0 0
    %2218 = vmatpush1.bf16.msra.mxu0 0
    %2219 = vmatprep.subr.bf16.mxu0 0
    %2220 = vmatpush1.bf16.msra.mxu0 0
    %2221 = vmatprep.subr.bf16.mxu0 0
    %2222 = vmatpush1.bf16.msra.mxu0 0
    %2223 = vmatprep.subr.bf16.mxu0 0
    %2224 = vmatpush1.bf16.msra.mxu0 0
    %2225 = vmatprep.mubr.bf16.mxu0 0
    %2226 = vmatmul.mubr.bf16.gmra.mrb[0].mxu0 %v2016
    %v2227 = vpop.f32.mrb[0].mxu0
    %v2228 = vadd.f32 %v2037, %v2227
    %v2229 = vpop.f32.mrb[0].mxu0
    %v2230 = vpop.f32.mrb[0].mxu0
    %v2231 = vadd.f32 %v2037, %v2230
    %v2232 = vpop.f32.mrb[0].mxu0
    %2233 = vdwg.mxu0
    %v2234 = vmax.f32 %v2228, 0.0
    %v2235 = vmax.f32 %v2231, 0.0
    %v2240 = vcombine.low %v2127, %v2234
    %v2241 = vcombine.high %v2127, %v2234
    %v2242 = vcombine.low %v2128, %v2235
    %v2243 = vcombine.high %v2128, %v2235
    %v2249 = vunpack.c.l.s4 1935823168
    %v2250 = vunpack.c.0.s8 %v2249
    %v2251 = vlaneseq
    %v2252 = vshrl.u32 %v2251, 7
    %v2253 = vsub.s32 %v2250, %v2252
    %v2254 = vrot.slane %v2240, %v2253
    %v2256 = vunpack.c.l.s4 1935823168
    %v2257 = vunpack.c.0.s8 %v2256
    %v2258 = vlaneseq
    %v2259 = vshrl.u32 %v2258, 7
    %v2260 = vsub.s32 %v2257, %v2259
    %v2261 = vrot.slane %v2241, %v2260
    %v2263 = vunpack.c.l.s4 1935823168
    %v2264 = vunpack.c.0.s8 %v2263
    %v2265 = vlaneseq
    %v2266 = vshrl.u32 %v2265, 7
    %v2267 = vsub.s32 %v2264, %v2266
    %v2268 = vrot.slane %v2242, %v2267
    %v2270 = vunpack.c.l.s4 1935823168
    %v2271 = vunpack.c.0.s8 %v2270
    %v2272 = vlaneseq
    %v2273 = vshrl.u32 %v2272, 7
    %v2274 = vsub.s32 %v2271, %v2273
    %v2275 = vrot.slane %v2243, %v2274
    %2276 = vst [vmem:[#allocation8 + $0x1] sm:$0xff] %v2254
    %2277 = vst [vmem:[#allocation8 + $0x9] sm:$0xff] %v2261
    %2278 = vst [vmem:[#allocation8 + $0x19] sm:$0xff] %v2268
    %2279 = vst [vmem:[#allocation8 + $0x21] sm:$0xff] %v2275
    %v2280 = vld [vmem:[#allocation7] sm:$0xff]
    %v2281 = vld [vmem:[#allocation7 + $0x8] sm:$0xff]
    %v2282 = vld [vmem:[#allocation7 + $0x18] sm:$0xff]
    %v2283 = vld [vmem:[#allocation7 + $0x20] sm:$0xff]
    %v2284 = vld [vmem:[#allocation10 + $0x4c0] sm:$0xf]
    %v2285 = vld [vmem:[#allocation10 + $0x4c4] sm:$0xf]
    %v2286 = vld [vmem:[#allocation10 + $0x4c8] sm:$0xf]
    %v2287 = vld [vmem:[#allocation10 + $0x4cc] sm:$0xf]
    %v2288 = vld [vmem:[#allocation10 + $0x4d0] sm:$0xf]
    %v2289 = vld [vmem:[#allocation10 + $0x4d4] sm:$0xf]
    %v2290 = vld [vmem:[#allocation10 + $0x4d8] sm:$0xf]
    %v2291 = vld [vmem:[#allocation10 + $0x4dc] sm:$0xf]
    %v2292 = vld [vmem:[#allocation10 + $0x4e0] sm:$0xf]
    %v2293 = vld [vmem:[#allocation10 + $0x4e4] sm:$0xf]
    %v2294 = vld [vmem:[#allocation10 + $0x4e8] sm:$0xf]
    %v2295 = vld [vmem:[#allocation10 + $0x4ec] sm:$0xf]
    %v2296 = vld [vmem:[#allocation10 + $0x4f0] sm:$0xf]
    %v2297 = vld [vmem:[#allocation10 + $0x4f4] sm:$0xf]
    %v2298 = vld [vmem:[#allocation10 + $0x4f8] sm:$0xf]
    %v2299 = vld [vmem:[#allocation10 + $0x4fc] sm:$0xf]
    %v2300 = vpack.c.bf16 %v2281, %v2280
    %v2301 = vpack.c.bf16 %v2283, %v2282
    %v2302 = vld [vmem:[#allocation7 + $0x1] sm:$0xff]
    %v2303 = vld [vmem:[#allocation7 + $0x9] sm:$0xff]
    %v2304 = vld [vmem:[#allocation7 + $0x19] sm:$0xff]
    %v2305 = vld [vmem:[#allocation7 + $0x21] sm:$0xff]
    %v2306 = vld [vmem:[#allocation10 + $0x500] sm:$0xf]
    %v2307 = vld [vmem:[#allocation10 + $0x504] sm:$0xf]
    %v2308 = vld [vmem:[#allocation10 + $0x508] sm:$0xf]
    %v2309 = vld [vmem:[#allocation10 + $0x50c] sm:$0xf]
    %v2310 = vld [vmem:[#allocation10 + $0x510] sm:$0xf]
    %v2311 = vld [vmem:[#allocation10 + $0x514] sm:$0xf]
    %v2312 = vld [vmem:[#allocation10 + $0x518] sm:$0xf]
    %v2313 = vld [vmem:[#allocation10 + $0x51c] sm:$0xf]
    %v2314 = vld [vmem:[#allocation10 + $0x520] sm:$0xf]
    %v2315 = vld [vmem:[#allocation10 + $0x524] sm:$0xf]
    %v2316 = vld [vmem:[#allocation10 + $0x528] sm:$0xf]
    %v2317 = vld [vmem:[#allocation10 + $0x52c] sm:$0xf]
    %v2318 = vld [vmem:[#allocation10 + $0x530] sm:$0xf]
    %v2319 = vld [vmem:[#allocation10 + $0x534] sm:$0xf]
    %v2320 = vld [vmem:[#allocation10 + $0x538] sm:$0xf]
    %v2321 = vld [vmem:[#allocation10 + $0x53c] sm:$0xf]
    %v2322 = vpack.c.bf16 %v2303, %v2302
    %v2323 = vpack.c.bf16 %v2305, %v2304
    %v2340 = vunpack.c.l.b16 %v2306
    %v2341 = vunpack.c.l.b16 %v2307
    %v2342 = vunpack.c.l.b16 %v2308
    %v2343 = vunpack.c.l.b16 %v2309
    %v2344 = vunpack.c.l.b16 %v2310
    %v2345 = vunpack.c.l.b16 %v2311
    %v2346 = vunpack.c.l.b16 %v2312
    %v2347 = vunpack.c.l.b16 %v2313
    %v2348 = vunpack.c.l.b16 %v2314
    %v2349 = vunpack.c.l.b16 %v2315
    %v2350 = vunpack.c.l.b16 %v2316
    %v2351 = vunpack.c.l.b16 %v2317
    %v2352 = vunpack.c.l.b16 %v2318
    %v2353 = vunpack.c.l.b16 %v2319
    %v2354 = vunpack.c.l.b16 %v2320
    %v2355 = vunpack.c.l.b16 %v2321
    %v2356 = vpack.c.b16 %v2341, %v2340
    %v2357 = vpack.c.b16 %v2343, %v2342
    %v2358 = vpack.c.b16 %v2345, %v2344
    %v2359 = vpack.c.b16 %v2347, %v2346
    %v2360 = vpack.c.b16 %v2349, %v2348
    %v2361 = vpack.c.b16 %v2351, %v2350
    %v2362 = vpack.c.b16 %v2353, %v2352
    %v2363 = vpack.c.b16 %v2355, %v2354
    %2372 = vmatprep.subr.bf16.mxu0 0
    %2373 = vmatpush1.bf16.msra.mxu0 %v2356
    %2374 = vmatprep.subr.bf16.mxu0 0
    %2375 = vmatpush1.bf16.msra.mxu0 %v2357
    %2376 = vmatprep.subr.bf16.mxu0 0
    %2377 = vmatpush1.bf16.msra.mxu0 %v2358
    %2378 = vmatprep.subr.bf16.mxu0 0
    %2379 = vmatpush1.bf16.msra.mxu0 %v2359
    %2380 = vmatprep.subr.bf16.mxu0 0
    %2381 = vmatpush1.bf16.msra.mxu0 %v2360
    %2382 = vmatprep.subr.bf16.mxu0 0
    %2383 = vmatpush1.bf16.msra.mxu0 %v2361
    %2384 = vmatprep.subr.bf16.mxu0 0
    %2385 = vmatpush1.bf16.msra.mxu0 %v2362
    %2386 = vmatprep.subr.bf16.mxu0 0
    %2387 = vmatpush1.bf16.msra.mxu0 %v2363
    %2388 = vmatprep.subr.bf16.mxu0 0
    %2389 = vmatpush1.bf16.msra.mxu0 0
    %2390 = vmatprep.subr.bf16.mxu0 0
    %2391 = vmatpush1.bf16.msra.mxu0 0
    %2392 = vmatprep.subr.bf16.mxu0 0
    %2393 = vmatpush1.bf16.msra.mxu0 0
    %2394 = vmatprep.subr.bf16.mxu0 0
    %2395 = vmatpush1.bf16.msra.mxu0 0
    %2396 = vmatprep.subr.bf16.mxu0 0
    %2397 = vmatpush1.bf16.msra.mxu0 0
    %2398 = vmatprep.subr.bf16.mxu0 0
    %2399 = vmatpush1.bf16.msra.mxu0 0
    %2400 = vmatprep.subr.bf16.mxu0 0
    %2401 = vmatpush1.bf16.msra.mxu0 0
    %2402 = vmatprep.subr.bf16.mxu0 0
    %2403 = vmatpush1.bf16.msra.mxu0 0
    %2404 = vmatprep.mubr.bf16.mxu0 0
    %2405 = vmatmul.mubr.bf16.gmra.mrb[0].mxu0 %v2322
    %v2406 = vpop.f32.mrb[0].mxu0
    %v2407 = vadd.f32 0.0, %v2406
    %v2408 = vpop.f32.mrb[0].mxu0
    %v2409 = vpop.f32.mrb[0].mxu0
    %v2410 = vadd.f32 0.0, %v2409
    %v2411 = vpop.f32.mrb[0].mxu0
    %2412 = vmatprep.mubr.bf16.mxu0 0
    %2413 = vmatmul.mubr.bf16.gmra.mrb[0].mxu0 %v2323
    %v2414 = vpop.f32.mrb[0].mxu0
    %v2415 = vadd.f32 0.0, %v2414
    %v2416 = vpop.f32.mrb[0].mxu0
    %v2417 = vpop.f32.mrb[0].mxu0
    %v2418 = vadd.f32 0.0, %v2417
    %v2419 = vpop.f32.mrb[0].mxu0
    %2420 = vdwg.mxu0
    %v2437 = vunpack.c.l.b16 %v2284
    %v2438 = vunpack.c.l.b16 %v2285
    %v2439 = vunpack.c.l.b16 %v2286
    %v2440 = vunpack.c.l.b16 %v2287
    %v2441 = vunpack.c.l.b16 %v2288
    %v2442 = vunpack.c.l.b16 %v2289
    %v2443 = vunpack.c.l.b16 %v2290
    %v2444 = vunpack.c.l.b16 %v2291
    %v2445 = vunpack.c.l.b16 %v2292
    %v2446 = vunpack.c.l.b16 %v2293
    %v2447 = vunpack.c.l.b16 %v2294
    %v2448 = vunpack.c.l.b16 %v2295
    %v2449 = vunpack.c.l.b16 %v2296
    %v2450 = vunpack.c.l.b16 %v2297
    %v2451 = vunpack.c.l.b16 %v2298
    %v2452 = vunpack.c.l.b16 %v2299
    %v2453 = vpack.c.b16 %v2438, %v2437
    %v2454 = vpack.c.b16 %v2440, %v2439
    %v2455 = vpack.c.b16 %v2442, %v2441
    %v2456 = vpack.c.b16 %v2444, %v2443
    %v2457 = vpack.c.b16 %v2446, %v2445
    %v2458 = vpack.c.b16 %v2448, %v2447
    %v2459 = vpack.c.b16 %v2450, %v2449
    %v2460 = vpack.c.b16 %v2452, %v2451
    %2469 = vmatprep.subr.bf16.mxu0 0
    %2470 = vmatpush1.bf16.msra.mxu0 %v2453
    %2471 = vmatprep.subr.bf16.mxu0 0
    %2472 = vmatpush1.bf16.msra.mxu0 %v2454
    %2473 = vmatprep.subr.bf16.mxu0 0
    %2474 = vmatpush1.bf16.msra.mxu0 %v2455
    %2475 = vmatprep.subr.bf16.mxu0 0
    %2476 = vmatpush1.bf16.msra.mxu0 %v2456
    %2477 = vmatprep.subr.bf16.mxu0 0
    %2478 = vmatpush1.bf16.msra.mxu0 %v2457
    %2479 = vmatprep.subr.bf16.mxu0 0
    %2480 = vmatpush1.bf16.msra.mxu0 %v2458
    %2481 = vmatprep.subr.bf16.mxu0 0
    %2482 = vmatpush1.bf16.msra.mxu0 %v2459
    %2483 = vmatprep.subr.bf16.mxu0 0
    %2484 = vmatpush1.bf16.msra.mxu0 %v2460
    %2485 = vmatprep.subr.bf16.mxu0 0
    %2486 = vmatpush1.bf16.msra.mxu0 0
    %2487 = vmatprep.subr.bf16.mxu0 0
    %2488 = vmatpush1.bf16.msra.mxu0 0
    %2489 = vmatprep.subr.bf16.mxu0 0
    %2490 = vmatpush1.bf16.msra.mxu0 0
    %2491 = vmatprep.subr.bf16.mxu0 0
    %2492 = vmatpush1.bf16.msra.mxu0 0
    %2493 = vmatprep.subr.bf16.mxu0 0
    %2494 = vmatpush1.bf16.msra.mxu0 0
    %2495 = vmatprep.subr.bf16.mxu0 0
    %2496 = vmatpush1.bf16.msra.mxu0 0
    %2497 = vmatprep.subr.bf16.mxu0 0
    %2498 = vmatpush1.bf16.msra.mxu0 0
    %2499 = vmatprep.subr.bf16.mxu0 0
    %2500 = vmatpush1.bf16.msra.mxu0 0
    %2501 = vmatprep.mubr.bf16.mxu0 0
    %2502 = vmatmul.mubr.bf16.gmra.mrb[0].mxu0 %v2300
    %v2503 = vpop.f32.mrb[0].mxu0
    %v2504 = vadd.f32 %v2407, %v2503
    %v2505 = vpop.f32.mrb[0].mxu0
    %v2506 = vpop.f32.mrb[0].mxu0
    %v2507 = vadd.f32 %v2410, %v2506
    %v2508 = vpop.f32.mrb[0].mxu0
    %2509 = vmatprep.mubr.bf16.mxu0 0
    %2510 = vmatmul.mubr.bf16.gmra.mrb[0].mxu0 %v2301
    %v2511 = vpop.f32.mrb[0].mxu0
    %v2512 = vadd.f32 %v2415, %v2511
    %v2513 = vpop.f32.mrb[0].mxu0
    %v2514 = vpop.f32.mrb[0].mxu0
    %v2515 = vadd.f32 %v2418, %v2514
    %v2516 = vpop.f32.mrb[0].mxu0
    %2517 = vdwg.mxu0
    %v2518 = vld [vmem:[#allocation7 + $0x2] sm:$0xff]
    %v2519 = vld [vmem:[#allocation7 + $0xa] sm:$0xff]
    %v2520 = vld [vmem:[#allocation7 + $0x1a] sm:$0xff]
    %v2521 = vld [vmem:[#allocation7 + $0x22] sm:$0xff]
    %v2522 = vld [vmem:[#allocation10 + $0x540] sm:$0xf]
    %v2523 = vld [vmem:[#allocation10 + $0x544] sm:$0xf]
    %v2524 = vld [vmem:[#allocation10 + $0x548] sm:$0xf]
    %v2525 = vld [vmem:[#allocation10 + $0x54c] sm:$0xf]
    %v2526 = vld [vmem:[#allocation10 + $0x550] sm:$0xf]
    %v2527 = vld [vmem:[#allocation10 + $0x554] sm:$0xf]
    %v2528 = vld [vmem:[#allocation10 + $0x558] sm:$0xf]
    %v2529 = vld [vmem:[#allocation10 + $0x55c] sm:$0xf]
    %v2530 = vld [vmem:[#allocation10 + $0x560] sm:$0xf]
    %v2531 = vld [vmem:[#allocation10 + $0x564] sm:$0xf]
    %v2532 = vld [vmem:[#allocation10 + $0x568] sm:$0xf]
    %v2533 = vld [vmem:[#allocation10 + $0x56c] sm:$0xf]
    %v2534 = vld [vmem:[#allocation10 + $0x570] sm:$0xf]
    %v2535 = vld [vmem:[#allocation10 + $0x574] sm:$0xf]
    %v2536 = vld [vmem:[#allocation10 + $0x578] sm:$0xf]
    %v2537 = vld [vmem:[#allocation10 + $0x57c] sm:$0xf]
    %v2538 = vpack.c.bf16 %v2519, %v2518
    %v2539 = vpack.c.bf16 %v2521, %v2520
    %v2556 = vunpack.c.l.b16 %v2522
    %v2557 = vunpack.c.l.b16 %v2523
    %v2558 = vunpack.c.l.b16 %v2524
    %v2559 = vunpack.c.l.b16 %v2525
    %v2560 = vunpack.c.l.b16 %v2526
    %v2561 = vunpack.c.l.b16 %v2527
    %v2562 = vunpack.c.l.b16 %v2528
    %v2563 = vunpack.c.l.b16 %v2529
    %v2564 = vunpack.c.l.b16 %v2530
    %v2565 = vunpack.c.l.b16 %v2531
    %v2566 = vunpack.c.l.b16 %v2532
    %v2567 = vunpack.c.l.b16 %v2533
    %v2568 = vunpack.c.l.b16 %v2534
    %v2569 = vunpack.c.l.b16 %v2535
    %v2570 = vunpack.c.l.b16 %v2536
    %v2571 = vunpack.c.l.b16 %v2537
    %v2572 = vpack.c.b16 %v2557, %v2556
    %v2573 = vpack.c.b16 %v2559, %v2558
    %v2574 = vpack.c.b16 %v2561, %v2560
    %v2575 = vpack.c.b16 %v2563, %v2562
    %v2576 = vpack.c.b16 %v2565, %v2564
    %v2577 = vpack.c.b16 %v2567, %v2566
    %v2578 = vpack.c.b16 %v2569, %v2568
    %v2579 = vpack.c.b16 %v2571, %v2570
    %2588 = vmatprep.subr.bf16.mxu0 0
    %2589 = vmatpush1.bf16.msra.mxu0 %v2572
    %2590 = vmatprep.subr.bf16.mxu0 0
    %2591 = vmatpush1.bf16.msra.mxu0 %v2573
    %2592 = vmatprep.subr.bf16.mxu0 0
    %2593 = vmatpush1.bf16.msra.mxu0 %v2574
    %2594 = vmatprep.subr.bf16.mxu0 0
    %2595 = vmatpush1.bf16.msra.mxu0 %v2575
    %2596 = vmatprep.subr.bf16.mxu0 0
    %2597 = vmatpush1.bf16.msra.mxu0 %v2576
    %2598 = vmatprep.subr.bf16.mxu0 0
    %2599 = vmatpush1.bf16.msra.mxu0 %v2577
    %2600 = vmatprep.subr.bf16.mxu0 0
    %2601 = vmatpush1.bf16.msra.mxu0 %v2578
    %2602 = vmatprep.subr.bf16.mxu0 0
    %2603 = vmatpush1.bf16.msra.mxu0 %v2579
    %2604 = vmatprep.subr.bf16.mxu0 0
    %2605 = vmatpush1.bf16.msra.mxu0 0
    %2606 = vmatprep.subr.bf16.mxu0 0
    %2607 = vmatpush1.bf16.msra.mxu0 0
    %2608 = vmatprep.subr.bf16.mxu0 0
    %2609 = vmatpush1.bf16.msra.mxu0 0
    %2610 = vmatprep.subr.bf16.mxu0 0
    %2611 = vmatpush1.bf16.msra.mxu0 0
    %2612 = vmatprep.subr.bf16.mxu0 0
    %2613 = vmatpush1.bf16.msra.mxu0 0
    %2614 = vmatprep.subr.bf16.mxu0 0
    %2615 = vmatpush1.bf16.msra.mxu0 0
    %2616 = vmatprep.subr.bf16.mxu0 0
    %2617 = vmatpush1.bf16.msra.mxu0 0
    %2618 = vmatprep.subr.bf16.mxu0 0
    %2619 = vmatpush1.bf16.msra.mxu0 0
    %2620 = vmatprep.mubr.bf16.mxu0 0
    %2621 = vmatmul.mubr.bf16.gmra.mrb[0].mxu0 %v2538
    %v2622 = vpop.f32.mrb[0].mxu0
    %v2623 = vadd.f32 0.0, %v2622
    %v2624 = vpop.f32.mrb[0].mxu0
    %v2625 = vpop.f32.mrb[0].mxu0
    %v2626 = vadd.f32 0.0, %v2625
    %v2627 = vpop.f32.mrb[0].mxu0
    %2628 = vmatprep.mubr.bf16.mxu0 0
    %2629 = vmatmul.mubr.bf16.gmra.mrb[0].mxu0 %v2539
    %v2630 = vpop.f32.mrb[0].mxu0
    %v2631 = vadd.f32 0.0, %v2630
    %v2632 = vpop.f32.mrb[0].mxu0
    %v2633 = vpop.f32.mrb[0].mxu0
    %v2634 = vadd.f32 0.0, %v2633
    %v2635 = vpop.f32.mrb[0].mxu0
    %2636 = vdwg.mxu0
    %v2637 = vadd.f32 %v2504, %v2623
    %v2638 = vadd.f32 %v2507, %v2626
    %v2639 = vadd.f32 %v2512, %v2631
    %v2640 = vadd.f32 %v2515, %v2634
    %v2641 = vld [vmem:[#allocation8] sm:$0xff]
    %v2642 = vld [vmem:[#allocation8 + $0x8] sm:$0xff]
    %v2643 = vld [vmem:[#allocation8 + $0x18] sm:$0xff]
    %v2644 = vld [vmem:[#allocation8 + $0x20] sm:$0xff]
    %v2645 = vld [vmem:[#allocation10 + $0x580] sm:$0xf]
    %v2646 = vld [vmem:[#allocation10 + $0x584] sm:$0xf]
    %v2647 = vld [vmem:[#allocation10 + $0x588] sm:$0xf]
    %v2648 = vld [vmem:[#allocation10 + $0x58c] sm:$0xf]
    %v2649 = vld [vmem:[#allocation10 + $0x590] sm:$0xf]
    %v2650 = vld [vmem:[#allocation10 + $0x594] sm:$0xf]
    %v2651 = vld [vmem:[#allocation10 + $0x598] sm:$0xf]
    %v2652 = vld [vmem:[#allocation10 + $0x59c] sm:$0xf]
    %v2653 = vld [vmem:[#allocation10 + $0x5a0] sm:$0xf]
    %v2654 = vld [vmem:[#allocation10 + $0x5a4] sm:$0xf]
    %v2655 = vld [vmem:[#allocation10 + $0x5a8] sm:$0xf]
    %v2656 = vld [vmem:[#allocation10 + $0x5ac] sm:$0xf]
    %v2657 = vld [vmem:[#allocation10 + $0x5b0] sm:$0xf]
    %v2658 = vld [vmem:[#allocation10 + $0x5b4] sm:$0xf]
    %v2659 = vld [vmem:[#allocation10 + $0x5b8] sm:$0xf]
    %v2660 = vld [vmem:[#allocation10 + $0x5bc] sm:$0xf]
    %v2661 = vpack.c.bf16 %v2642, %v2641
    %v2662 = vpack.c.bf16 %v2644, %v2643
    %v2679 = vunpack.c.l.b16 %v2645
    %v2680 = vunpack.c.l.b16 %v2646
    %v2681 = vunpack.c.l.b16 %v2647
    %v2682 = vunpack.c.l.b16 %v2648
    %v2683 = vunpack.c.l.b16 %v2649
    %v2684 = vunpack.c.l.b16 %v2650
    %v2685 = vunpack.c.l.b16 %v2651
    %v2686 = vunpack.c.l.b16 %v2652
    %v2687 = vunpack.c.l.b16 %v2653
    %v2688 = vunpack.c.l.b16 %v2654
    %v2689 = vunpack.c.l.b16 %v2655
    %v2690 = vunpack.c.l.b16 %v2656
    %v2691 = vunpack.c.l.b16 %v2657
    %v2692 = vunpack.c.l.b16 %v2658
    %v2693 = vunpack.c.l.b16 %v2659
    %v2694 = vunpack.c.l.b16 %v2660
    %v2695 = vpack.c.b16 %v2680, %v2679
    %v2696 = vpack.c.b16 %v2682, %v2681
    %v2697 = vpack.c.b16 %v2684, %v2683
    %v2698 = vpack.c.b16 %v2686, %v2685
    %v2699 = vpack.c.b16 %v2688, %v2687
    %v2700 = vpack.c.b16 %v2690, %v2689
    %v2701 = vpack.c.b16 %v2692, %v2691
    %v2702 = vpack.c.b16 %v2694, %v2693
    %2711 = vmatprep.subr.bf16.mxu0 0
    %2712 = vmatpush1.bf16.msra.mxu0 %v2695
    %2713 = vmatprep.subr.bf16.mxu0 0
    %2714 = vmatpush1.bf16.msra.mxu0 %v2696
    %2715 = vmatprep.subr.bf16.mxu0 0
    %2716 = vmatpush1.bf16.msra.mxu0 %v2697
    %2717 = vmatprep.subr.bf16.mxu0 0
    %2718 = vmatpush1.bf16.msra.mxu0 %v2698
    %2719 = vmatprep.subr.bf16.mxu0 0
    %2720 = vmatpush1.bf16.msra.mxu0 %v2699
    %2721 = vmatprep.subr.bf16.mxu0 0
    %2722 = vmatpush1.bf16.msra.mxu0 %v2700
    %2723 = vmatprep.subr.bf16.mxu0 0
    %2724 = vmatpush1.bf16.msra.mxu0 %v2701
    %2725 = vmatprep.subr.bf16.mxu0 0
    %2726 = vmatpush1.bf16.msra.mxu0 %v2702
    %2727 = vmatprep.subr.bf16.mxu0 0
    %2728 = vmatpush1.bf16.msra.mxu0 0
    %2729 = vmatprep.subr.bf16.mxu0 0
    %2730 = vmatpush1.bf16.msra.mxu0 0
    %2731 = vmatprep.subr.bf16.mxu0 0
    %2732 = vmatpush1.bf16.msra.mxu0 0
    %2733 = vmatprep.subr.bf16.mxu0 0
    %2734 = vmatpush1.bf16.msra.mxu0 0
    %2735 = vmatprep.subr.bf16.mxu0 0
    %2736 = vmatpush1.bf16.msra.mxu0 0
    %2737 = vmatprep.subr.bf16.mxu0 0
    %2738 = vmatpush1.bf16.msra.mxu0 0
    %2739 = vmatprep.subr.bf16.mxu0 0
    %2740 = vmatpush1.bf16.msra.mxu0 0
    %2741 = vmatprep.subr.bf16.mxu0 0
    %2742 = vmatpush1.bf16.msra.mxu0 0
    %2743 = vmatprep.mubr.bf16.mxu0 0
    %2744 = vmatmul.mubr.bf16.gmra.mrb[0].mxu0 %v2661
    %v2745 = vpop.f32.mrb[0].mxu0
    %v2746 = vadd.f32 0.0, %v2745
    %v2747 = vpop.f32.mrb[0].mxu0
    %v2748 = vpop.f32.mrb[0].mxu0
    %v2749 = vadd.f32 0.0, %v2748
    %v2750 = vpop.f32.mrb[0].mxu0
    %2751 = vmatprep.mubr.bf16.mxu0 0
    %2752 = vmatmul.mubr.bf16.gmra.mrb[0].mxu0 %v2662
    %v2753 = vpop.f32.mrb[0].mxu0
    %v2754 = vadd.f32 0.0, %v2753
    %v2755 = vpop.f32.mrb[0].mxu0
    %v2756 = vpop.f32.mrb[0].mxu0
    %v2757 = vadd.f32 0.0, %v2756
    %v2758 = vpop.f32.mrb[0].mxu0
    %2759 = vdwg.mxu0
    %v2760 = vadd.f32 %v2637, %v2746
    %v2761 = vadd.f32 %v2638, %v2749
    %v2762 = vadd.f32 %v2639, %v2754
    %v2763 = vadd.f32 %v2640, %v2757
    %v2764 = vld [vmem:[#allocation8 + $0x1] sm:$0xff]
    %v2765 = vld [vmem:[#allocation8 + $0x9] sm:$0xff]
    %v2766 = vld [vmem:[#allocation8 + $0x19] sm:$0xff]
    %v2767 = vld [vmem:[#allocation8 + $0x21] sm:$0xff]
    %v2768 = vld [vmem:[#allocation10 + $0x5c0] sm:$0xf]
    %v2769 = vld [vmem:[#allocation10 + $0x5c4] sm:$0xf]
    %v2770 = vld [vmem:[#allocation10 + $0x5c8] sm:$0xf]
    %v2771 = vld [vmem:[#allocation10 + $0x5cc] sm:$0xf]
    %v2772 = vld [vmem:[#allocation10 + $0x5d0] sm:$0xf]
    %v2773 = vld [vmem:[#allocation10 + $0x5d4] sm:$0xf]
    %v2774 = vld [vmem:[#allocation10 + $0x5d8] sm:$0xf]
    %v2775 = vld [vmem:[#allocation10 + $0x5dc] sm:$0xf]
    %v2776 = vld [vmem:[#allocation10 + $0x5e0] sm:$0xf]
    %v2777 = vld [vmem:[#allocation10 + $0x5e4] sm:$0xf]
    %v2778 = vld [vmem:[#allocation10 + $0x5e8] sm:$0xf]
    %v2779 = vld [vmem:[#allocation10 + $0x5ec] sm:$0xf]
    %v2780 = vld [vmem:[#allocation10 + $0x5f0] sm:$0xf]
    %v2781 = vld [vmem:[#allocation10 + $0x5f4] sm:$0xf]
    %v2782 = vld [vmem:[#allocation10 + $0x5f8] sm:$0xf]
    %v2783 = vld [vmem:[#allocation10 + $0x5fc] sm:$0xf]
    %v2784 = vpack.c.bf16 %v2765, %v2764
    %v2785 = vpack.c.bf16 %v2767, %v2766
    %v2802 = vunpack.c.l.b16 %v2768
    %v2803 = vunpack.c.l.b16 %v2769
    %v2804 = vunpack.c.l.b16 %v2770
    %v2805 = vunpack.c.l.b16 %v2771
    %v2806 = vunpack.c.l.b16 %v2772
    %v2807 = vunpack.c.l.b16 %v2773
    %v2808 = vunpack.c.l.b16 %v2774
    %v2809 = vunpack.c.l.b16 %v2775
    %v2810 = vunpack.c.l.b16 %v2776
    %v2811 = vunpack.c.l.b16 %v2777
    %v2812 = vunpack.c.l.b16 %v2778
    %v2813 = vunpack.c.l.b16 %v2779
    %v2814 = vunpack.c.l.b16 %v2780
    %v2815 = vunpack.c.l.b16 %v2781
    %v2816 = vunpack.c.l.b16 %v2782
    %v2817 = vunpack.c.l.b16 %v2783
    %v2818 = vpack.c.b16 %v2803, %v2802
    %v2819 = vpack.c.b16 %v2805, %v2804
    %v2820 = vpack.c.b16 %v2807, %v2806
    %v2821 = vpack.c.b16 %v2809, %v2808
    %v2822 = vpack.c.b16 %v2811, %v2810
    %v2823 = vpack.c.b16 %v2813, %v2812
    %v2824 = vpack.c.b16 %v2815, %v2814
    %v2825 = vpack.c.b16 %v2817, %v2816
    %2834 = vmatprep.subr.bf16.mxu0 0
    %2835 = vmatpush1.bf16.msra.mxu0 %v2818
    %2836 = vmatprep.subr.bf16.mxu0 0
    %2837 = vmatpush1.bf16.msra.mxu0 %v2819
    %2838 = vmatprep.subr.bf16.mxu0 0
    %2839 = vmatpush1.bf16.msra.mxu0 %v2820
    %2840 = vmatprep.subr.bf16.mxu0 0
    %2841 = vmatpush1.bf16.msra.mxu0 %v2821
    %2842 = vmatprep.subr.bf16.mxu0 0
    %2843 = vmatpush1.bf16.msra.mxu0 %v2822
    %2844 = vmatprep.subr.bf16.mxu0 0
    %2845 = vmatpush1.bf16.msra.mxu0 %v2823
    %2846 = vmatprep.subr.bf16.mxu0 0
    %2847 = vmatpush1.bf16.msra.mxu0 %v2824
    %2848 = vmatprep.subr.bf16.mxu0 0
    %2849 = vmatpush1.bf16.msra.mxu0 %v2825
    %2850 = vmatprep.subr.bf16.mxu0 0
    %2851 = vmatpush1.bf16.msra.mxu0 0
    %2852 = vmatprep.subr.bf16.mxu0 0
    %2853 = vmatpush1.bf16.msra.mxu0 0
    %2854 = vmatprep.subr.bf16.mxu0 0
    %2855 = vmatpush1.bf16.msra.mxu0 0
    %2856 = vmatprep.subr.bf16.mxu0 0
    %2857 = vmatpush1.bf16.msra.mxu0 0
    %2858 = vmatprep.subr.bf16.mxu0 0
    %2859 = vmatpush1.bf16.msra.mxu0 0
    %2860 = vmatprep.subr.bf16.mxu0 0
    %2861 = vmatpush1.bf16.msra.mxu0 0
    %2862 = vmatprep.subr.bf16.mxu0 0
    %2863 = vmatpush1.bf16.msra.mxu0 0
    %2864 = vmatprep.subr.bf16.mxu0 0
    %2865 = vmatpush1.bf16.msra.mxu0 0
    %2866 = vmatprep.mubr.bf16.mxu0 0
    %2867 = vmatmul.mubr.bf16.gmra.mrb[0].mxu0 %v2784
    %v2868 = vpop.f32.mrb[0].mxu0
    %v2869 = vadd.f32 0.0, %v2868
    %v2870 = vpop.f32.mrb[0].mxu0
    %v2871 = vpop.f32.mrb[0].mxu0
    %v2872 = vadd.f32 0.0, %v2871
    %v2873 = vpop.f32.mrb[0].mxu0
    %2874 = vmatprep.mubr.bf16.mxu0 0
    %2875 = vmatmul.mubr.bf16.gmra.mrb[0].mxu0 %v2785
    %v2876 = vpop.f32.mrb[0].mxu0
    %v2877 = vadd.f32 0.0, %v2876
    %v2878 = vpop.f32.mrb[0].mxu0
    %v2879 = vpop.f32.mrb[0].mxu0
    %v2880 = vadd.f32 0.0, %v2879
    %v2881 = vpop.f32.mrb[0].mxu0
    %2882 = vdwg.mxu0
    %v2883 = vadd.f32 %v2760, %v2869
    %v2884 = vadd.f32 %v2761, %v2872
    %v2885 = vadd.f32 %v2762, %v2877
    %v2886 = vadd.f32 %v2763, %v2880
    %v2887 = vld [vmem:[#allocation8 + $0x2] sm:$0xff]
    %v2888 = vld [vmem:[#allocation8 + $0xa] sm:$0xff]
    %v2889 = vld [vmem:[#allocation8 + $0x1a] sm:$0xff]
    %v2890 = vld [vmem:[#allocation8 + $0x22] sm:$0xff]
    %v2891 = vld [vmem:[#allocation10 + $0x600] sm:$0xf]
    %v2892 = vld [vmem:[#allocation10 + $0x604] sm:$0xf]
    %v2893 = vld [vmem:[#allocation10 + $0x608] sm:$0xf]
    %v2894 = vld [vmem:[#allocation10 + $0x60c] sm:$0xf]
    %v2895 = vld [vmem:[#allocation10 + $0x610] sm:$0xf]
    %v2896 = vld [vmem:[#allocation10 + $0x614] sm:$0xf]
    %v2897 = vld [vmem:[#allocation10 + $0x618] sm:$0xf]
    %v2898 = vld [vmem:[#allocation10 + $0x61c] sm:$0xf]
    %v2899 = vld [vmem:[#allocation10 + $0x620] sm:$0xf]
    %v2900 = vld [vmem:[#allocation10 + $0x624] sm:$0xf]
    %v2901 = vld [vmem:[#allocation10 + $0x628] sm:$0xf]
    %v2902 = vld [vmem:[#allocation10 + $0x62c] sm:$0xf]
    %v2903 = vld [vmem:[#allocation10 + $0x630] sm:$0xf]
    %v2904 = vld [vmem:[#allocation10 + $0x634] sm:$0xf]
    %v2905 = vld [vmem:[#allocation10 + $0x638] sm:$0xf]
    %v2906 = vld [vmem:[#allocation10 + $0x63c] sm:$0xf]
    %v2907 = vpack.c.bf16 %v2888, %v2887
    %v2908 = vpack.c.bf16 %v2890, %v2889
    %v2925 = vunpack.c.l.b16 %v2891
    %v2926 = vunpack.c.l.b16 %v2892
    %v2927 = vunpack.c.l.b16 %v2893
    %v2928 = vunpack.c.l.b16 %v2894
    %v2929 = vunpack.c.l.b16 %v2895
    %v2930 = vunpack.c.l.b16 %v2896
    %v2931 = vunpack.c.l.b16 %v2897
    %v2932 = vunpack.c.l.b16 %v2898
    %v2933 = vunpack.c.l.b16 %v2899
    %v2934 = vunpack.c.l.b16 %v2900
    %v2935 = vunpack.c.l.b16 %v2901
    %v2936 = vunpack.c.l.b16 %v2902
    %v2937 = vunpack.c.l.b16 %v2903
    %v2938 = vunpack.c.l.b16 %v2904
    %v2939 = vunpack.c.l.b16 %v2905
    %v2940 = vunpack.c.l.b16 %v2906
    %v2941 = vpack.c.b16 %v2926, %v2925
    %v2942 = vpack.c.b16 %v2928, %v2927
    %v2943 = vpack.c.b16 %v2930, %v2929
    %v2944 = vpack.c.b16 %v2932, %v2931
    %v2945 = vpack.c.b16 %v2934, %v2933
    %v2946 = vpack.c.b16 %v2936, %v2935
    %v2947 = vpack.c.b16 %v2938, %v2937
    %v2948 = vpack.c.b16 %v2940, %v2939
    %2957 = vmatprep.subr.bf16.mxu0 0
    %2958 = vmatpush1.bf16.msra.mxu0 %v2941
    %2959 = vmatprep.subr.bf16.mxu0 0
    %2960 = vmatpush1.bf16.msra.mxu0 %v2942
    %2961 = vmatprep.subr.bf16.mxu0 0
    %2962 = vmatpush1.bf16.msra.mxu0 %v2943
    %2963 = vmatprep.subr.bf16.mxu0 0
    %2964 = vmatpush1.bf16.msra.mxu0 %v2944
    %2965 = vmatprep.subr.bf16.mxu0 0
    %2966 = vmatpush1.bf16.msra.mxu0 %v2945
    %2967 = vmatprep.subr.bf16.mxu0 0
    %2968 = vmatpush1.bf16.msra.mxu0 %v2946
    %2969 = vmatprep.subr.bf16.mxu0 0
    %2970 = vmatpush1.bf16.msra.mxu0 %v2947
    %2971 = vmatprep.subr.bf16.mxu0 0
    %2972 = vmatpush1.bf16.msra.mxu0 %v2948
    %2973 = vmatprep.subr.bf16.mxu0 0
    %2974 = vmatpush1.bf16.msra.mxu0 0
    %2975 = vmatprep.subr.bf16.mxu0 0
    %2976 = vmatpush1.bf16.msra.mxu0 0
    %2977 = vmatprep.subr.bf16.mxu0 0
    %2978 = vmatpush1.bf16.msra.mxu0 0
    %2979 = vmatprep.subr.bf16.mxu0 0
    %2980 = vmatpush1.bf16.msra.mxu0 0
    %2981 = vmatprep.subr.bf16.mxu0 0
    %2982 = vmatpush1.bf16.msra.mxu0 0
    %2983 = vmatprep.subr.bf16.mxu0 0
    %2984 = vmatpush1.bf16.msra.mxu0 0
    %2985 = vmatprep.subr.bf16.mxu0 0
    %2986 = vmatpush1.bf16.msra.mxu0 0
    %2987 = vmatprep.subr.bf16.mxu0 0
    %2988 = vmatpush1.bf16.msra.mxu0 0
    %2989 = vmatprep.mubr.bf16.mxu0 0
    %2990 = vmatmul.mubr.bf16.gmra.mrb[0].mxu0 %v2907
    %v2991 = vpop.f32.mrb[0].mxu0
    %v2992 = vadd.f32 0.0, %v2991
    %v2993 = vpop.f32.mrb[0].mxu0
    %v2994 = vpop.f32.mrb[0].mxu0
    %v2995 = vadd.f32 0.0, %v2994
    %v2996 = vpop.f32.mrb[0].mxu0
    %2997 = vmatprep.mubr.bf16.mxu0 0
    %2998 = vmatmul.mubr.bf16.gmra.mrb[0].mxu0 %v2908
    %v2999 = vpop.f32.mrb[0].mxu0
    %v3000 = vadd.f32 0.0, %v2999
    %v3001 = vpop.f32.mrb[0].mxu0
    %v3002 = vpop.f32.mrb[0].mxu0
    %v3003 = vadd.f32 0.0, %v3002
    %v3004 = vpop.f32.mrb[0].mxu0
    %3005 = vdwg.mxu0
    %v3006 = vadd.f32 %v2883, %v2992
    %v3007 = vadd.f32 %v2884, %v2995
    %v3008 = vadd.f32 %v2885, %v3000
    %v3009 = vadd.f32 %v2886, %v3003
    %v3010 = vld [vmem:[%s4 + $0x6] sm:$0x1]
    %v3011 = vlaneseq
    %v3012 = vshrl.u32 %v3011, 7
    %v3013 = vsub.s32 0, %v3012
    %v3014 = vrot.slane %v3010, %v3013
    %v3015 = vadd.f32 %v3006, %v3014
    %v3016 = vadd.f32 %v3007, %v3014
    %v3017 = vadd.f32 %v3008, %v3014
    %v3018 = vadd.f32 %v3009, %v3014
    %v3019 = vmax.f32 %v3015, 0.0
    %v3020 = vmax.f32 %v3016, 0.0
    %v3021 = vmax.f32 %v3017, 0.0
    %v3022 = vmax.f32 %v3018, 0.0
    %3023 = vst [vmem:[#allocation9 + $0x1] sm:$0xff] %v3019
    %3024 = vst [vmem:[#allocation9 + $0x9] sm:$0xff] %v3020
    %3025 = vst [vmem:[#allocation9 + $0x19] sm:$0xff] %v3021
    %3026 = vst [vmem:[#allocation9 + $0x21] sm:$0xff] %v3022
    %v3027 = vld [vmem:[#allocation9] sm:$0xff]
    %v3028 = vld [vmem:[#allocation9 + $0x8] sm:$0xff]
    %v3029 = vld [vmem:[#allocation9 + $0x18] sm:$0xff]
    %v3030 = vld [vmem:[#allocation9 + $0x20] sm:$0xff]
    %v3031 = vld [vmem:[#allocation10 + $0x640] sm:$0xf]
    %v3032 = vld [vmem:[#allocation10 + $0x644] sm:$0xf]
    %v3033 = vld [vmem:[#allocation10 + $0x648] sm:$0xf]
    %v3034 = vld [vmem:[#allocation10 + $0x64c] sm:$0xf]
    %v3035 = vld [vmem:[#allocation10 + $0x650] sm:$0xf]
    %v3036 = vld [vmem:[#allocation10 + $0x654] sm:$0xf]
    %v3037 = vld [vmem:[#allocation10 + $0x658] sm:$0xf]
    %v3038 = vld [vmem:[#allocation10 + $0x65c] sm:$0xf]
    %v3039 = vld [vmem:[#allocation10 + $0x660] sm:$0xf]
    %v3040 = vld [vmem:[#allocation10 + $0x664] sm:$0xf]
    %v3041 = vld [vmem:[#allocation10 + $0x668] sm:$0xf]
    %v3042 = vld [vmem:[#allocation10 + $0x66c] sm:$0xf]
    %v3043 = vld [vmem:[#allocation10 + $0x670] sm:$0xf]
    %v3044 = vld [vmem:[#allocation10 + $0x674] sm:$0xf]
    %v3045 = vld [vmem:[#allocation10 + $0x678] sm:$0xf]
    %v3046 = vld [vmem:[#allocation10 + $0x67c] sm:$0xf]
    %v3047 = vpack.c.bf16 %v3028, %v3027
    %v3048 = vpack.c.bf16 %v3030, %v3029
    %v3049 = vld [vmem:[#allocation9 + $0x1] sm:$0xff]
    %v3050 = vld [vmem:[#allocation9 + $0x9] sm:$0xff]
    %v3051 = vld [vmem:[#allocation9 + $0x19] sm:$0xff]
    %v3052 = vld [vmem:[#allocation9 + $0x21] sm:$0xff]
    %v3053 = vld [vmem:[#allocation10 + $0x680] sm:$0xf]
    %v3054 = vld [vmem:[#allocation10 + $0x684] sm:$0xf]
    %v3055 = vld [vmem:[#allocation10 + $0x688] sm:$0xf]
    %v3056 = vld [vmem:[#allocation10 + $0x68c] sm:$0xf]
    %v3057 = vld [vmem:[#allocation10 + $0x690] sm:$0xf]
    %v3058 = vld [vmem:[#allocation10 + $0x694] sm:$0xf]
    %v3059 = vld [vmem:[#allocation10 + $0x698] sm:$0xf]
    %v3060 = vld [vmem:[#allocation10 + $0x69c] sm:$0xf]
    %v3061 = vld [vmem:[#allocation10 + $0x6a0] sm:$0xf]
    %v3062 = vld [vmem:[#allocation10 + $0x6a4] sm:$0xf]
    %v3063 = vld [vmem:[#allocation10 + $0x6a8] sm:$0xf]
    %v3064 = vld [vmem:[#allocation10 + $0x6ac] sm:$0xf]
    %v3065 = vld [vmem:[#allocation10 + $0x6b0] sm:$0xf]
    %v3066 = vld [vmem:[#allocation10 + $0x6b4] sm:$0xf]
    %v3067 = vld [vmem:[#allocation10 + $0x6b8] sm:$0xf]
    %v3068 = vld [vmem:[#allocation10 + $0x6bc] sm:$0xf]
    %v3069 = vpack.c.bf16 %v3050, %v3049
    %v3070 = vpack.c.bf16 %v3052, %v3051
    %v3087 = vunpack.c.l.b16 %v3053
    %v3088 = vunpack.c.l.b16 %v3054
    %v3089 = vunpack.c.l.b16 %v3055
    %v3090 = vunpack.c.l.b16 %v3056
    %v3091 = vunpack.c.l.b16 %v3057
    %v3092 = vunpack.c.l.b16 %v3058
    %v3093 = vunpack.c.l.b16 %v3059
    %v3094 = vunpack.c.l.b16 %v3060
    %v3095 = vunpack.c.l.b16 %v3061
    %v3096 = vunpack.c.l.b16 %v3062
    %v3097 = vunpack.c.l.b16 %v3063
    %v3098 = vunpack.c.l.b16 %v3064
    %v3099 = vunpack.c.l.b16 %v3065
    %v3100 = vunpack.c.l.b16 %v3066
    %v3101 = vunpack.c.l.b16 %v3067
    %v3102 = vunpack.c.l.b16 %v3068
    %v3103 = vpack.c.b16 %v3088, %v3087
    %v3104 = vpack.c.b16 %v3090, %v3089
    %v3105 = vpack.c.b16 %v3092, %v3091
    %v3106 = vpack.c.b16 %v3094, %v3093
    %v3107 = vpack.c.b16 %v3096, %v3095
    %v3108 = vpack.c.b16 %v3098, %v3097
    %v3109 = vpack.c.b16 %v3100, %v3099
    %v3110 = vpack.c.b16 %v3102, %v3101
    %3119 = vmatprep.subr.bf16.mxu0 0
    %3120 = vmatpush1.bf16.msra.mxu0 %v3103
    %3121 = vmatprep.subr.bf16.mxu0 0
    %3122 = vmatpush1.bf16.msra.mxu0 %v3104
    %3123 = vmatprep.subr.bf16.mxu0 0
    %3124 = vmatpush1.bf16.msra.mxu0 %v3105
    %3125 = vmatprep.subr.bf16.mxu0 0
    %3126 = vmatpush1.bf16.msra.mxu0 %v3106
    %3127 = vmatprep.subr.bf16.mxu0 0
    %3128 = vmatpush1.bf16.msra.mxu0 %v3107
    %3129 = vmatprep.subr.bf16.mxu0 0
    %3130 = vmatpush1.bf16.msra.mxu0 %v3108
    %3131 = vmatprep.subr.bf16.mxu0 0
    %3132 = vmatpush1.bf16.msra.mxu0 %v3109
    %3133 = vmatprep.subr.bf16.mxu0 0
    %3134 = vmatpush1.bf16.msra.mxu0 %v3110
    %3135 = vmatprep.subr.bf16.mxu0 0
    %3136 = vmatpush1.bf16.msra.mxu0 0
    %3137 = vmatprep.subr.bf16.mxu0 0
    %3138 = vmatpush1.bf16.msra.mxu0 0
    %3139 = vmatprep.subr.bf16.mxu0 0
    %3140 = vmatpush1.bf16.msra.mxu0 0
    %3141 = vmatprep.subr.bf16.mxu0 0
    %3142 = vmatpush1.bf16.msra.mxu0 0
    %3143 = vmatprep.subr.bf16.mxu0 0
    %3144 = vmatpush1.bf16.msra.mxu0 0
    %3145 = vmatprep.subr.bf16.mxu0 0
    %3146 = vmatpush1.bf16.msra.mxu0 0
    %3147 = vmatprep.subr.bf16.mxu0 0
    %3148 = vmatpush1.bf16.msra.mxu0 0
    %3149 = vmatprep.subr.bf16.mxu0 0
    %3150 = vmatpush1.bf16.msra.mxu0 0
    %3151 = vmatprep.mubr.bf16.mxu0 0
    %3152 = vmatmul.mubr.bf16.gmra.mrb[0].mxu0 %v3069
    %v3153 = vpop.f32.mrb[0].mxu0
    %v3154 = vadd.f32 0.0, %v3153
    %v3155 = vpop.f32.mrb[0].mxu0
    %v3156 = vpop.f32.mrb[0].mxu0
    %v3157 = vadd.f32 0.0, %v3156
    %v3158 = vpop.f32.mrb[0].mxu0
    %3159 = vmatprep.mubr.bf16.mxu0 0
    %3160 = vmatmul.mubr.bf16.gmra.mrb[0].mxu0 %v3070
    %v3161 = vpop.f32.mrb[0].mxu0
    %v3162 = vadd.f32 0.0, %v3161
    %v3163 = vpop.f32.mrb[0].mxu0
    %v3164 = vpop.f32.mrb[0].mxu0
    %v3165 = vadd.f32 0.0, %v3164
    %v3166 = vpop.f32.mrb[0].mxu0
    %3167 = vdwg.mxu0
    %v3184 = vunpack.c.l.b16 %v3031
    %v3185 = vunpack.c.l.b16 %v3032
    %v3186 = vunpack.c.l.b16 %v3033
    %v3187 = vunpack.c.l.b16 %v3034
    %v3188 = vunpack.c.l.b16 %v3035
    %v3189 = vunpack.c.l.b16 %v3036
    %v3190 = vunpack.c.l.b16 %v3037
    %v3191 = vunpack.c.l.b16 %v3038
    %v3192 = vunpack.c.l.b16 %v3039
    %v3193 = vunpack.c.l.b16 %v3040
    %v3194 = vunpack.c.l.b16 %v3041
    %v3195 = vunpack.c.l.b16 %v3042
    %v3196 = vunpack.c.l.b16 %v3043
    %v3197 = vunpack.c.l.b16 %v3044
    %v3198 = vunpack.c.l.b16 %v3045
    %v3199 = vunpack.c.l.b16 %v3046
    %v3200 = vpack.c.b16 %v3185, %v3184
    %v3201 = vpack.c.b16 %v3187, %v3186
    %v3202 = vpack.c.b16 %v3189, %v3188
    %v3203 = vpack.c.b16 %v3191, %v3190
    %v3204 = vpack.c.b16 %v3193, %v3192
    %v3205 = vpack.c.b16 %v3195, %v3194
    %v3206 = vpack.c.b16 %v3197, %v3196
    %v3207 = vpack.c.b16 %v3199, %v3198
    %3216 = vmatprep.subr.bf16.mxu0 0
    %3217 = vmatpush1.bf16.msra.mxu0 %v3200
    %3218 = vmatprep.subr.bf16.mxu0 0
    %3219 = vmatpush1.bf16.msra.mxu0 %v3201
    %3220 = vmatprep.subr.bf16.mxu0 0
    %3221 = vmatpush1.bf16.msra.mxu0 %v3202
    %3222 = vmatprep.subr.bf16.mxu0 0
    %3223 = vmatpush1.bf16.msra.mxu0 %v3203
    %3224 = vmatprep.subr.bf16.mxu0 0
    %3225 = vmatpush1.bf16.msra.mxu0 %v3204
    %3226 = vmatprep.subr.bf16.mxu0 0
    %3227 = vmatpush1.bf16.msra.mxu0 %v3205
    %3228 = vmatprep.subr.bf16.mxu0 0
    %3229 = vmatpush1.bf16.msra.mxu0 %v3206
    %3230 = vmatprep.subr.bf16.mxu0 0
    %3231 = vmatpush1.bf16.msra.mxu0 %v3207
    %3232 = vmatprep.subr.bf16.mxu0 0
    %3233 = vmatpush1.bf16.msra.mxu0 0
    %3234 = vmatprep.subr.bf16.mxu0 0
    %3235 = vmatpush1.bf16.msra.mxu0 0
    %3236 = vmatprep.subr.bf16.mxu0 0
    %3237 = vmatpush1.bf16.msra.mxu0 0
    %3238 = vmatprep.subr.bf16.mxu0 0
    %3239 = vmatpush1.bf16.msra.mxu0 0
    %3240 = vmatprep.subr.bf16.mxu0 0
    %3241 = vmatpush1.bf16.msra.mxu0 0
    %3242 = vmatprep.subr.bf16.mxu0 0
    %3243 = vmatpush1.bf16.msra.mxu0 0
    %3244 = vmatprep.subr.bf16.mxu0 0
    %3245 = vmatpush1.bf16.msra.mxu0 0
    %3246 = vmatprep.subr.bf16.mxu0 0
    %3247 = vmatpush1.bf16.msra.mxu0 0
    %3248 = vmatprep.mubr.bf16.mxu0 0
    %3249 = vmatmul.mubr.bf16.gmra.mrb[0].mxu0 %v3047
    %v3250 = vpop.f32.mrb[0].mxu0
    %v3251 = vadd.f32 %v3154, %v3250
    %v3252 = vpop.f32.mrb[0].mxu0
    %v3253 = vpop.f32.mrb[0].mxu0
    %v3254 = vadd.f32 %v3157, %v3253
    %v3255 = vpop.f32.mrb[0].mxu0
    %3256 = vmatprep.mubr.bf16.mxu0 0
    %3257 = vmatmul.mubr.bf16.gmra.mrb[0].mxu0 %v3048
    %v3258 = vpop.f32.mrb[0].mxu0
    %v3259 = vadd.f32 %v3162, %v3258
    %v3260 = vpop.f32.mrb[0].mxu0
    %v3261 = vpop.f32.mrb[0].mxu0
    %v3262 = vadd.f32 %v3165, %v3261
    %v3263 = vpop.f32.mrb[0].mxu0
    %3264 = vdwg.mxu0
    %v3265 = vld [vmem:[#allocation9 + $0x2] sm:$0xff]
    %v3266 = vld [vmem:[#allocation9 + $0xa] sm:$0xff]
    %v3267 = vld [vmem:[#allocation9 + $0x1a] sm:$0xff]
    %v3268 = vld [vmem:[#allocation9 + $0x22] sm:$0xff]
    %v3269 = vld [vmem:[#allocation10 + $0x6c0] sm:$0xf]
    %v3270 = vld [vmem:[#allocation10 + $0x6c4] sm:$0xf]
    %v3271 = vld [vmem:[#allocation10 + $0x6c8] sm:$0xf]
    %v3272 = vld [vmem:[#allocation10 + $0x6cc] sm:$0xf]
    %v3273 = vld [vmem:[#allocation10 + $0x6d0] sm:$0xf]
    %v3274 = vld [vmem:[#allocation10 + $0x6d4] sm:$0xf]
    %v3275 = vld [vmem:[#allocation10 + $0x6d8] sm:$0xf]
    %v3276 = vld [vmem:[#allocation10 + $0x6dc] sm:$0xf]
    %v3277 = vld [vmem:[#allocation10 + $0x6e0] sm:$0xf]
    %v3278 = vld [vmem:[#allocation10 + $0x6e4] sm:$0xf]
    %v3279 = vld [vmem:[#allocation10 + $0x6e8] sm:$0xf]
    %v3280 = vld [vmem:[#allocation10 + $0x6ec] sm:$0xf]
    %v3281 = vld [vmem:[#allocation10 + $0x6f0] sm:$0xf]
    %v3282 = vld [vmem:[#allocation10 + $0x6f4] sm:$0xf]
    %v3283 = vld [vmem:[#allocation10 + $0x6f8] sm:$0xf]
    %v3284 = vld [vmem:[#allocation10 + $0x6fc] sm:$0xf]
    %v3285 = vpack.c.bf16 %v3266, %v3265
    %v3286 = vpack.c.bf16 %v3268, %v3267
    %v3303 = vunpack.c.l.b16 %v3269
    %v3304 = vunpack.c.l.b16 %v3270
    %v3305 = vunpack.c.l.b16 %v3271
    %v3306 = vunpack.c.l.b16 %v3272
    %v3307 = vunpack.c.l.b16 %v3273
    %v3308 = vunpack.c.l.b16 %v3274
    %v3309 = vunpack.c.l.b16 %v3275
    %v3310 = vunpack.c.l.b16 %v3276
    %v3311 = vunpack.c.l.b16 %v3277
    %v3312 = vunpack.c.l.b16 %v3278
    %v3313 = vunpack.c.l.b16 %v3279
    %v3314 = vunpack.c.l.b16 %v3280
    %v3315 = vunpack.c.l.b16 %v3281
    %v3316 = vunpack.c.l.b16 %v3282
    %v3317 = vunpack.c.l.b16 %v3283
    %v3318 = vunpack.c.l.b16 %v3284
    %v3319 = vpack.c.b16 %v3304, %v3303
    %v3320 = vpack.c.b16 %v3306, %v3305
    %v3321 = vpack.c.b16 %v3308, %v3307
    %v3322 = vpack.c.b16 %v3310, %v3309
    %v3323 = vpack.c.b16 %v3312, %v3311
    %v3324 = vpack.c.b16 %v3314, %v3313
    %v3325 = vpack.c.b16 %v3316, %v3315
    %v3326 = vpack.c.b16 %v3318, %v3317
    %3335 = vmatprep.subr.bf16.mxu0 0
    %3336 = vmatpush1.bf16.msra.mxu0 %v3319
    %3337 = vmatprep.subr.bf16.mxu0 0
    %3338 = vmatpush1.bf16.msra.mxu0 %v3320
    %3339 = vmatprep.subr.bf16.mxu0 0
    %3340 = vmatpush1.bf16.msra.mxu0 %v3321
    %3341 = vmatprep.subr.bf16.mxu0 0
    %3342 = vmatpush1.bf16.msra.mxu0 %v3322
    %3343 = vmatprep.subr.bf16.mxu0 0
    %3344 = vmatpush1.bf16.msra.mxu0 %v3323
    %3345 = vmatprep.subr.bf16.mxu0 0
    %3346 = vmatpush1.bf16.msra.mxu0 %v3324
    %3347 = vmatprep.subr.bf16.mxu0 0
    %3348 = vmatpush1.bf16.msra.mxu0 %v3325
    %3349 = vmatprep.subr.bf16.mxu0 0
    %3350 = vmatpush1.bf16.msra.mxu0 %v3326
    %3351 = vmatprep.subr.bf16.mxu0 0
    %3352 = vmatpush1.bf16.msra.mxu0 0
    %3353 = vmatprep.subr.bf16.mxu0 0
    %3354 = vmatpush1.bf16.msra.mxu0 0
    %3355 = vmatprep.subr.bf16.mxu0 0
    %3356 = vmatpush1.bf16.msra.mxu0 0
    %3357 = vmatprep.subr.bf16.mxu0 0
    %3358 = vmatpush1.bf16.msra.mxu0 0
    %3359 = vmatprep.subr.bf16.mxu0 0
    %3360 = vmatpush1.bf16.msra.mxu0 0
    %3361 = vmatprep.subr.bf16.mxu0 0
    %3362 = vmatpush1.bf16.msra.mxu0 0
    %3363 = vmatprep.subr.bf16.mxu0 0
    %3364 = vmatpush1.bf16.msra.mxu0 0
    %3365 = vmatprep.subr.bf16.mxu0 0
    %3366 = vmatpush1.bf16.msra.mxu0 0
    %3367 = vmatprep.mubr.bf16.mxu0 0
    %3368 = vmatmul.mubr.bf16.gmra.mrb[0].mxu0 %v3285
    %v3369 = vpop.f32.mrb[0].mxu0
    %v3370 = vadd.f32 0.0, %v3369
    %v3371 = vpop.f32.mrb[0].mxu0
    %v3372 = vpop.f32.mrb[0].mxu0
    %v3373 = vadd.f32 0.0, %v3372
    %v3374 = vpop.f32.mrb[0].mxu0
    %3375 = vmatprep.mubr.bf16.mxu0 0
    %3376 = vmatmul.mubr.bf16.gmra.mrb[0].mxu0 %v3286
    %v3377 = vpop.f32.mrb[0].mxu0
    %v3378 = vadd.f32 0.0, %v3377
    %v3379 = vpop.f32.mrb[0].mxu0
    %v3380 = vpop.f32.mrb[0].mxu0
    %v3381 = vadd.f32 0.0, %v3380
    %v3382 = vpop.f32.mrb[0].mxu0
    %3383 = vdwg.mxu0
    %v3384 = vadd.f32 %v3251, %v3370
    %v3385 = vadd.f32 %v3254, %v3373
    %v3386 = vadd.f32 %v3259, %v3378
    %v3387 = vadd.f32 %v3262, %v3381
    %v3388 = vld [vmem:[%s4 + $0x7] sm:$0x1]
    %v3389 = vlaneseq
    %v3390 = vshrl.u32 %v3389, 7
    %v3391 = vsub.s32 0, %v3390
    %v3392 = vrot.slane %v3388, %v3391
    %v3393 = vadd.f32 %v3384, %v3392
    %v3394 = vadd.f32 %v3385, %v3392
    %v3395 = vadd.f32 %v3386, %v3392
    %v3396 = vadd.f32 %v3387, %v3392
    %v3397 = vmax.f32 %v3393, 0.0
    %v3398 = vmax.f32 %v3394, 0.0
    %v3399 = vmax.f32 %v3395, 0.0
    %v3400 = vmax.f32 %v3396, 0.0
    %3401 = vst [vmem:[%s6] sm:$0xff] %v3397
    %3402 = vst [vmem:[%s6 + $0x8] sm:$0xff] %v3398
    %3403 = vst [vmem:[%s6 + $0x10] sm:$0xff] %v3399
    %3404 = vst [vmem:[%s6 + $0x18] sm:$0xff] %v3400
    // Predicated region
    $region26: #{forward.1} parent=1 // pred_check
      _
    $region27: #{forward.1} parent=1 // pred_check_branch
      %3406 = sbr.rel (0) target = $region29
    $region28: #{forward.1} parent=1 // pred_region
      _
    $region29: #{forward.1} parent=1 // pred_fallthru
      _
    // Predicated region
    $region30: #{forward.1} parent=1 // pred_check
      _
    $region31: #{forward.1} parent=1 // pred_check_branch
      %3408 = sbr.rel (0) target = $region33
    $region32: #{forward.1} parent=1 // pred_region
      _
    $region33: #{forward.1} parent=1 // pred_fallthru
      _
    // Predicated region
    $region34: #{forward.1} parent=1 // pred_check
      _
    $region35: #{forward.1} parent=1 // pred_check_branch
      %3410 = sbr.rel (0) target = $region37
    $region36: #{forward.1} parent=1 // pred_region
      _
    $region37: #{forward.1} parent=1 // pred_fallthru
      _
    // Predicated region
    $region38: #{forward.1} parent=1 // pred_check
      _
    $region39: #{forward.1} parent=1 // pred_check_branch
      %3412 = sbr.rel (0) target = $region41
    $region40: #{forward.1} parent=1 // pred_region
      _
    $region41: #{forward.1} parent=1 // pred_fallthru
      _
    %3413 = vsyncpa [#allocation11], 1

</llo_original>
